<compile_context>
chip_gen: v7x
topology: tpu7x:2x2x1
jax: 0.10.0
libtpu: 0.0.40
codegen_flags: <defaults>
</compile_context>

<pallas_src>
import functools

import jax
import jax.numpy as jnp
from jax.experimental import pallas as pl
from jax.experimental.pallas import tpu as pltpu


def _pad_gate_cols(w, H, HP):
    """(R, 4H) [i|f|g|o] -> (R, 4*HP) with each gate block zero-padded to HP lanes."""
    R = w.shape[0]
    w4 = w.reshape(R, 4, H)
    w4 = jnp.pad(w4, ((0, 0), (0, 0), (0, HP - H)))
    return w4.reshape(R, 4 * HP)


def _pad_rows(w, RP):
    """Zero-pad the leading (contraction) axis to RP rows."""
    return jnp.pad(w, ((0, RP - w.shape[0]), (0, 0)))


def _lstm_kernel(x_ref, wih0_ref, b0_ref, wbig_ref, b1_ref, fcw_ref, fcb_ref,
                 out_ref, xg_ref, *, T, Bblk, D, HP):
    GP = 4 * HP
    cdt = wbig_ref.dtype      # matmul lhs/rhs dtype (f32, or bf16 when weights are bf16)

    # ---- hoisted input projection for ALL timesteps (off the recurrence chain) ----
    # K = D is tiny, so D VPU FMAs beat an MXU pass and overlap the wbig DMA.
    w0 = wih0_ref[...]                                   # (D, GP) f32
    b0b = jnp.broadcast_to(b0_ref[...], (Bblk, GP))      # broadcast once, reuse
    for t in range(T):
        xt = x_ref[t]                                    # (Bblk, D), leading-axis index
        g = b0b
        for k in range(D):
            g = g + xt[:, k:k + 1] * w0[k:k + 1, :]      # (Bblk,1)*(1,GP) VPU FMA
        xg_ref[t] = g                                    # tile-aligned store

    # broadcast layer-1 bias once (JAX does not CSE broadcast_in_dim)
    b1b = jnp.broadcast_to(b1_ref[...], (Bblk, GP))

    def sig(v):
        # sigmoid(x) = 0.5*tanh(0.5*x) + 0.5 : one EUP op on the critical path
        return 0.5 * jnp.tanh(0.5 * v) + 0.5

    def act(g):
        # 128-lane aligned gate slices, PyTorch order [i, f, g, o]
        i = sig(g[:, 0 * HP:1 * HP])
        f = sig(g[:, 1 * HP:2 * HP])
        gg = jnp.tanh(g[:, 2 * HP:3 * HP])
        o = sig(g[:, 3 * HP:4 * HP])
        return i, f, gg, o

    zero = jnp.zeros((Bblk, HP), jnp.float32)
    h1, c1 = zero, zero

    # ---- layer-0 step t=0: h0_{-1} = 0 => recurrent matmul vanishes, g0 = xg_0 ----
    i0, f0, g0, o0 = act(xg_ref[0])
    c0 = i0 * g0                            # f0 * c0_init = 0
    h0 = o0 * jnp.tanh(c0)

    # ---- fused recurrence: ONE MXU op per timestep on the serial chain ----
    # wbig = [[wih1, whh0], [whh1, 0]]:
    #   cols [0, GP)    = layer-1(t) gate pre-activations (add b1)
    #   cols [GP, 2*GP) = h0_t @ whh0  (layer-0(t+1) recurrent contribution)
    for t in range(T):
        hcat = jnp.concatenate([h0, h1], axis=1).astype(cdt)          # (Bblk, 2*HP)
        big = jnp.dot(hcat, wbig_ref[...],
                      preferred_element_type=jnp.float32)              # (Bblk, 2*GP)

        # layer 1, timestep t
        i1, f1, g1, o1 = act(big[:, 0:GP] + b1b)
        c1 = f1 * c1 + i1 * g1
        h1 = o1 * jnp.tanh(c1)

        # layer 0, timestep t+1 (not needed after the last step)
        if t + 1 < T:
            i0, f0, g0, o0 = act(xg_ref[t + 1] + big[:, GP:2 * GP])
            c0 = f0 * c0 + i0 * g0
            h0 = o0 * jnp.tanh(c0)

    # fc head on the last timestep's top-layer hidden state (f32, pad rows of fcw = 0)
    out_ref[...] = (jnp.dot(h1, fcw_ref[...],
                            preferred_element_type=jnp.float32) + fcb_ref[...])


def anomaly_forward(x, params, *, weights_dtype=jnp.float32):
    """x: (B, T, D) float32  ->  anomaly logits of shape (B,)."""
    B, T, D = x.shape
    H = params["whh0"].shape[0]
    HP = ((H + 127) // 128) * 128          # per-gate width padded to a lane boundary
    GP = 4 * HP

    # ---- one-time weight prep (layout only, outside the kernel) ----
    wih0_p = _pad_gate_cols(params["wih0"], H, HP)                    # (D,  GP) f32
    b0_p = _pad_gate_cols(params["b0"], H, HP)                        # (1,  GP) f32
    b1_p = _pad_gate_cols(params["b1"], H, HP)                        # (1,  GP) f32
    fcw_p = _pad_rows(params["fcw"], HP)                              # (HP, 1)  f32
    fcb = params["fcb"]                                               # (1,  1)  f32

    whh0_p = _pad_rows(_pad_gate_cols(params["whh0"], H, HP), HP)     # (HP, GP)
    wih1_p = _pad_rows(_pad_gate_cols(params["wih1"], H, HP), HP)     # (HP, GP)
    whh1_p = _pad_rows(_pad_gate_cols(params["whh1"], H, HP), HP)     # (HP, GP)
    # fused per-step weight: rows 0:HP multiply h0_t, rows HP:2HP multiply h1_{t-1}
    wbig = jnp.concatenate(
        [jnp.concatenate([wih1_p, whh0_p], axis=1),
         jnp.concatenate([whh1_p, jnp.zeros((HP, GP), jnp.float32)], axis=1)],
        axis=0).astype(weights_dtype)                                 # (2*HP, 2*GP)

    # time-major input (T, B, D): batch is the second-minor axis, so a batch-grid block
    # is a plain middle-axis window and per-step reads are leading-axis x_ref[t].
    x_tm = jnp.transpose(x, (1, 0, 2))

    # batch grid: big batches are split into blocks sharded across TensorCores
    # ("parallel" engages both v7x TCs; no-op on single-TC v5e/v6e).
    # Bblk=256 -> xg scratch 4 MiB + ~1 MiB weights: comfortably under v7x VMEM limits.
    if B % 256 == 0:
        Bblk = 256
    elif B % 128 == 0:
        Bblk = 128
    else:
        Bblk = B                      # toy batches run as a single block
    nblk = B // Bblk

    kernel = functools.partial(_lstm_kernel, T=T, Bblk=Bblk, D=D, HP=HP)

    out = pl.pallas_call(
        kernel,
        out_shape=jax.ShapeDtypeStruct((B, 1), jnp.float32),
        grid_spec=pltpu.PrefetchScalarGridSpec(
            num_scalar_prefetch=0,
            grid=(nblk,),
            in_specs=[
                pl.BlockSpec((T, Bblk, D), lambda i: (0, i, 0)),        # x (time-major)
                pl.BlockSpec((D, GP), lambda i: (0, 0)),                # wih0
                pl.BlockSpec((1, GP), lambda i: (0, 0)),                # b0
                pl.BlockSpec((2 * HP, 2 * GP), lambda i: (0, 0)),       # wbig (fused)
                pl.BlockSpec((1, GP), lambda i: (0, 0)),                # b1
                pl.BlockSpec((HP, 1), lambda i: (0, 0)),                # fcw
                pl.BlockSpec((1, 1), lambda i: (0, 0)),                 # fcb
            ],
            out_specs=pl.BlockSpec((Bblk, 1), lambda i: (i, 0)),
            scratch_shapes=[pltpu.VMEM((T, Bblk, GP), jnp.float32)],    # hoisted xg
        ),
        compiler_params=pltpu.CompilerParams(
            dimension_semantics=("parallel",)),
    )(x_tm, wih0_p, b0_p, wbig, b1_p, fcw_p, fcb)

    return out[:, 0]            # matches torch .squeeze() for B > 1


def init_params(key, input_dim, hidden_dim):
    """Deterministic synthetic parameters, PyTorch-style uniform(-k, k), k = 1/sqrt(H)."""
    k = 1.0 / jnp.sqrt(jnp.float32(hidden_dim))
    keys = jax.random.split(key, 8)
    u = lambda kk, shape: jax.random.uniform(kk, shape, jnp.float32, -k, k)
    H = hidden_dim
    return {
        # layer 0 (input_dim -> H); biases folded as b_ih + b_hh into a single term
        "wih0": u(keys[0], (input_dim, 4 * H)),
        "whh0": u(keys[1], (H, 4 * H)),
        "b0":   u(keys[2], (1, 4 * H)),
        # layer 1 (H -> H)
        "wih1": u(keys[3], (H, 4 * H)),
        "whh1": u(keys[4], (H, 4 * H)),
        "b1":   u(keys[5], (1, 4 * H)),
        # fc head (H -> 1)
        "fcw":  u(keys[6], (H, 1)),
        "fcb":  u(keys[7], (1, 1)),
    }


def reference_forward(x, p):
    """Pure-JAX reference reproducing nn.LSTM(batch_first) + Linear semantics."""
    B, T, D = x.shape
    H = p["whh0"].shape[0]

    def cell(x_t, h, c, wih, whh, b):
        gates = x_t @ wih + h @ whh + b
        i = jax.nn.sigmoid(gates[:, 0 * H:1 * H])
        f = jax.nn.sigmoid(gates[:, 1 * H:2 * H])
        g = jnp.tanh(gates[:, 2 * H:3 * H])
        o = jax.nn.sigmoid(gates[:, 3 * H:4 * H])
        c = f * c + i * g
        h = o * jnp.tanh(c)
        return h, c

    h0 = c0 = h1 = c1 = jnp.zeros((B, H), jnp.float32)
    for t in range(T):
        h0, c0 = cell(x[:, t, :], h0, c0, p["wih0"], p["whh0"], p["b0"])
        h1, c1 = cell(h0, h1, c1, p["wih1"], p["whh1"], p["b1"])
    return (h1 @ p["fcw"] + p["fcb"])[:, 0]


if __name__ == "__main__":
    # Small shapes consistent with the module: batch=2, seq_len=8, input_dim=3, hidden=64
    B, T, D, H = 2, 8, 3, 64

    key = jax.random.PRNGKey(0)
    key_x, key_p = jax.random.split(key)
    x = jax.random.normal(key_x, (B, T, D), jnp.float32)
    params = init_params(key_p, D, H)

    ref = jax.block_until_ready(reference_forward(x, params))

    # f32 weights: exact module semantics (tight check)
    out = jax.block_until_ready(anomaly_forward(x, params))
    assert out.shape == (B,), f"unexpected output shape {out.shape}"
    assert jnp.allclose(out, ref, atol=1e-4, rtol=1e-4), (out, ref)

    # bf16 fused-weight variant: halves the dominant weight DMA; looser tolerance
    # because wbig and the matmul lhs are quantized to bf16 (f32 accumulation kept).
    out_bf16 = jax.block_until_ready(
        anomaly_forward(x, params, weights_dtype=jnp.bfloat16))
    assert out_bf16.shape == (B,)
    assert bool(jnp.all(jnp.isfinite(out_bf16)))
    assert jnp.allclose(out_bf16, ref, atol=1e-1), (out_bf16, ref)

    print("KERNEL_OK")
</pallas_src>

<mosaic_0001>
module attributes {stable_mosaic.version = 11 : i64} {
  func.func @_lstm_kernel(%arg0: i32, %arg1: memref<8x2x3xf32, #tpu.memory_space<vmem>>, %arg2: memref<3x512xf32, #tpu.memory_space<vmem>>, %arg3: memref<1x512xf32, #tpu.memory_space<vmem>>, %arg4: memref<256x1024xf32, #tpu.memory_space<vmem>>, %arg5: memref<1x512xf32, #tpu.memory_space<vmem>>, %arg6: memref<128x1xf32, #tpu.memory_space<vmem>>, %arg7: memref<1x1xf32, #tpu.memory_space<vmem>>, %arg8: memref<2x1xf32, #tpu.memory_space<vmem>>, %arg9: memref<8x2x512xf32, #tpu.memory_space<vmem>>) attributes {dimension_semantics = [#tpu.dimension_semantics<parallel>], iteration_bounds = array<i64: 1>, scalar_prefetch = 0 : i64, scratch_operands = 1 : i64, tpu.core_type = #tpu.core_type<tc>, window_params = [{transform_indices = @transform_0, window_bounds = array<i64: 8, 2, 3>}, {pipeline_mode = #tpu.pipeline_mode<synchronous>, transform_indices = @transform_1, window_bounds = array<i64: 3, 512>}, {pipeline_mode = #tpu.pipeline_mode<synchronous>, transform_indices = @transform_2, window_bounds = array<i64: 1, 512>}, {pipeline_mode = #tpu.pipeline_mode<synchronous>, transform_indices = @transform_3, window_bounds = array<i64: 256, 1024>}, {pipeline_mode = #tpu.pipeline_mode<synchronous>, transform_indices = @transform_4, window_bounds = array<i64: 1, 512>}, {pipeline_mode = #tpu.pipeline_mode<synchronous>, transform_indices = @transform_5, window_bounds = array<i64: 128, 1>}, {pipeline_mode = #tpu.pipeline_mode<synchronous>, transform_indices = @transform_6, window_bounds = array<i64: 1, 1>}, {transform_indices = @transform_7, window_bounds = array<i64: 2, 1>}]} {
    %c0 = arith.constant 0 : index
    %c0_0 = arith.constant 0 : index
    %0 = vector.load %arg2[%c0, %c0_0] : memref<3x512xf32, #tpu.memory_space<vmem>>, vector<3x512xf32>
    %c0_1 = arith.constant 0 : index
    %c0_2 = arith.constant 0 : index
    %1 = vector.load %arg3[%c0_1, %c0_2] : memref<1x512xf32, #tpu.memory_space<vmem>>, vector<1x512xf32>
    %2 = vector.shape_cast %1 : vector<1x512xf32> to vector<1x512xf32>
    %3 = vector.broadcast %2 : vector<1x512xf32> to vector<2x512xf32>
    %c0_3 = arith.constant 0 : index
    %c0_4 = arith.constant 0 : index
    %c0_5 = arith.constant 0 : index
    %4 = vector.load %arg1[%c0_3, %c0_4, %c0_5] : memref<8x2x3xf32, #tpu.memory_space<vmem>>, vector<1x2x3xf32>
    %5 = vector.shape_cast %4 : vector<1x2x3xf32> to vector<2x3xf32>
    %6 = vector.extract_strided_slice %5 {offsets = [0, 0], sizes = [2, 1], strides = [1, 1]} : vector<2x3xf32> to vector<2x1xf32>
    %7 = vector.extract_strided_slice %0 {offsets = [0, 0], sizes = [1, 512], strides = [1, 1]} : vector<3x512xf32> to vector<1x512xf32>
    %8 = vector.broadcast %6 : vector<2x1xf32> to vector<2x512xf32>
    %9 = vector.broadcast %7 : vector<1x512xf32> to vector<2x512xf32>
    %10 = arith.mulf %8, %9 : vector<2x512xf32>
    %11 = arith.addf %3, %10 : vector<2x512xf32>
    %12 = vector.extract_strided_slice %5 {offsets = [0, 1], sizes = [2, 1], strides = [1, 1]} : vector<2x3xf32> to vector<2x1xf32>
    %13 = vector.extract_strided_slice %0 {offsets = [1, 0], sizes = [1, 512], strides = [1, 1]} : vector<3x512xf32> to vector<1x512xf32>
    %14 = vector.broadcast %12 : vector<2x1xf32> to vector<2x512xf32>
    %15 = vector.broadcast %13 : vector<1x512xf32> to vector<2x512xf32>
    %16 = arith.mulf %14, %15 : vector<2x512xf32>
    %17 = arith.addf %11, %16 : vector<2x512xf32>
    %18 = vector.extract_strided_slice %5 {offsets = [0, 2], sizes = [2, 1], strides = [1, 1]} : vector<2x3xf32> to vector<2x1xf32>
    %19 = vector.extract_strided_slice %0 {offsets = [2, 0], sizes = [1, 512], strides = [1, 1]} : vector<3x512xf32> to vector<1x512xf32>
    %20 = vector.broadcast %18 : vector<2x1xf32> to vector<2x512xf32>
    %21 = vector.broadcast %19 : vector<1x512xf32> to vector<2x512xf32>
    %22 = arith.mulf %20, %21 : vector<2x512xf32>
    %23 = arith.addf %17, %22 : vector<2x512xf32>
    %c0_6 = arith.constant 0 : index
    %c0_7 = arith.constant 0 : index
    %c0_8 = arith.constant 0 : index
    %24 = vector.load %arg9[%c0_6, %c0_7, %c0_8] : memref<8x2x512xf32, #tpu.memory_space<vmem>>, vector<1x2x512xf32>
    %25 = vector.shape_cast %24 : vector<1x2x512xf32> to vector<2x512xf32>
    %26 = vector.shape_cast %23 : vector<2x512xf32> to vector<1x2x512xf32>
    tpu.vector_store %arg9[%c0_6, %c0_7, %c0_8], %26 {strides = array<i32>} : memref<8x2x512xf32, #tpu.memory_space<vmem>>, vector<1x2x512xf32>,
    %c1 = arith.constant 1 : index
    %c0_9 = arith.constant 0 : index
    %c0_10 = arith.constant 0 : index
    %27 = vector.load %arg1[%c1, %c0_9, %c0_10] : memref<8x2x3xf32, #tpu.memory_space<vmem>>, vector<1x2x3xf32>
    %28 = vector.shape_cast %27 : vector<1x2x3xf32> to vector<2x3xf32>
    %29 = vector.extract_strided_slice %28 {offsets = [0, 0], sizes = [2, 1], strides = [1, 1]} : vector<2x3xf32> to vector<2x1xf32>
    %30 = vector.extract_strided_slice %0 {offsets = [0, 0], sizes = [1, 512], strides = [1, 1]} : vector<3x512xf32> to vector<1x512xf32>
    %31 = vector.broadcast %29 : vector<2x1xf32> to vector<2x512xf32>
    %32 = vector.broadcast %30 : vector<1x512xf32> to vector<2x512xf32>
    %33 = arith.mulf %31, %32 : vector<2x512xf32>
    %34 = arith.addf %3, %33 : vector<2x512xf32>
    %35 = vector.extract_strided_slice %28 {offsets = [0, 1], sizes = [2, 1], strides = [1, 1]} : vector<2x3xf32> to vector<2x1xf32>
    %36 = vector.extract_strided_slice %0 {offsets = [1, 0], sizes = [1, 512], strides = [1, 1]} : vector<3x512xf32> to vector<1x512xf32>
    %37 = vector.broadcast %35 : vector<2x1xf32> to vector<2x512xf32>
    %38 = vector.broadcast %36 : vector<1x512xf32> to vector<2x512xf32>
    %39 = arith.mulf %37, %38 : vector<2x512xf32>
    %40 = arith.addf %34, %39 : vector<2x512xf32>
    %41 = vector.extract_strided_slice %28 {offsets = [0, 2], sizes = [2, 1], strides = [1, 1]} : vector<2x3xf32> to vector<2x1xf32>
    %42 = vector.extract_strided_slice %0 {offsets = [2, 0], sizes = [1, 512], strides = [1, 1]} : vector<3x512xf32> to vector<1x512xf32>
    %43 = vector.broadcast %41 : vector<2x1xf32> to vector<2x512xf32>
    %44 = vector.broadcast %42 : vector<1x512xf32> to vector<2x512xf32>
    %45 = arith.mulf %43, %44 : vector<2x512xf32>
    %46 = arith.addf %40, %45 : vector<2x512xf32>
    %c1_11 = arith.constant 1 : index
    %c0_12 = arith.constant 0 : index
    %c0_13 = arith.constant 0 : index
    %47 = vector.load %arg9[%c1_11, %c0_12, %c0_13] : memref<8x2x512xf32, #tpu.memory_space<vmem>>, vector<1x2x512xf32>
    %48 = vector.shape_cast %47 : vector<1x2x512xf32> to vector<2x512xf32>
    %49 = vector.shape_cast %46 : vector<2x512xf32> to vector<1x2x512xf32>
    tpu.vector_store %arg9[%c1_11, %c0_12, %c0_13], %49 {strides = array<i32>} : memref<8x2x512xf32, #tpu.memory_space<vmem>>, vector<1x2x512xf32>,
    %c2 = arith.constant 2 : index
    %c0_14 = arith.constant 0 : index
    %c0_15 = arith.constant 0 : index
    %50 = vector.load %arg1[%c2, %c0_14, %c0_15] : memref<8x2x3xf32, #tpu.memory_space<vmem>>, vector<1x2x3xf32>
    %51 = vector.shape_cast %50 : vector<1x2x3xf32> to vector<2x3xf32>
    %52 = vector.extract_strided_slice %51 {offsets = [0, 0], sizes = [2, 1], strides = [1, 1]} : vector<2x3xf32> to vector<2x1xf32>
    %53 = vector.extract_strided_slice %0 {offsets = [0, 0], sizes = [1, 512], strides = [1, 1]} : vector<3x512xf32> to vector<1x512xf32>
    %54 = vector.broadcast %52 : vector<2x1xf32> to vector<2x512xf32>
    %55 = vector.broadcast %53 : vector<1x512xf32> to vector<2x512xf32>
    %56 = arith.mulf %54, %55 : vector<2x512xf32>
    %57 = arith.addf %3, %56 : vector<2x512xf32>
    %58 = vector.extract_strided_slice %51 {offsets = [0, 1], sizes = [2, 1], strides = [1, 1]} : vector<2x3xf32> to vector<2x1xf32>
    %59 = vector.extract_strided_slice %0 {offsets = [1, 0], sizes = [1, 512], strides = [1, 1]} : vector<3x512xf32> to vector<1x512xf32>
    %60 = vector.broadcast %58 : vector<2x1xf32> to vector<2x512xf32>
    %61 = vector.broadcast %59 : vector<1x512xf32> to vector<2x512xf32>
    %62 = arith.mulf %60, %61 : vector<2x512xf32>
    %63 = arith.addf %57, %62 : vector<2x512xf32>
    %64 = vector.extract_strided_slice %51 {offsets = [0, 2], sizes = [2, 1], strides = [1, 1]} : vector<2x3xf32> to vector<2x1xf32>
    %65 = vector.extract_strided_slice %0 {offsets = [2, 0], sizes = [1, 512], strides = [1, 1]} : vector<3x512xf32> to vector<1x512xf32>
    %66 = vector.broadcast %64 : vector<2x1xf32> to vector<2x512xf32>
    %67 = vector.broadcast %65 : vector<1x512xf32> to vector<2x512xf32>
    %68 = arith.mulf %66, %67 : vector<2x512xf32>
    %69 = arith.addf %63, %68 : vector<2x512xf32>
    %c2_16 = arith.constant 2 : index
    %c0_17 = arith.constant 0 : index
    %c0_18 = arith.constant 0 : index
    %70 = vector.load %arg9[%c2_16, %c0_17, %c0_18] : memref<8x2x512xf32, #tpu.memory_space<vmem>>, vector<1x2x512xf32>
    %71 = vector.shape_cast %70 : vector<1x2x512xf32> to vector<2x512xf32>
    %72 = vector.shape_cast %69 : vector<2x512xf32> to vector<1x2x512xf32>
    tpu.vector_store %arg9[%c2_16, %c0_17, %c0_18], %72 {strides = array<i32>} : memref<8x2x512xf32, #tpu.memory_space<vmem>>, vector<1x2x512xf32>,
    %c3 = arith.constant 3 : index
    %c0_19 = arith.constant 0 : index
    %c0_20 = arith.constant 0 : index
    %73 = vector.load %arg1[%c3, %c0_19, %c0_20] : memref<8x2x3xf32, #tpu.memory_space<vmem>>, vector<1x2x3xf32>
    %74 = vector.shape_cast %73 : vector<1x2x3xf32> to vector<2x3xf32>
    %75 = vector.extract_strided_slice %74 {offsets = [0, 0], sizes = [2, 1], strides = [1, 1]} : vector<2x3xf32> to vector<2x1xf32>
    %76 = vector.extract_strided_slice %0 {offsets = [0, 0], sizes = [1, 512], strides = [1, 1]} : vector<3x512xf32> to vector<1x512xf32>
    %77 = vector.broadcast %75 : vector<2x1xf32> to vector<2x512xf32>
    %78 = vector.broadcast %76 : vector<1x512xf32> to vector<2x512xf32>
    %79 = arith.mulf %77, %78 : vector<2x512xf32>
    %80 = arith.addf %3, %79 : vector<2x512xf32>
    %81 = vector.extract_strided_slice %74 {offsets = [0, 1], sizes = [2, 1], strides = [1, 1]} : vector<2x3xf32> to vector<2x1xf32>
    %82 = vector.extract_strided_slice %0 {offsets = [1, 0], sizes = [1, 512], strides = [1, 1]} : vector<3x512xf32> to vector<1x512xf32>
    %83 = vector.broadcast %81 : vector<2x1xf32> to vector<2x512xf32>
    %84 = vector.broadcast %82 : vector<1x512xf32> to vector<2x512xf32>
    %85 = arith.mulf %83, %84 : vector<2x512xf32>
    %86 = arith.addf %80, %85 : vector<2x512xf32>
    %87 = vector.extract_strided_slice %74 {offsets = [0, 2], sizes = [2, 1], strides = [1, 1]} : vector<2x3xf32> to vector<2x1xf32>
    %88 = vector.extract_strided_slice %0 {offsets = [2, 0], sizes = [1, 512], strides = [1, 1]} : vector<3x512xf32> to vector<1x512xf32>
    %89 = vector.broadcast %87 : vector<2x1xf32> to vector<2x512xf32>
    %90 = vector.broadcast %88 : vector<1x512xf32> to vector<2x512xf32>
    %91 = arith.mulf %89, %90 : vector<2x512xf32>
    %92 = arith.addf %86, %91 : vector<2x512xf32>
    %c3_21 = arith.constant 3 : index
    %c0_22 = arith.constant 0 : index
    %c0_23 = arith.constant 0 : index
    %93 = vector.load %arg9[%c3_21, %c0_22, %c0_23] : memref<8x2x512xf32, #tpu.memory_space<vmem>>, vector<1x2x512xf32>
    %94 = vector.shape_cast %93 : vector<1x2x512xf32> to vector<2x512xf32>
    %95 = vector.shape_cast %92 : vector<2x512xf32> to vector<1x2x512xf32>
    tpu.vector_store %arg9[%c3_21, %c0_22, %c0_23], %95 {strides = array<i32>} : memref<8x2x512xf32, #tpu.memory_space<vmem>>, vector<1x2x512xf32>,
    %c4 = arith.constant 4 : index
    %c0_24 = arith.constant 0 : index
    %c0_25 = arith.constant 0 : index
    %96 = vector.load %arg1[%c4, %c0_24, %c0_25] : memref<8x2x3xf32, #tpu.memory_space<vmem>>, vector<1x2x3xf32>
    %97 = vector.shape_cast %96 : vector<1x2x3xf32> to vector<2x3xf32>
    %98 = vector.extract_strided_slice %97 {offsets = [0, 0], sizes = [2, 1], strides = [1, 1]} : vector<2x3xf32> to vector<2x1xf32>
    %99 = vector.extract_strided_slice %0 {offsets = [0, 0], sizes = [1, 512], strides = [1, 1]} : vector<3x512xf32> to vector<1x512xf32>
    %100 = vector.broadcast %98 : vector<2x1xf32> to vector<2x512xf32>
    %101 = vector.broadcast %99 : vector<1x512xf32> to vector<2x512xf32>
    %102 = arith.mulf %100, %101 : vector<2x512xf32>
    %103 = arith.addf %3, %102 : vector<2x512xf32>
    %104 = vector.extract_strided_slice %97 {offsets = [0, 1], sizes = [2, 1], strides = [1, 1]} : vector<2x3xf32> to vector<2x1xf32>
    %105 = vector.extract_strided_slice %0 {offsets = [1, 0], sizes = [1, 512], strides = [1, 1]} : vector<3x512xf32> to vector<1x512xf32>
    %106 = vector.broadcast %104 : vector<2x1xf32> to vector<2x512xf32>
    %107 = vector.broadcast %105 : vector<1x512xf32> to vector<2x512xf32>
    %108 = arith.mulf %106, %107 : vector<2x512xf32>
    %109 = arith.addf %103, %108 : vector<2x512xf32>
    %110 = vector.extract_strided_slice %97 {offsets = [0, 2], sizes = [2, 1], strides = [1, 1]} : vector<2x3xf32> to vector<2x1xf32>
    %111 = vector.extract_strided_slice %0 {offsets = [2, 0], sizes = [1, 512], strides = [1, 1]} : vector<3x512xf32> to vector<1x512xf32>
    %112 = vector.broadcast %110 : vector<2x1xf32> to vector<2x512xf32>
    %113 = vector.broadcast %111 : vector<1x512xf32> to vector<2x512xf32>
    %114 = arith.mulf %112, %113 : vector<2x512xf32>
    %115 = arith.addf %109, %114 : vector<2x512xf32>
    %c4_26 = arith.constant 4 : index
    %c0_27 = arith.constant 0 : index
    %c0_28 = arith.constant 0 : index
    %116 = vector.load %arg9[%c4_26, %c0_27, %c0_28] : memref<8x2x512xf32, #tpu.memory_space<vmem>>, vector<1x2x512xf32>
    %117 = vector.shape_cast %116 : vector<1x2x512xf32> to vector<2x512xf32>
    %118 = vector.shape_cast %115 : vector<2x512xf32> to vector<1x2x512xf32>
    tpu.vector_store %arg9[%c4_26, %c0_27, %c0_28], %118 {strides = array<i32>} : memref<8x2x512xf32, #tpu.memory_space<vmem>>, vector<1x2x512xf32>,
    %c5 = arith.constant 5 : index
    %c0_29 = arith.constant 0 : index
    %c0_30 = arith.constant 0 : index
    %119 = vector.load %arg1[%c5, %c0_29, %c0_30] : memref<8x2x3xf32, #tpu.memory_space<vmem>>, vector<1x2x3xf32>
    %120 = vector.shape_cast %119 : vector<1x2x3xf32> to vector<2x3xf32>
    %121 = vector.extract_strided_slice %120 {offsets = [0, 0], sizes = [2, 1], strides = [1, 1]} : vector<2x3xf32> to vector<2x1xf32>
    %122 = vector.extract_strided_slice %0 {offsets = [0, 0], sizes = [1, 512], strides = [1, 1]} : vector<3x512xf32> to vector<1x512xf32>
    %123 = vector.broadcast %121 : vector<2x1xf32> to vector<2x512xf32>
    %124 = vector.broadcast %122 : vector<1x512xf32> to vector<2x512xf32>
    %125 = arith.mulf %123, %124 : vector<2x512xf32>
    %126 = arith.addf %3, %125 : vector<2x512xf32>
    %127 = vector.extract_strided_slice %120 {offsets = [0, 1], sizes = [2, 1], strides = [1, 1]} : vector<2x3xf32> to vector<2x1xf32>
    %128 = vector.extract_strided_slice %0 {offsets = [1, 0], sizes = [1, 512], strides = [1, 1]} : vector<3x512xf32> to vector<1x512xf32>
    %129 = vector.broadcast %127 : vector<2x1xf32> to vector<2x512xf32>
    %130 = vector.broadcast %128 : vector<1x512xf32> to vector<2x512xf32>
    %131 = arith.mulf %129, %130 : vector<2x512xf32>
    %132 = arith.addf %126, %131 : vector<2x512xf32>
    %133 = vector.extract_strided_slice %120 {offsets = [0, 2], sizes = [2, 1], strides = [1, 1]} : vector<2x3xf32> to vector<2x1xf32>
    %134 = vector.extract_strided_slice %0 {offsets = [2, 0], sizes = [1, 512], strides = [1, 1]} : vector<3x512xf32> to vector<1x512xf32>
    %135 = vector.broadcast %133 : vector<2x1xf32> to vector<2x512xf32>
    %136 = vector.broadcast %134 : vector<1x512xf32> to vector<2x512xf32>
    %137 = arith.mulf %135, %136 : vector<2x512xf32>
    %138 = arith.addf %132, %137 : vector<2x512xf32>
    %c5_31 = arith.constant 5 : index
    %c0_32 = arith.constant 0 : index
    %c0_33 = arith.constant 0 : index
    %139 = vector.load %arg9[%c5_31, %c0_32, %c0_33] : memref<8x2x512xf32, #tpu.memory_space<vmem>>, vector<1x2x512xf32>
    %140 = vector.shape_cast %139 : vector<1x2x512xf32> to vector<2x512xf32>
    %141 = vector.shape_cast %138 : vector<2x512xf32> to vector<1x2x512xf32>
    tpu.vector_store %arg9[%c5_31, %c0_32, %c0_33], %141 {strides = array<i32>} : memref<8x2x512xf32, #tpu.memory_space<vmem>>, vector<1x2x512xf32>,
    %c6 = arith.constant 6 : index
    %c0_34 = arith.constant 0 : index
    %c0_35 = arith.constant 0 : index
    %142 = vector.load %arg1[%c6, %c0_34, %c0_35] : memref<8x2x3xf32, #tpu.memory_space<vmem>>, vector<1x2x3xf32>
    %143 = vector.shape_cast %142 : vector<1x2x3xf32> to vector<2x3xf32>
    %144 = vector.extract_strided_slice %143 {offsets = [0, 0], sizes = [2, 1], strides = [1, 1]} : vector<2x3xf32> to vector<2x1xf32>
    %145 = vector.extract_strided_slice %0 {offsets = [0, 0], sizes = [1, 512], strides = [1, 1]} : vector<3x512xf32> to vector<1x512xf32>
    %146 = vector.broadcast %144 : vector<2x1xf32> to vector<2x512xf32>
    %147 = vector.broadcast %145 : vector<1x512xf32> to vector<2x512xf32>
    %148 = arith.mulf %146, %147 : vector<2x512xf32>
    %149 = arith.addf %3, %148 : vector<2x512xf32>
    %150 = vector.extract_strided_slice %143 {offsets = [0, 1], sizes = [2, 1], strides = [1, 1]} : vector<2x3xf32> to vector<2x1xf32>
    %151 = vector.extract_strided_slice %0 {offsets = [1, 0], sizes = [1, 512], strides = [1, 1]} : vector<3x512xf32> to vector<1x512xf32>
    %152 = vector.broadcast %150 : vector<2x1xf32> to vector<2x512xf32>
    %153 = vector.broadcast %151 : vector<1x512xf32> to vector<2x512xf32>
    %154 = arith.mulf %152, %153 : vector<2x512xf32>
    %155 = arith.addf %149, %154 : vector<2x512xf32>
    %156 = vector.extract_strided_slice %143 {offsets = [0, 2], sizes = [2, 1], strides = [1, 1]} : vector<2x3xf32> to vector<2x1xf32>
    %157 = vector.extract_strided_slice %0 {offsets = [2, 0], sizes = [1, 512], strides = [1, 1]} : vector<3x512xf32> to vector<1x512xf32>
    %158 = vector.broadcast %156 : vector<2x1xf32> to vector<2x512xf32>
    %159 = vector.broadcast %157 : vector<1x512xf32> to vector<2x512xf32>
    %160 = arith.mulf %158, %159 : vector<2x512xf32>
    %161 = arith.addf %155, %160 : vector<2x512xf32>
    %c6_36 = arith.constant 6 : index
    %c0_37 = arith.constant 0 : index
    %c0_38 = arith.constant 0 : index
    %162 = vector.load %arg9[%c6_36, %c0_37, %c0_38] : memref<8x2x512xf32, #tpu.memory_space<vmem>>, vector<1x2x512xf32>
    %163 = vector.shape_cast %162 : vector<1x2x512xf32> to vector<2x512xf32>
    %164 = vector.shape_cast %161 : vector<2x512xf32> to vector<1x2x512xf32>
    tpu.vector_store %arg9[%c6_36, %c0_37, %c0_38], %164 {strides = array<i32>} : memref<8x2x512xf32, #tpu.memory_space<vmem>>, vector<1x2x512xf32>,
    %c7 = arith.constant 7 : index
    %c0_39 = arith.constant 0 : index
    %c0_40 = arith.constant 0 : index
    %165 = vector.load %arg1[%c7, %c0_39, %c0_40] : memref<8x2x3xf32, #tpu.memory_space<vmem>>, vector<1x2x3xf32>
    %166 = vector.shape_cast %165 : vector<1x2x3xf32> to vector<2x3xf32>
    %167 = vector.extract_strided_slice %166 {offsets = [0, 0], sizes = [2, 1], strides = [1, 1]} : vector<2x3xf32> to vector<2x1xf32>
    %168 = vector.extract_strided_slice %0 {offsets = [0, 0], sizes = [1, 512], strides = [1, 1]} : vector<3x512xf32> to vector<1x512xf32>
    %169 = vector.broadcast %167 : vector<2x1xf32> to vector<2x512xf32>
    %170 = vector.broadcast %168 : vector<1x512xf32> to vector<2x512xf32>
    %171 = arith.mulf %169, %170 : vector<2x512xf32>
    %172 = arith.addf %3, %171 : vector<2x512xf32>
    %173 = vector.extract_strided_slice %166 {offsets = [0, 1], sizes = [2, 1], strides = [1, 1]} : vector<2x3xf32> to vector<2x1xf32>
    %174 = vector.extract_strided_slice %0 {offsets = [1, 0], sizes = [1, 512], strides = [1, 1]} : vector<3x512xf32> to vector<1x512xf32>
    %175 = vector.broadcast %173 : vector<2x1xf32> to vector<2x512xf32>
    %176 = vector.broadcast %174 : vector<1x512xf32> to vector<2x512xf32>
    %177 = arith.mulf %175, %176 : vector<2x512xf32>
    %178 = arith.addf %172, %177 : vector<2x512xf32>
    %179 = vector.extract_strided_slice %166 {offsets = [0, 2], sizes = [2, 1], strides = [1, 1]} : vector<2x3xf32> to vector<2x1xf32>
    %180 = vector.extract_strided_slice %0 {offsets = [2, 0], sizes = [1, 512], strides = [1, 1]} : vector<3x512xf32> to vector<1x512xf32>
    %181 = vector.broadcast %179 : vector<2x1xf32> to vector<2x512xf32>
    %182 = vector.broadcast %180 : vector<1x512xf32> to vector<2x512xf32>
    %183 = arith.mulf %181, %182 : vector<2x512xf32>
    %184 = arith.addf %178, %183 : vector<2x512xf32>
    %c7_41 = arith.constant 7 : index
    %c0_42 = arith.constant 0 : index
    %c0_43 = arith.constant 0 : index
    %185 = vector.load %arg9[%c7_41, %c0_42, %c0_43] : memref<8x2x512xf32, #tpu.memory_space<vmem>>, vector<1x2x512xf32>
    %186 = vector.shape_cast %185 : vector<1x2x512xf32> to vector<2x512xf32>
    %187 = vector.shape_cast %184 : vector<2x512xf32> to vector<1x2x512xf32>
    tpu.vector_store %arg9[%c7_41, %c0_42, %c0_43], %187 {strides = array<i32>} : memref<8x2x512xf32, #tpu.memory_space<vmem>>, vector<1x2x512xf32>,
    %c0_44 = arith.constant 0 : index
    %c0_45 = arith.constant 0 : index
    %188 = vector.load %arg5[%c0_44, %c0_45] : memref<1x512xf32, #tpu.memory_space<vmem>>, vector<1x512xf32>
    %189 = vector.shape_cast %188 : vector<1x512xf32> to vector<1x512xf32>
    %190 = vector.broadcast %189 : vector<1x512xf32> to vector<2x512xf32>
    %cst = arith.constant 0.000000e+00 : f32
    %191 = vector.broadcast %cst : f32 to vector<2x128xf32>
    %c0_46 = arith.constant 0 : index
    %c0_47 = arith.constant 0 : index
    %c0_48 = arith.constant 0 : index
    %192 = vector.load %arg9[%c0_46, %c0_47, %c0_48] : memref<8x2x512xf32, #tpu.memory_space<vmem>>, vector<1x2x512xf32>
    %193 = vector.shape_cast %192 : vector<1x2x512xf32> to vector<2x512xf32>
    %194 = vector.extract_strided_slice %193 {offsets = [0, 0], sizes = [2, 128], strides = [1, 1]} : vector<2x512xf32> to vector<2x128xf32>
    %cst_49 = arith.constant 5.000000e-01 : f32
    %195 = vector.broadcast %cst_49 : f32 to vector<2x128xf32>
    %196 = arith.mulf %195, %194 : vector<2x128xf32>
    %197 = math.tanh %196 : vector<2x128xf32>
    %cst_50 = arith.constant 5.000000e-01 : f32
    %198 = vector.broadcast %cst_50 : f32 to vector<2x128xf32>
    %199 = arith.mulf %198, %197 : vector<2x128xf32>
    %cst_51 = arith.constant 5.000000e-01 : f32
    %200 = vector.broadcast %cst_51 : f32 to vector<2x128xf32>
    %201 = arith.addf %199, %200 : vector<2x128xf32>
    %202 = vector.extract_strided_slice %193 {offsets = [0, 256], sizes = [2, 128], strides = [1, 1]} : vector<2x512xf32> to vector<2x128xf32>
    %203 = math.tanh %202 : vector<2x128xf32>
    %204 = vector.extract_strided_slice %193 {offsets = [0, 384], sizes = [2, 128], strides = [1, 1]} : vector<2x512xf32> to vector<2x128xf32>
    %cst_52 = arith.constant 5.000000e-01 : f32
    %205 = vector.broadcast %cst_52 : f32 to vector<2x128xf32>
    %206 = arith.mulf %205, %204 : vector<2x128xf32>
    %207 = math.tanh %206 : vector<2x128xf32>
    %cst_53 = arith.constant 5.000000e-01 : f32
    %208 = vector.broadcast %cst_53 : f32 to vector<2x128xf32>
    %209 = arith.mulf %208, %207 : vector<2x128xf32>
    %cst_54 = arith.constant 5.000000e-01 : f32
    %210 = vector.broadcast %cst_54 : f32 to vector<2x128xf32>
    %211 = arith.addf %209, %210 : vector<2x128xf32>
    %212 = arith.mulf %201, %203 : vector<2x128xf32>
    %213 = math.tanh %212 : vector<2x128xf32>
    %214 = arith.mulf %211, %213 : vector<2x128xf32>
    %215 = tpu.concatenate %214, %191 in 1 : vector<2x128xf32>, vector<2x128xf32> -> vector<2x256xf32>
    %c0_55 = arith.constant 0 : index
    %c0_56 = arith.constant 0 : index
    %216 = vector.load %arg4[%c0_55, %c0_56] : memref<256x1024xf32, #tpu.memory_space<vmem>>, vector<256x1024xf32>
    %cst_57 = arith.constant dense<0.000000e+00> : vector<2x1024xf32>
    %217 = tpu.matmul %215, %216, %cst_57 {dimension_numbers = #tpu.dot_dimension_numbers<[1], [0], [0], [1], [0, 0, 1, 1], [], []>} : vector<2x256xf32>, vector<256x1024xf32>, vector<2x1024xf32> -> vector<2x1024xf32>
    %218 = vector.extract_strided_slice %217 {offsets = [0, 0], sizes = [2, 512], strides = [1, 1]} : vector<2x1024xf32> to vector<2x512xf32>
    %219 = arith.addf %218, %190 : vector<2x512xf32>
    %220 = vector.extract_strided_slice %219 {offsets = [0, 0], sizes = [2, 128], strides = [1, 1]} : vector<2x512xf32> to vector<2x128xf32>
    %cst_58 = arith.constant 5.000000e-01 : f32
    %221 = vector.broadcast %cst_58 : f32 to vector<2x128xf32>
    %222 = arith.mulf %221, %220 : vector<2x128xf32>
    %223 = math.tanh %222 : vector<2x128xf32>
    %cst_59 = arith.constant 5.000000e-01 : f32
    %224 = vector.broadcast %cst_59 : f32 to vector<2x128xf32>
    %225 = arith.mulf %224, %223 : vector<2x128xf32>
    %cst_60 = arith.constant 5.000000e-01 : f32
    %226 = vector.broadcast %cst_60 : f32 to vector<2x128xf32>
    %227 = arith.addf %225, %226 : vector<2x128xf32>
    %228 = vector.extract_strided_slice %219 {offsets = [0, 128], sizes = [2, 128], strides = [1, 1]} : vector<2x512xf32> to vector<2x128xf32>
    %cst_61 = arith.constant 5.000000e-01 : f32
    %229 = vector.broadcast %cst_61 : f32 to vector<2x128xf32>
    %230 = arith.mulf %229, %228 : vector<2x128xf32>
    %231 = math.tanh %230 : vector<2x128xf32>
    %cst_62 = arith.constant 5.000000e-01 : f32
    %232 = vector.broadcast %cst_62 : f32 to vector<2x128xf32>
    %233 = arith.mulf %232, %231 : vector<2x128xf32>
    %cst_63 = arith.constant 5.000000e-01 : f32
    %234 = vector.broadcast %cst_63 : f32 to vector<2x128xf32>
    %235 = arith.addf %233, %234 : vector<2x128xf32>
    %236 = vector.extract_strided_slice %219 {offsets = [0, 256], sizes = [2, 128], strides = [1, 1]} : vector<2x512xf32> to vector<2x128xf32>
    %237 = math.tanh %236 : vector<2x128xf32>
    %238 = vector.extract_strided_slice %219 {offsets = [0, 384], sizes = [2, 128], strides = [1, 1]} : vector<2x512xf32> to vector<2x128xf32>
    %cst_64 = arith.constant 5.000000e-01 : f32
    %239 = vector.broadcast %cst_64 : f32 to vector<2x128xf32>
    %240 = arith.mulf %239, %238 : vector<2x128xf32>
    %241 = math.tanh %240 : vector<2x128xf32>
    %cst_65 = arith.constant 5.000000e-01 : f32
    %242 = vector.broadcast %cst_65 : f32 to vector<2x128xf32>
    %243 = arith.mulf %242, %241 : vector<2x128xf32>
    %cst_66 = arith.constant 5.000000e-01 : f32
    %244 = vector.broadcast %cst_66 : f32 to vector<2x128xf32>
    %245 = arith.addf %243, %244 : vector<2x128xf32>
    %246 = arith.mulf %235, %191 : vector<2x128xf32>
    %247 = arith.mulf %227, %237 : vector<2x128xf32>
    %248 = arith.addf %246, %247 : vector<2x128xf32>
    %249 = math.tanh %248 : vector<2x128xf32>
    %250 = arith.mulf %245, %249 : vector<2x128xf32>
    %c1_67 = arith.constant 1 : index
    %c0_68 = arith.constant 0 : index
    %c0_69 = arith.constant 0 : index
    %251 = vector.load %arg9[%c1_67, %c0_68, %c0_69] : memref<8x2x512xf32, #tpu.memory_space<vmem>>, vector<1x2x512xf32>
    %252 = vector.shape_cast %251 : vector<1x2x512xf32> to vector<2x512xf32>
    %253 = vector.extract_strided_slice %217 {offsets = [0, 512], sizes = [2, 512], strides = [1, 1]} : vector<2x1024xf32> to vector<2x512xf32>
    %254 = arith.addf %252, %253 : vector<2x512xf32>
    %255 = vector.extract_strided_slice %254 {offsets = [0, 0], sizes = [2, 128], strides = [1, 1]} : vector<2x512xf32> to vector<2x128xf32>
    %cst_70 = arith.constant 5.000000e-01 : f32
    %256 = vector.broadcast %cst_70 : f32 to vector<2x128xf32>
    %257 = arith.mulf %256, %255 : vector<2x128xf32>
    %258 = math.tanh %257 : vector<2x128xf32>
    %cst_71 = arith.constant 5.000000e-01 : f32
    %259 = vector.broadcast %cst_71 : f32 to vector<2x128xf32>
    %260 = arith.mulf %259, %258 : vector<2x128xf32>
    %cst_72 = arith.constant 5.000000e-01 : f32
    %261 = vector.broadcast %cst_72 : f32 to vector<2x128xf32>
    %262 = arith.addf %260, %261 : vector<2x128xf32>
    %263 = vector.extract_strided_slice %254 {offsets = [0, 128], sizes = [2, 128], strides = [1, 1]} : vector<2x512xf32> to vector<2x128xf32>
    %cst_73 = arith.constant 5.000000e-01 : f32
    %264 = vector.broadcast %cst_73 : f32 to vector<2x128xf32>
    %265 = arith.mulf %264, %263 : vector<2x128xf32>
    %266 = math.tanh %265 : vector<2x128xf32>
    %cst_74 = arith.constant 5.000000e-01 : f32
    %267 = vector.broadcast %cst_74 : f32 to vector<2x128xf32>
    %268 = arith.mulf %267, %266 : vector<2x128xf32>
    %cst_75 = arith.constant 5.000000e-01 : f32
    %269 = vector.broadcast %cst_75 : f32 to vector<2x128xf32>
    %270 = arith.addf %268, %269 : vector<2x128xf32>
    %271 = vector.extract_strided_slice %254 {offsets = [0, 256], sizes = [2, 128], strides = [1, 1]} : vector<2x512xf32> to vector<2x128xf32>
    %272 = math.tanh %271 : vector<2x128xf32>
    %273 = vector.extract_strided_slice %254 {offsets = [0, 384], sizes = [2, 128], strides = [1, 1]} : vector<2x512xf32> to vector<2x128xf32>
    %cst_76 = arith.constant 5.000000e-01 : f32
    %274 = vector.broadcast %cst_76 : f32 to vector<2x128xf32>
    %275 = arith.mulf %274, %273 : vector<2x128xf32>
    %276 = math.tanh %275 : vector<2x128xf32>
    %cst_77 = arith.constant 5.000000e-01 : f32
    %277 = vector.broadcast %cst_77 : f32 to vector<2x128xf32>
    %278 = arith.mulf %277, %276 : vector<2x128xf32>
    %cst_78 = arith.constant 5.000000e-01 : f32
    %279 = vector.broadcast %cst_78 : f32 to vector<2x128xf32>
    %280 = arith.addf %278, %279 : vector<2x128xf32>
    %281 = arith.mulf %270, %212 : vector<2x128xf32>
    %282 = arith.mulf %262, %272 : vector<2x128xf32>
    %283 = arith.addf %281, %282 : vector<2x128xf32>
    %284 = math.tanh %283 : vector<2x128xf32>
    %285 = arith.mulf %280, %284 : vector<2x128xf32>
    %286 = tpu.concatenate %285, %250 in 1 : vector<2x128xf32>, vector<2x128xf32> -> vector<2x256xf32>
    %c0_79 = arith.constant 0 : index
    %c0_80 = arith.constant 0 : index
    %287 = vector.load %arg4[%c0_79, %c0_80] : memref<256x1024xf32, #tpu.memory_space<vmem>>, vector<256x1024xf32>
    %cst_81 = arith.constant dense<0.000000e+00> : vector<2x1024xf32>
    %288 = tpu.matmul %286, %287, %cst_81 {dimension_numbers = #tpu.dot_dimension_numbers<[1], [0], [0], [1], [0, 0, 1, 1], [], []>} : vector<2x256xf32>, vector<256x1024xf32>, vector<2x1024xf32> -> vector<2x1024xf32>
    %289 = vector.extract_strided_slice %288 {offsets = [0, 0], sizes = [2, 512], strides = [1, 1]} : vector<2x1024xf32> to vector<2x512xf32>
    %290 = arith.addf %289, %190 : vector<2x512xf32>
    %291 = vector.extract_strided_slice %290 {offsets = [0, 0], sizes = [2, 128], strides = [1, 1]} : vector<2x512xf32> to vector<2x128xf32>
    %cst_82 = arith.constant 5.000000e-01 : f32
    %292 = vector.broadcast %cst_82 : f32 to vector<2x128xf32>
    %293 = arith.mulf %292, %291 : vector<2x128xf32>
    %294 = math.tanh %293 : vector<2x128xf32>
    %cst_83 = arith.constant 5.000000e-01 : f32
    %295 = vector.broadcast %cst_83 : f32 to vector<2x128xf32>
    %296 = arith.mulf %295, %294 : vector<2x128xf32>
    %cst_84 = arith.constant 5.000000e-01 : f32
    %297 = vector.broadcast %cst_84 : f32 to vector<2x128xf32>
    %298 = arith.addf %296, %297 : vector<2x128xf32>
    %299 = vector.extract_strided_slice %290 {offsets = [0, 128], sizes = [2, 128], strides = [1, 1]} : vector<2x512xf32> to vector<2x128xf32>
    %cst_85 = arith.constant 5.000000e-01 : f32
    %300 = vector.broadcast %cst_85 : f32 to vector<2x128xf32>
    %301 = arith.mulf %300, %299 : vector<2x128xf32>
    %302 = math.tanh %301 : vector<2x128xf32>
    %cst_86 = arith.constant 5.000000e-01 : f32
    %303 = vector.broadcast %cst_86 : f32 to vector<2x128xf32>
    %304 = arith.mulf %303, %302 : vector<2x128xf32>
    %cst_87 = arith.constant 5.000000e-01 : f32
    %305 = vector.broadcast %cst_87 : f32 to vector<2x128xf32>
    %306 = arith.addf %304, %305 : vector<2x128xf32>
    %307 = vector.extract_strided_slice %290 {offsets = [0, 256], sizes = [2, 128], strides = [1, 1]} : vector<2x512xf32> to vector<2x128xf32>
    %308 = math.tanh %307 : vector<2x128xf32>
    %309 = vector.extract_strided_slice %290 {offsets = [0, 384], sizes = [2, 128], strides = [1, 1]} : vector<2x512xf32> to vector<2x128xf32>
    %cst_88 = arith.constant 5.000000e-01 : f32
    %310 = vector.broadcast %cst_88 : f32 to vector<2x128xf32>
    %311 = arith.mulf %310, %309 : vector<2x128xf32>
    %312 = math.tanh %311 : vector<2x128xf32>
    %cst_89 = arith.constant 5.000000e-01 : f32
    %313 = vector.broadcast %cst_89 : f32 to vector<2x128xf32>
    %314 = arith.mulf %313, %312 : vector<2x128xf32>
    %cst_90 = arith.constant 5.000000e-01 : f32
    %315 = vector.broadcast %cst_90 : f32 to vector<2x128xf32>
    %316 = arith.addf %314, %315 : vector<2x128xf32>
    %317 = arith.mulf %306, %248 : vector<2x128xf32>
    %318 = arith.mulf %298, %308 : vector<2x128xf32>
    %319 = arith.addf %317, %318 : vector<2x128xf32>
    %320 = math.tanh %319 : vector<2x128xf32>
    %321 = arith.mulf %316, %320 : vector<2x128xf32>
    %c2_91 = arith.constant 2 : index
    %c0_92 = arith.constant 0 : index
    %c0_93 = arith.constant 0 : index
    %322 = vector.load %arg9[%c2_91, %c0_92, %c0_93] : memref<8x2x512xf32, #tpu.memory_space<vmem>>, vector<1x2x512xf32>
    %323 = vector.shape_cast %322 : vector<1x2x512xf32> to vector<2x512xf32>
    %324 = vector.extract_strided_slice %288 {offsets = [0, 512], sizes = [2, 512], strides = [1, 1]} : vector<2x1024xf32> to vector<2x512xf32>
    %325 = arith.addf %323, %324 : vector<2x512xf32>
    %326 = vector.extract_strided_slice %325 {offsets = [0, 0], sizes = [2, 128], strides = [1, 1]} : vector<2x512xf32> to vector<2x128xf32>
    %cst_94 = arith.constant 5.000000e-01 : f32
    %327 = vector.broadcast %cst_94 : f32 to vector<2x128xf32>
    %328 = arith.mulf %327, %326 : vector<2x128xf32>
    %329 = math.tanh %328 : vector<2x128xf32>
    %cst_95 = arith.constant 5.000000e-01 : f32
    %330 = vector.broadcast %cst_95 : f32 to vector<2x128xf32>
    %331 = arith.mulf %330, %329 : vector<2x128xf32>
    %cst_96 = arith.constant 5.000000e-01 : f32
    %332 = vector.broadcast %cst_96 : f32 to vector<2x128xf32>
    %333 = arith.addf %331, %332 : vector<2x128xf32>
    %334 = vector.extract_strided_slice %325 {offsets = [0, 128], sizes = [2, 128], strides = [1, 1]} : vector<2x512xf32> to vector<2x128xf32>
    %cst_97 = arith.constant 5.000000e-01 : f32
    %335 = vector.broadcast %cst_97 : f32 to vector<2x128xf32>
    %336 = arith.mulf %335, %334 : vector<2x128xf32>
    %337 = math.tanh %336 : vector<2x128xf32>
    %cst_98 = arith.constant 5.000000e-01 : f32
    %338 = vector.broadcast %cst_98 : f32 to vector<2x128xf32>
    %339 = arith.mulf %338, %337 : vector<2x128xf32>
    %cst_99 = arith.constant 5.000000e-01 : f32
    %340 = vector.broadcast %cst_99 : f32 to vector<2x128xf32>
    %341 = arith.addf %339, %340 : vector<2x128xf32>
    %342 = vector.extract_strided_slice %325 {offsets = [0, 256], sizes = [2, 128], strides = [1, 1]} : vector<2x512xf32> to vector<2x128xf32>
    %343 = math.tanh %342 : vector<2x128xf32>
    %344 = vector.extract_strided_slice %325 {offsets = [0, 384], sizes = [2, 128], strides = [1, 1]} : vector<2x512xf32> to vector<2x128xf32>
    %cst_100 = arith.constant 5.000000e-01 : f32
    %345 = vector.broadcast %cst_100 : f32 to vector<2x128xf32>
    %346 = arith.mulf %345, %344 : vector<2x128xf32>
    %347 = math.tanh %346 : vector<2x128xf32>
    %cst_101 = arith.constant 5.000000e-01 : f32
    %348 = vector.broadcast %cst_101 : f32 to vector<2x128xf32>
    %349 = arith.mulf %348, %347 : vector<2x128xf32>
    %cst_102 = arith.constant 5.000000e-01 : f32
    %350 = vector.broadcast %cst_102 : f32 to vector<2x128xf32>
    %351 = arith.addf %349, %350 : vector<2x128xf32>
    %352 = arith.mulf %341, %283 : vector<2x128xf32>
    %353 = arith.mulf %333, %343 : vector<2x128xf32>
    %354 = arith.addf %352, %353 : vector<2x128xf32>
    %355 = math.tanh %354 : vector<2x128xf32>
    %356 = arith.mulf %351, %355 : vector<2x128xf32>
    %357 = tpu.concatenate %356, %321 in 1 : vector<2x128xf32>, vector<2x128xf32> -> vector<2x256xf32>
    %c0_103 = arith.constant 0 : index
    %c0_104 = arith.constant 0 : index
    %358 = vector.load %arg4[%c0_103, %c0_104] : memref<256x1024xf32, #tpu.memory_space<vmem>>, vector<256x1024xf32>
    %cst_105 = arith.constant dense<0.000000e+00> : vector<2x1024xf32>
    %359 = tpu.matmul %357, %358, %cst_105 {dimension_numbers = #tpu.dot_dimension_numbers<[1], [0], [0], [1], [0, 0, 1, 1], [], []>} : vector<2x256xf32>, vector<256x1024xf32>, vector<2x1024xf32> -> vector<2x1024xf32>
    %360 = vector.extract_strided_slice %359 {offsets = [0, 0], sizes = [2, 512], strides = [1, 1]} : vector<2x1024xf32> to vector<2x512xf32>
    %361 = arith.addf %360, %190 : vector<2x512xf32>
    %362 = vector.extract_strided_slice %361 {offsets = [0, 0], sizes = [2, 128], strides = [1, 1]} : vector<2x512xf32> to vector<2x128xf32>
    %cst_106 = arith.constant 5.000000e-01 : f32
    %363 = vector.broadcast %cst_106 : f32 to vector<2x128xf32>
    %364 = arith.mulf %363, %362 : vector<2x128xf32>
    %365 = math.tanh %364 : vector<2x128xf32>
    %cst_107 = arith.constant 5.000000e-01 : f32
    %366 = vector.broadcast %cst_107 : f32 to vector<2x128xf32>
    %367 = arith.mulf %366, %365 : vector<2x128xf32>
    %cst_108 = arith.constant 5.000000e-01 : f32
    %368 = vector.broadcast %cst_108 : f32 to vector<2x128xf32>
    %369 = arith.addf %367, %368 : vector<2x128xf32>
    %370 = vector.extract_strided_slice %361 {offsets = [0, 128], sizes = [2, 128], strides = [1, 1]} : vector<2x512xf32> to vector<2x128xf32>
    %cst_109 = arith.constant 5.000000e-01 : f32
    %371 = vector.broadcast %cst_109 : f32 to vector<2x128xf32>
    %372 = arith.mulf %371, %370 : vector<2x128xf32>
    %373 = math.tanh %372 : vector<2x128xf32>
    %cst_110 = arith.constant 5.000000e-01 : f32
    %374 = vector.broadcast %cst_110 : f32 to vector<2x128xf32>
    %375 = arith.mulf %374, %373 : vector<2x128xf32>
    %cst_111 = arith.constant 5.000000e-01 : f32
    %376 = vector.broadcast %cst_111 : f32 to vector<2x128xf32>
    %377 = arith.addf %375, %376 : vector<2x128xf32>
    %378 = vector.extract_strided_slice %361 {offsets = [0, 256], sizes = [2, 128], strides = [1, 1]} : vector<2x512xf32> to vector<2x128xf32>
    %379 = math.tanh %378 : vector<2x128xf32>
    %380 = vector.extract_strided_slice %361 {offsets = [0, 384], sizes = [2, 128], strides = [1, 1]} : vector<2x512xf32> to vector<2x128xf32>
    %cst_112 = arith.constant 5.000000e-01 : f32
    %381 = vector.broadcast %cst_112 : f32 to vector<2x128xf32>
    %382 = arith.mulf %381, %380 : vector<2x128xf32>
    %383 = math.tanh %382 : vector<2x128xf32>
    %cst_113 = arith.constant 5.000000e-01 : f32
    %384 = vector.broadcast %cst_113 : f32 to vector<2x128xf32>
    %385 = arith.mulf %384, %383 : vector<2x128xf32>
    %cst_114 = arith.constant 5.000000e-01 : f32
    %386 = vector.broadcast %cst_114 : f32 to vector<2x128xf32>
    %387 = arith.addf %385, %386 : vector<2x128xf32>
    %388 = arith.mulf %377, %319 : vector<2x128xf32>
    %389 = arith.mulf %369, %379 : vector<2x128xf32>
    %390 = arith.addf %388, %389 : vector<2x128xf32>
    %391 = math.tanh %390 : vector<2x128xf32>
    %392 = arith.mulf %387, %391 : vector<2x128xf32>
    %c3_115 = arith.constant 3 : index
    %c0_116 = arith.constant 0 : index
    %c0_117 = arith.constant 0 : index
    %393 = vector.load %arg9[%c3_115, %c0_116, %c0_117] : memref<8x2x512xf32, #tpu.memory_space<vmem>>, vector<1x2x512xf32>
    %394 = vector.shape_cast %393 : vector<1x2x512xf32> to vector<2x512xf32>
    %395 = vector.extract_strided_slice %359 {offsets = [0, 512], sizes = [2, 512], strides = [1, 1]} : vector<2x1024xf32> to vector<2x512xf32>
    %396 = arith.addf %394, %395 : vector<2x512xf32>
    %397 = vector.extract_strided_slice %396 {offsets = [0, 0], sizes = [2, 128], strides = [1, 1]} : vector<2x512xf32> to vector<2x128xf32>
    %cst_118 = arith.constant 5.000000e-01 : f32
    %398 = vector.broadcast %cst_118 : f32 to vector<2x128xf32>
    %399 = arith.mulf %398, %397 : vector<2x128xf32>
    %400 = math.tanh %399 : vector<2x128xf32>
    %cst_119 = arith.constant 5.000000e-01 : f32
    %401 = vector.broadcast %cst_119 : f32 to vector<2x128xf32>
    %402 = arith.mulf %401, %400 : vector<2x128xf32>
    %cst_120 = arith.constant 5.000000e-01 : f32
    %403 = vector.broadcast %cst_120 : f32 to vector<2x128xf32>
    %404 = arith.addf %402, %403 : vector<2x128xf32>
    %405 = vector.extract_strided_slice %396 {offsets = [0, 128], sizes = [2, 128], strides = [1, 1]} : vector<2x512xf32> to vector<2x128xf32>
    %cst_121 = arith.constant 5.000000e-01 : f32
    %406 = vector.broadcast %cst_121 : f32 to vector<2x128xf32>
    %407 = arith.mulf %406, %405 : vector<2x128xf32>
    %408 = math.tanh %407 : vector<2x128xf32>
    %cst_122 = arith.constant 5.000000e-01 : f32
    %409 = vector.broadcast %cst_122 : f32 to vector<2x128xf32>
    %410 = arith.mulf %409, %408 : vector<2x128xf32>
    %cst_123 = arith.constant 5.000000e-01 : f32
    %411 = vector.broadcast %cst_123 : f32 to vector<2x128xf32>
    %412 = arith.addf %410, %411 : vector<2x128xf32>
    %413 = vector.extract_strided_slice %396 {offsets = [0, 256], sizes = [2, 128], strides = [1, 1]} : vector<2x512xf32> to vector<2x128xf32>
    %414 = math.tanh %413 : vector<2x128xf32>
    %415 = vector.extract_strided_slice %396 {offsets = [0, 384], sizes = [2, 128], strides = [1, 1]} : vector<2x512xf32> to vector<2x128xf32>
    %cst_124 = arith.constant 5.000000e-01 : f32
    %416 = vector.broadcast %cst_124 : f32 to vector<2x128xf32>
    %417 = arith.mulf %416, %415 : vector<2x128xf32>
    %418 = math.tanh %417 : vector<2x128xf32>
    %cst_125 = arith.constant 5.000000e-01 : f32
    %419 = vector.broadcast %cst_125 : f32 to vector<2x128xf32>
    %420 = arith.mulf %419, %418 : vector<2x128xf32>
    %cst_126 = arith.constant 5.000000e-01 : f32
    %421 = vector.broadcast %cst_126 : f32 to vector<2x128xf32>
    %422 = arith.addf %420, %421 : vector<2x128xf32>
    %423 = arith.mulf %412, %354 : vector<2x128xf32>
    %424 = arith.mulf %404, %414 : vector<2x128xf32>
    %425 = arith.addf %423, %424 : vector<2x128xf32>
    %426 = math.tanh %425 : vector<2x128xf32>
    %427 = arith.mulf %422, %426 : vector<2x128xf32>
    %428 = tpu.concatenate %427, %392 in 1 : vector<2x128xf32>, vector<2x128xf32> -> vector<2x256xf32>
    %c0_127 = arith.constant 0 : index
    %c0_128 = arith.constant 0 : index
    %429 = vector.load %arg4[%c0_127, %c0_128] : memref<256x1024xf32, #tpu.memory_space<vmem>>, vector<256x1024xf32>
    %cst_129 = arith.constant dense<0.000000e+00> : vector<2x1024xf32>
    %430 = tpu.matmul %428, %429, %cst_129 {dimension_numbers = #tpu.dot_dimension_numbers<[1], [0], [0], [1], [0, 0, 1, 1], [], []>} : vector<2x256xf32>, vector<256x1024xf32>, vector<2x1024xf32> -> vector<2x1024xf32>
    %431 = vector.extract_strided_slice %430 {offsets = [0, 0], sizes = [2, 512], strides = [1, 1]} : vector<2x1024xf32> to vector<2x512xf32>
    %432 = arith.addf %431, %190 : vector<2x512xf32>
    %433 = vector.extract_strided_slice %432 {offsets = [0, 0], sizes = [2, 128], strides = [1, 1]} : vector<2x512xf32> to vector<2x128xf32>
    %cst_130 = arith.constant 5.000000e-01 : f32
    %434 = vector.broadcast %cst_130 : f32 to vector<2x128xf32>
    %435 = arith.mulf %434, %433 : vector<2x128xf32>
    %436 = math.tanh %435 : vector<2x128xf32>
    %cst_131 = arith.constant 5.000000e-01 : f32
    %437 = vector.broadcast %cst_131 : f32 to vector<2x128xf32>
    %438 = arith.mulf %437, %436 : vector<2x128xf32>
    %cst_132 = arith.constant 5.000000e-01 : f32
    %439 = vector.broadcast %cst_132 : f32 to vector<2x128xf32>
    %440 = arith.addf %438, %439 : vector<2x128xf32>
    %441 = vector.extract_strided_slice %432 {offsets = [0, 128], sizes = [2, 128], strides = [1, 1]} : vector<2x512xf32> to vector<2x128xf32>
    %cst_133 = arith.constant 5.000000e-01 : f32
    %442 = vector.broadcast %cst_133 : f32 to vector<2x128xf32>
    %443 = arith.mulf %442, %441 : vector<2x128xf32>
    %444 = math.tanh %443 : vector<2x128xf32>
    %cst_134 = arith.constant 5.000000e-01 : f32
    %445 = vector.broadcast %cst_134 : f32 to vector<2x128xf32>
    %446 = arith.mulf %445, %444 : vector<2x128xf32>
    %cst_135 = arith.constant 5.000000e-01 : f32
    %447 = vector.broadcast %cst_135 : f32 to vector<2x128xf32>
    %448 = arith.addf %446, %447 : vector<2x128xf32>
    %449 = vector.extract_strided_slice %432 {offsets = [0, 256], sizes = [2, 128], strides = [1, 1]} : vector<2x512xf32> to vector<2x128xf32>
    %450 = math.tanh %449 : vector<2x128xf32>
    %451 = vector.extract_strided_slice %432 {offsets = [0, 384], sizes = [2, 128], strides = [1, 1]} : vector<2x512xf32> to vector<2x128xf32>
    %cst_136 = arith.constant 5.000000e-01 : f32
    %452 = vector.broadcast %cst_136 : f32 to vector<2x128xf32>
    %453 = arith.mulf %452, %451 : vector<2x128xf32>
    %454 = math.tanh %453 : vector<2x128xf32>
    %cst_137 = arith.constant 5.000000e-01 : f32
    %455 = vector.broadcast %cst_137 : f32 to vector<2x128xf32>
    %456 = arith.mulf %455, %454 : vector<2x128xf32>
    %cst_138 = arith.constant 5.000000e-01 : f32
    %457 = vector.broadcast %cst_138 : f32 to vector<2x128xf32>
    %458 = arith.addf %456, %457 : vector<2x128xf32>
    %459 = arith.mulf %448, %390 : vector<2x128xf32>
    %460 = arith.mulf %440, %450 : vector<2x128xf32>
    %461 = arith.addf %459, %460 : vector<2x128xf32>
    %462 = math.tanh %461 : vector<2x128xf32>
    %463 = arith.mulf %458, %462 : vector<2x128xf32>
    %c4_139 = arith.constant 4 : index
    %c0_140 = arith.constant 0 : index
    %c0_141 = arith.constant 0 : index
    %464 = vector.load %arg9[%c4_139, %c0_140, %c0_141] : memref<8x2x512xf32, #tpu.memory_space<vmem>>, vector<1x2x512xf32>
    %465 = vector.shape_cast %464 : vector<1x2x512xf32> to vector<2x512xf32>
    %466 = vector.extract_strided_slice %430 {offsets = [0, 512], sizes = [2, 512], strides = [1, 1]} : vector<2x1024xf32> to vector<2x512xf32>
    %467 = arith.addf %465, %466 : vector<2x512xf32>
    %468 = vector.extract_strided_slice %467 {offsets = [0, 0], sizes = [2, 128], strides = [1, 1]} : vector<2x512xf32> to vector<2x128xf32>
    %cst_142 = arith.constant 5.000000e-01 : f32
    %469 = vector.broadcast %cst_142 : f32 to vector<2x128xf32>
    %470 = arith.mulf %469, %468 : vector<2x128xf32>
    %471 = math.tanh %470 : vector<2x128xf32>
    %cst_143 = arith.constant 5.000000e-01 : f32
    %472 = vector.broadcast %cst_143 : f32 to vector<2x128xf32>
    %473 = arith.mulf %472, %471 : vector<2x128xf32>
    %cst_144 = arith.constant 5.000000e-01 : f32
    %474 = vector.broadcast %cst_144 : f32 to vector<2x128xf32>
    %475 = arith.addf %473, %474 : vector<2x128xf32>
    %476 = vector.extract_strided_slice %467 {offsets = [0, 128], sizes = [2, 128], strides = [1, 1]} : vector<2x512xf32> to vector<2x128xf32>
    %cst_145 = arith.constant 5.000000e-01 : f32
    %477 = vector.broadcast %cst_145 : f32 to vector<2x128xf32>
    %478 = arith.mulf %477, %476 : vector<2x128xf32>
    %479 = math.tanh %478 : vector<2x128xf32>
    %cst_146 = arith.constant 5.000000e-01 : f32
    %480 = vector.broadcast %cst_146 : f32 to vector<2x128xf32>
    %481 = arith.mulf %480, %479 : vector<2x128xf32>
    %cst_147 = arith.constant 5.000000e-01 : f32
    %482 = vector.broadcast %cst_147 : f32 to vector<2x128xf32>
    %483 = arith.addf %481, %482 : vector<2x128xf32>
    %484 = vector.extract_strided_slice %467 {offsets = [0, 256], sizes = [2, 128], strides = [1, 1]} : vector<2x512xf32> to vector<2x128xf32>
    %485 = math.tanh %484 : vector<2x128xf32>
    %486 = vector.extract_strided_slice %467 {offsets = [0, 384], sizes = [2, 128], strides = [1, 1]} : vector<2x512xf32> to vector<2x128xf32>
    %cst_148 = arith.constant 5.000000e-01 : f32
    %487 = vector.broadcast %cst_148 : f32 to vector<2x128xf32>
    %488 = arith.mulf %487, %486 : vector<2x128xf32>
    %489 = math.tanh %488 : vector<2x128xf32>
    %cst_149 = arith.constant 5.000000e-01 : f32
    %490 = vector.broadcast %cst_149 : f32 to vector<2x128xf32>
    %491 = arith.mulf %490, %489 : vector<2x128xf32>
    %cst_150 = arith.constant 5.000000e-01 : f32
    %492 = vector.broadcast %cst_150 : f32 to vector<2x128xf32>
    %493 = arith.addf %491, %492 : vector<2x128xf32>
    %494 = arith.mulf %483, %425 : vector<2x128xf32>
    %495 = arith.mulf %475, %485 : vector<2x128xf32>
    %496 = arith.addf %494, %495 : vector<2x128xf32>
    %497 = math.tanh %496 : vector<2x128xf32>
    %498 = arith.mulf %493, %497 : vector<2x128xf32>
    %499 = tpu.concatenate %498, %463 in 1 : vector<2x128xf32>, vector<2x128xf32> -> vector<2x256xf32>
    %c0_151 = arith.constant 0 : index
    %c0_152 = arith.constant 0 : index
    %500 = vector.load %arg4[%c0_151, %c0_152] : memref<256x1024xf32, #tpu.memory_space<vmem>>, vector<256x1024xf32>
    %cst_153 = arith.constant dense<0.000000e+00> : vector<2x1024xf32>
    %501 = tpu.matmul %499, %500, %cst_153 {dimension_numbers = #tpu.dot_dimension_numbers<[1], [0], [0], [1], [0, 0, 1, 1], [], []>} : vector<2x256xf32>, vector<256x1024xf32>, vector<2x1024xf32> -> vector<2x1024xf32>
    %502 = vector.extract_strided_slice %501 {offsets = [0, 0], sizes = [2, 512], strides = [1, 1]} : vector<2x1024xf32> to vector<2x512xf32>
    %503 = arith.addf %502, %190 : vector<2x512xf32>
    %504 = vector.extract_strided_slice %503 {offsets = [0, 0], sizes = [2, 128], strides = [1, 1]} : vector<2x512xf32> to vector<2x128xf32>
    %cst_154 = arith.constant 5.000000e-01 : f32
    %505 = vector.broadcast %cst_154 : f32 to vector<2x128xf32>
    %506 = arith.mulf %505, %504 : vector<2x128xf32>
    %507 = math.tanh %506 : vector<2x128xf32>
    %cst_155 = arith.constant 5.000000e-01 : f32
    %508 = vector.broadcast %cst_155 : f32 to vector<2x128xf32>
    %509 = arith.mulf %508, %507 : vector<2x128xf32>
    %cst_156 = arith.constant 5.000000e-01 : f32
    %510 = vector.broadcast %cst_156 : f32 to vector<2x128xf32>
    %511 = arith.addf %509, %510 : vector<2x128xf32>
    %512 = vector.extract_strided_slice %503 {offsets = [0, 128], sizes = [2, 128], strides = [1, 1]} : vector<2x512xf32> to vector<2x128xf32>
    %cst_157 = arith.constant 5.000000e-01 : f32
    %513 = vector.broadcast %cst_157 : f32 to vector<2x128xf32>
    %514 = arith.mulf %513, %512 : vector<2x128xf32>
    %515 = math.tanh %514 : vector<2x128xf32>
    %cst_158 = arith.constant 5.000000e-01 : f32
    %516 = vector.broadcast %cst_158 : f32 to vector<2x128xf32>
    %517 = arith.mulf %516, %515 : vector<2x128xf32>
    %cst_159 = arith.constant 5.000000e-01 : f32
    %518 = vector.broadcast %cst_159 : f32 to vector<2x128xf32>
    %519 = arith.addf %517, %518 : vector<2x128xf32>
    %520 = vector.extract_strided_slice %503 {offsets = [0, 256], sizes = [2, 128], strides = [1, 1]} : vector<2x512xf32> to vector<2x128xf32>
    %521 = math.tanh %520 : vector<2x128xf32>
    %522 = vector.extract_strided_slice %503 {offsets = [0, 384], sizes = [2, 128], strides = [1, 1]} : vector<2x512xf32> to vector<2x128xf32>
    %cst_160 = arith.constant 5.000000e-01 : f32
    %523 = vector.broadcast %cst_160 : f32 to vector<2x128xf32>
    %524 = arith.mulf %523, %522 : vector<2x128xf32>
    %525 = math.tanh %524 : vector<2x128xf32>
    %cst_161 = arith.constant 5.000000e-01 : f32
    %526 = vector.broadcast %cst_161 : f32 to vector<2x128xf32>
    %527 = arith.mulf %526, %525 : vector<2x128xf32>
    %cst_162 = arith.constant 5.000000e-01 : f32
    %528 = vector.broadcast %cst_162 : f32 to vector<2x128xf32>
    %529 = arith.addf %527, %528 : vector<2x128xf32>
    %530 = arith.mulf %519, %461 : vector<2x128xf32>
    %531 = arith.mulf %511, %521 : vector<2x128xf32>
    %532 = arith.addf %530, %531 : vector<2x128xf32>
    %533 = math.tanh %532 : vector<2x128xf32>
    %534 = arith.mulf %529, %533 : vector<2x128xf32>
    %c5_163 = arith.constant 5 : index
    %c0_164 = arith.constant 0 : index
    %c0_165 = arith.constant 0 : index
    %535 = vector.load %arg9[%c5_163, %c0_164, %c0_165] : memref<8x2x512xf32, #tpu.memory_space<vmem>>, vector<1x2x512xf32>
    %536 = vector.shape_cast %535 : vector<1x2x512xf32> to vector<2x512xf32>
    %537 = vector.extract_strided_slice %501 {offsets = [0, 512], sizes = [2, 512], strides = [1, 1]} : vector<2x1024xf32> to vector<2x512xf32>
    %538 = arith.addf %536, %537 : vector<2x512xf32>
    %539 = vector.extract_strided_slice %538 {offsets = [0, 0], sizes = [2, 128], strides = [1, 1]} : vector<2x512xf32> to vector<2x128xf32>
    %cst_166 = arith.constant 5.000000e-01 : f32
    %540 = vector.broadcast %cst_166 : f32 to vector<2x128xf32>
    %541 = arith.mulf %540, %539 : vector<2x128xf32>
    %542 = math.tanh %541 : vector<2x128xf32>
    %cst_167 = arith.constant 5.000000e-01 : f32
    %543 = vector.broadcast %cst_167 : f32 to vector<2x128xf32>
    %544 = arith.mulf %543, %542 : vector<2x128xf32>
    %cst_168 = arith.constant 5.000000e-01 : f32
    %545 = vector.broadcast %cst_168 : f32 to vector<2x128xf32>
    %546 = arith.addf %544, %545 : vector<2x128xf32>
    %547 = vector.extract_strided_slice %538 {offsets = [0, 128], sizes = [2, 128], strides = [1, 1]} : vector<2x512xf32> to vector<2x128xf32>
    %cst_169 = arith.constant 5.000000e-01 : f32
    %548 = vector.broadcast %cst_169 : f32 to vector<2x128xf32>
    %549 = arith.mulf %548, %547 : vector<2x128xf32>
    %550 = math.tanh %549 : vector<2x128xf32>
    %cst_170 = arith.constant 5.000000e-01 : f32
    %551 = vector.broadcast %cst_170 : f32 to vector<2x128xf32>
    %552 = arith.mulf %551, %550 : vector<2x128xf32>
    %cst_171 = arith.constant 5.000000e-01 : f32
    %553 = vector.broadcast %cst_171 : f32 to vector<2x128xf32>
    %554 = arith.addf %552, %553 : vector<2x128xf32>
    %555 = vector.extract_strided_slice %538 {offsets = [0, 256], sizes = [2, 128], strides = [1, 1]} : vector<2x512xf32> to vector<2x128xf32>
    %556 = math.tanh %555 : vector<2x128xf32>
    %557 = vector.extract_strided_slice %538 {offsets = [0, 384], sizes = [2, 128], strides = [1, 1]} : vector<2x512xf32> to vector<2x128xf32>
    %cst_172 = arith.constant 5.000000e-01 : f32
    %558 = vector.broadcast %cst_172 : f32 to vector<2x128xf32>
    %559 = arith.mulf %558, %557 : vector<2x128xf32>
    %560 = math.tanh %559 : vector<2x128xf32>
    %cst_173 = arith.constant 5.000000e-01 : f32
    %561 = vector.broadcast %cst_173 : f32 to vector<2x128xf32>
    %562 = arith.mulf %561, %560 : vector<2x128xf32>
    %cst_174 = arith.constant 5.000000e-01 : f32
    %563 = vector.broadcast %cst_174 : f32 to vector<2x128xf32>
    %564 = arith.addf %562, %563 : vector<2x128xf32>
    %565 = arith.mulf %554, %496 : vector<2x128xf32>
    %566 = arith.mulf %546, %556 : vector<2x128xf32>
    %567 = arith.addf %565, %566 : vector<2x128xf32>
    %568 = math.tanh %567 : vector<2x128xf32>
    %569 = arith.mulf %564, %568 : vector<2x128xf32>
    %570 = tpu.concatenate %569, %534 in 1 : vector<2x128xf32>, vector<2x128xf32> -> vector<2x256xf32>
    %c0_175 = arith.constant 0 : index
    %c0_176 = arith.constant 0 : index
    %571 = vector.load %arg4[%c0_175, %c0_176] : memref<256x1024xf32, #tpu.memory_space<vmem>>, vector<256x1024xf32>
    %cst_177 = arith.constant dense<0.000000e+00> : vector<2x1024xf32>
    %572 = tpu.matmul %570, %571, %cst_177 {dimension_numbers = #tpu.dot_dimension_numbers<[1], [0], [0], [1], [0, 0, 1, 1], [], []>} : vector<2x256xf32>, vector<256x1024xf32>, vector<2x1024xf32> -> vector<2x1024xf32>
    %573 = vector.extract_strided_slice %572 {offsets = [0, 0], sizes = [2, 512], strides = [1, 1]} : vector<2x1024xf32> to vector<2x512xf32>
    %574 = arith.addf %573, %190 : vector<2x512xf32>
    %575 = vector.extract_strided_slice %574 {offsets = [0, 0], sizes = [2, 128], strides = [1, 1]} : vector<2x512xf32> to vector<2x128xf32>
    %cst_178 = arith.constant 5.000000e-01 : f32
    %576 = vector.broadcast %cst_178 : f32 to vector<2x128xf32>
    %577 = arith.mulf %576, %575 : vector<2x128xf32>
    %578 = math.tanh %577 : vector<2x128xf32>
    %cst_179 = arith.constant 5.000000e-01 : f32
    %579 = vector.broadcast %cst_179 : f32 to vector<2x128xf32>
    %580 = arith.mulf %579, %578 : vector<2x128xf32>
    %cst_180 = arith.constant 5.000000e-01 : f32
    %581 = vector.broadcast %cst_180 : f32 to vector<2x128xf32>
    %582 = arith.addf %580, %581 : vector<2x128xf32>
    %583 = vector.extract_strided_slice %574 {offsets = [0, 128], sizes = [2, 128], strides = [1, 1]} : vector<2x512xf32> to vector<2x128xf32>
    %cst_181 = arith.constant 5.000000e-01 : f32
    %584 = vector.broadcast %cst_181 : f32 to vector<2x128xf32>
    %585 = arith.mulf %584, %583 : vector<2x128xf32>
    %586 = math.tanh %585 : vector<2x128xf32>
    %cst_182 = arith.constant 5.000000e-01 : f32
    %587 = vector.broadcast %cst_182 : f32 to vector<2x128xf32>
    %588 = arith.mulf %587, %586 : vector<2x128xf32>
    %cst_183 = arith.constant 5.000000e-01 : f32
    %589 = vector.broadcast %cst_183 : f32 to vector<2x128xf32>
    %590 = arith.addf %588, %589 : vector<2x128xf32>
    %591 = vector.extract_strided_slice %574 {offsets = [0, 256], sizes = [2, 128], strides = [1, 1]} : vector<2x512xf32> to vector<2x128xf32>
    %592 = math.tanh %591 : vector<2x128xf32>
    %593 = vector.extract_strided_slice %574 {offsets = [0, 384], sizes = [2, 128], strides = [1, 1]} : vector<2x512xf32> to vector<2x128xf32>
    %cst_184 = arith.constant 5.000000e-01 : f32
    %594 = vector.broadcast %cst_184 : f32 to vector<2x128xf32>
    %595 = arith.mulf %594, %593 : vector<2x128xf32>
    %596 = math.tanh %595 : vector<2x128xf32>
    %cst_185 = arith.constant 5.000000e-01 : f32
    %597 = vector.broadcast %cst_185 : f32 to vector<2x128xf32>
    %598 = arith.mulf %597, %596 : vector<2x128xf32>
    %cst_186 = arith.constant 5.000000e-01 : f32
    %599 = vector.broadcast %cst_186 : f32 to vector<2x128xf32>
    %600 = arith.addf %598, %599 : vector<2x128xf32>
    %601 = arith.mulf %590, %532 : vector<2x128xf32>
    %602 = arith.mulf %582, %592 : vector<2x128xf32>
    %603 = arith.addf %601, %602 : vector<2x128xf32>
    %604 = math.tanh %603 : vector<2x128xf32>
    %605 = arith.mulf %600, %604 : vector<2x128xf32>
    %c6_187 = arith.constant 6 : index
    %c0_188 = arith.constant 0 : index
    %c0_189 = arith.constant 0 : index
    %606 = vector.load %arg9[%c6_187, %c0_188, %c0_189] : memref<8x2x512xf32, #tpu.memory_space<vmem>>, vector<1x2x512xf32>
    %607 = vector.shape_cast %606 : vector<1x2x512xf32> to vector<2x512xf32>
    %608 = vector.extract_strided_slice %572 {offsets = [0, 512], sizes = [2, 512], strides = [1, 1]} : vector<2x1024xf32> to vector<2x512xf32>
    %609 = arith.addf %607, %608 : vector<2x512xf32>
    %610 = vector.extract_strided_slice %609 {offsets = [0, 0], sizes = [2, 128], strides = [1, 1]} : vector<2x512xf32> to vector<2x128xf32>
    %cst_190 = arith.constant 5.000000e-01 : f32
    %611 = vector.broadcast %cst_190 : f32 to vector<2x128xf32>
    %612 = arith.mulf %611, %610 : vector<2x128xf32>
    %613 = math.tanh %612 : vector<2x128xf32>
    %cst_191 = arith.constant 5.000000e-01 : f32
    %614 = vector.broadcast %cst_191 : f32 to vector<2x128xf32>
    %615 = arith.mulf %614, %613 : vector<2x128xf32>
    %cst_192 = arith.constant 5.000000e-01 : f32
    %616 = vector.broadcast %cst_192 : f32 to vector<2x128xf32>
    %617 = arith.addf %615, %616 : vector<2x128xf32>
    %618 = vector.extract_strided_slice %609 {offsets = [0, 128], sizes = [2, 128], strides = [1, 1]} : vector<2x512xf32> to vector<2x128xf32>
    %cst_193 = arith.constant 5.000000e-01 : f32
    %619 = vector.broadcast %cst_193 : f32 to vector<2x128xf32>
    %620 = arith.mulf %619, %618 : vector<2x128xf32>
    %621 = math.tanh %620 : vector<2x128xf32>
    %cst_194 = arith.constant 5.000000e-01 : f32
    %622 = vector.broadcast %cst_194 : f32 to vector<2x128xf32>
    %623 = arith.mulf %622, %621 : vector<2x128xf32>
    %cst_195 = arith.constant 5.000000e-01 : f32
    %624 = vector.broadcast %cst_195 : f32 to vector<2x128xf32>
    %625 = arith.addf %623, %624 : vector<2x128xf32>
    %626 = vector.extract_strided_slice %609 {offsets = [0, 256], sizes = [2, 128], strides = [1, 1]} : vector<2x512xf32> to vector<2x128xf32>
    %627 = math.tanh %626 : vector<2x128xf32>
    %628 = vector.extract_strided_slice %609 {offsets = [0, 384], sizes = [2, 128], strides = [1, 1]} : vector<2x512xf32> to vector<2x128xf32>
    %cst_196 = arith.constant 5.000000e-01 : f32
    %629 = vector.broadcast %cst_196 : f32 to vector<2x128xf32>
    %630 = arith.mulf %629, %628 : vector<2x128xf32>
    %631 = math.tanh %630 : vector<2x128xf32>
    %cst_197 = arith.constant 5.000000e-01 : f32
    %632 = vector.broadcast %cst_197 : f32 to vector<2x128xf32>
    %633 = arith.mulf %632, %631 : vector<2x128xf32>
    %cst_198 = arith.constant 5.000000e-01 : f32
    %634 = vector.broadcast %cst_198 : f32 to vector<2x128xf32>
    %635 = arith.addf %633, %634 : vector<2x128xf32>
    %636 = arith.mulf %625, %567 : vector<2x128xf32>
    %637 = arith.mulf %617, %627 : vector<2x128xf32>
    %638 = arith.addf %636, %637 : vector<2x128xf32>
    %639 = math.tanh %638 : vector<2x128xf32>
    %640 = arith.mulf %635, %639 : vector<2x128xf32>
    %641 = tpu.concatenate %640, %605 in 1 : vector<2x128xf32>, vector<2x128xf32> -> vector<2x256xf32>
    %c0_199 = arith.constant 0 : index
    %c0_200 = arith.constant 0 : index
    %642 = vector.load %arg4[%c0_199, %c0_200] : memref<256x1024xf32, #tpu.memory_space<vmem>>, vector<256x1024xf32>
    %cst_201 = arith.constant dense<0.000000e+00> : vector<2x1024xf32>
    %643 = tpu.matmul %641, %642, %cst_201 {dimension_numbers = #tpu.dot_dimension_numbers<[1], [0], [0], [1], [0, 0, 1, 1], [], []>} : vector<2x256xf32>, vector<256x1024xf32>, vector<2x1024xf32> -> vector<2x1024xf32>
    %644 = vector.extract_strided_slice %643 {offsets = [0, 0], sizes = [2, 512], strides = [1, 1]} : vector<2x1024xf32> to vector<2x512xf32>
    %645 = arith.addf %644, %190 : vector<2x512xf32>
    %646 = vector.extract_strided_slice %645 {offsets = [0, 0], sizes = [2, 128], strides = [1, 1]} : vector<2x512xf32> to vector<2x128xf32>
    %cst_202 = arith.constant 5.000000e-01 : f32
    %647 = vector.broadcast %cst_202 : f32 to vector<2x128xf32>
    %648 = arith.mulf %647, %646 : vector<2x128xf32>
    %649 = math.tanh %648 : vector<2x128xf32>
    %cst_203 = arith.constant 5.000000e-01 : f32
    %650 = vector.broadcast %cst_203 : f32 to vector<2x128xf32>
    %651 = arith.mulf %650, %649 : vector<2x128xf32>
    %cst_204 = arith.constant 5.000000e-01 : f32
    %652 = vector.broadcast %cst_204 : f32 to vector<2x128xf32>
    %653 = arith.addf %651, %652 : vector<2x128xf32>
    %654 = vector.extract_strided_slice %645 {offsets = [0, 128], sizes = [2, 128], strides = [1, 1]} : vector<2x512xf32> to vector<2x128xf32>
    %cst_205 = arith.constant 5.000000e-01 : f32
    %655 = vector.broadcast %cst_205 : f32 to vector<2x128xf32>
    %656 = arith.mulf %655, %654 : vector<2x128xf32>
    %657 = math.tanh %656 : vector<2x128xf32>
    %cst_206 = arith.constant 5.000000e-01 : f32
    %658 = vector.broadcast %cst_206 : f32 to vector<2x128xf32>
    %659 = arith.mulf %658, %657 : vector<2x128xf32>
    %cst_207 = arith.constant 5.000000e-01 : f32
    %660 = vector.broadcast %cst_207 : f32 to vector<2x128xf32>
    %661 = arith.addf %659, %660 : vector<2x128xf32>
    %662 = vector.extract_strided_slice %645 {offsets = [0, 256], sizes = [2, 128], strides = [1, 1]} : vector<2x512xf32> to vector<2x128xf32>
    %663 = math.tanh %662 : vector<2x128xf32>
    %664 = vector.extract_strided_slice %645 {offsets = [0, 384], sizes = [2, 128], strides = [1, 1]} : vector<2x512xf32> to vector<2x128xf32>
    %cst_208 = arith.constant 5.000000e-01 : f32
    %665 = vector.broadcast %cst_208 : f32 to vector<2x128xf32>
    %666 = arith.mulf %665, %664 : vector<2x128xf32>
    %667 = math.tanh %666 : vector<2x128xf32>
    %cst_209 = arith.constant 5.000000e-01 : f32
    %668 = vector.broadcast %cst_209 : f32 to vector<2x128xf32>
    %669 = arith.mulf %668, %667 : vector<2x128xf32>
    %cst_210 = arith.constant 5.000000e-01 : f32
    %670 = vector.broadcast %cst_210 : f32 to vector<2x128xf32>
    %671 = arith.addf %669, %670 : vector<2x128xf32>
    %672 = arith.mulf %661, %603 : vector<2x128xf32>
    %673 = arith.mulf %653, %663 : vector<2x128xf32>
    %674 = arith.addf %672, %673 : vector<2x128xf32>
    %675 = math.tanh %674 : vector<2x128xf32>
    %676 = arith.mulf %671, %675 : vector<2x128xf32>
    %c7_211 = arith.constant 7 : index
    %c0_212 = arith.constant 0 : index
    %c0_213 = arith.constant 0 : index
    %677 = vector.load %arg9[%c7_211, %c0_212, %c0_213] : memref<8x2x512xf32, #tpu.memory_space<vmem>>, vector<1x2x512xf32>
    %678 = vector.shape_cast %677 : vector<1x2x512xf32> to vector<2x512xf32>
    %679 = vector.extract_strided_slice %643 {offsets = [0, 512], sizes = [2, 512], strides = [1, 1]} : vector<2x1024xf32> to vector<2x512xf32>
    %680 = arith.addf %678, %679 : vector<2x512xf32>
    %681 = vector.extract_strided_slice %680 {offsets = [0, 0], sizes = [2, 128], strides = [1, 1]} : vector<2x512xf32> to vector<2x128xf32>
    %cst_214 = arith.constant 5.000000e-01 : f32
    %682 = vector.broadcast %cst_214 : f32 to vector<2x128xf32>
    %683 = arith.mulf %682, %681 : vector<2x128xf32>
    %684 = math.tanh %683 : vector<2x128xf32>
    %cst_215 = arith.constant 5.000000e-01 : f32
    %685 = vector.broadcast %cst_215 : f32 to vector<2x128xf32>
    %686 = arith.mulf %685, %684 : vector<2x128xf32>
    %cst_216 = arith.constant 5.000000e-01 : f32
    %687 = vector.broadcast %cst_216 : f32 to vector<2x128xf32>
    %688 = arith.addf %686, %687 : vector<2x128xf32>
    %689 = vector.extract_strided_slice %680 {offsets = [0, 128], sizes = [2, 128], strides = [1, 1]} : vector<2x512xf32> to vector<2x128xf32>
    %cst_217 = arith.constant 5.000000e-01 : f32
    %690 = vector.broadcast %cst_217 : f32 to vector<2x128xf32>
    %691 = arith.mulf %690, %689 : vector<2x128xf32>
    %692 = math.tanh %691 : vector<2x128xf32>
    %cst_218 = arith.constant 5.000000e-01 : f32
    %693 = vector.broadcast %cst_218 : f32 to vector<2x128xf32>
    %694 = arith.mulf %693, %692 : vector<2x128xf32>
    %cst_219 = arith.constant 5.000000e-01 : f32
    %695 = vector.broadcast %cst_219 : f32 to vector<2x128xf32>
    %696 = arith.addf %694, %695 : vector<2x128xf32>
    %697 = vector.extract_strided_slice %680 {offsets = [0, 256], sizes = [2, 128], strides = [1, 1]} : vector<2x512xf32> to vector<2x128xf32>
    %698 = math.tanh %697 : vector<2x128xf32>
    %699 = vector.extract_strided_slice %680 {offsets = [0, 384], sizes = [2, 128], strides = [1, 1]} : vector<2x512xf32> to vector<2x128xf32>
    %cst_220 = arith.constant 5.000000e-01 : f32
    %700 = vector.broadcast %cst_220 : f32 to vector<2x128xf32>
    %701 = arith.mulf %700, %699 : vector<2x128xf32>
    %702 = math.tanh %701 : vector<2x128xf32>
    %cst_221 = arith.constant 5.000000e-01 : f32
    %703 = vector.broadcast %cst_221 : f32 to vector<2x128xf32>
    %704 = arith.mulf %703, %702 : vector<2x128xf32>
    %cst_222 = arith.constant 5.000000e-01 : f32
    %705 = vector.broadcast %cst_222 : f32 to vector<2x128xf32>
    %706 = arith.addf %704, %705 : vector<2x128xf32>
    %707 = arith.mulf %696, %638 : vector<2x128xf32>
    %708 = arith.mulf %688, %698 : vector<2x128xf32>
    %709 = arith.addf %707, %708 : vector<2x128xf32>
    %710 = math.tanh %709 : vector<2x128xf32>
    %711 = arith.mulf %706, %710 : vector<2x128xf32>
    %712 = tpu.concatenate %711, %676 in 1 : vector<2x128xf32>, vector<2x128xf32> -> vector<2x256xf32>
    %c0_223 = arith.constant 0 : index
    %c0_224 = arith.constant 0 : index
    %713 = vector.load %arg4[%c0_223, %c0_224] : memref<256x1024xf32, #tpu.memory_space<vmem>>, vector<256x1024xf32>
    %cst_225 = arith.constant dense<0.000000e+00> : vector<2x1024xf32>
    %714 = tpu.matmul %712, %713, %cst_225 {dimension_numbers = #tpu.dot_dimension_numbers<[1], [0], [0], [1], [0, 0, 1, 1], [], []>} : vector<2x256xf32>, vector<256x1024xf32>, vector<2x1024xf32> -> vector<2x1024xf32>
    %715 = vector.extract_strided_slice %714 {offsets = [0, 0], sizes = [2, 512], strides = [1, 1]} : vector<2x1024xf32> to vector<2x512xf32>
    %716 = arith.addf %715, %190 : vector<2x512xf32>
    %717 = vector.extract_strided_slice %716 {offsets = [0, 0], sizes = [2, 128], strides = [1, 1]} : vector<2x512xf32> to vector<2x128xf32>
    %cst_226 = arith.constant 5.000000e-01 : f32
    %718 = vector.broadcast %cst_226 : f32 to vector<2x128xf32>
    %719 = arith.mulf %718, %717 : vector<2x128xf32>
    %720 = math.tanh %719 : vector<2x128xf32>
    %cst_227 = arith.constant 5.000000e-01 : f32
    %721 = vector.broadcast %cst_227 : f32 to vector<2x128xf32>
    %722 = arith.mulf %721, %720 : vector<2x128xf32>
    %cst_228 = arith.constant 5.000000e-01 : f32
    %723 = vector.broadcast %cst_228 : f32 to vector<2x128xf32>
    %724 = arith.addf %722, %723 : vector<2x128xf32>
    %725 = vector.extract_strided_slice %716 {offsets = [0, 128], sizes = [2, 128], strides = [1, 1]} : vector<2x512xf32> to vector<2x128xf32>
    %cst_229 = arith.constant 5.000000e-01 : f32
    %726 = vector.broadcast %cst_229 : f32 to vector<2x128xf32>
    %727 = arith.mulf %726, %725 : vector<2x128xf32>
    %728 = math.tanh %727 : vector<2x128xf32>
    %cst_230 = arith.constant 5.000000e-01 : f32
    %729 = vector.broadcast %cst_230 : f32 to vector<2x128xf32>
    %730 = arith.mulf %729, %728 : vector<2x128xf32>
    %cst_231 = arith.constant 5.000000e-01 : f32
    %731 = vector.broadcast %cst_231 : f32 to vector<2x128xf32>
    %732 = arith.addf %730, %731 : vector<2x128xf32>
    %733 = vector.extract_strided_slice %716 {offsets = [0, 256], sizes = [2, 128], strides = [1, 1]} : vector<2x512xf32> to vector<2x128xf32>
    %734 = math.tanh %733 : vector<2x128xf32>
    %735 = vector.extract_strided_slice %716 {offsets = [0, 384], sizes = [2, 128], strides = [1, 1]} : vector<2x512xf32> to vector<2x128xf32>
    %cst_232 = arith.constant 5.000000e-01 : f32
    %736 = vector.broadcast %cst_232 : f32 to vector<2x128xf32>
    %737 = arith.mulf %736, %735 : vector<2x128xf32>
    %738 = math.tanh %737 : vector<2x128xf32>
    %cst_233 = arith.constant 5.000000e-01 : f32
    %739 = vector.broadcast %cst_233 : f32 to vector<2x128xf32>
    %740 = arith.mulf %739, %738 : vector<2x128xf32>
    %cst_234 = arith.constant 5.000000e-01 : f32
    %741 = vector.broadcast %cst_234 : f32 to vector<2x128xf32>
    %742 = arith.addf %740, %741 : vector<2x128xf32>
    %743 = arith.mulf %732, %674 : vector<2x128xf32>
    %744 = arith.mulf %724, %734 : vector<2x128xf32>
    %745 = arith.addf %743, %744 : vector<2x128xf32>
    %746 = math.tanh %745 : vector<2x128xf32>
    %747 = arith.mulf %742, %746 : vector<2x128xf32>
    %c0_235 = arith.constant 0 : index
    %c0_236 = arith.constant 0 : index
    %748 = vector.load %arg6[%c0_235, %c0_236] : memref<128x1xf32, #tpu.memory_space<vmem>>, vector<128x1xf32>
    %cst_237 = arith.constant dense<0.000000e+00> : vector<2x1xf32>
    %749 = tpu.matmul %747, %748, %cst_237 {dimension_numbers = #tpu.dot_dimension_numbers<[1], [0], [0], [1], [0, 0, 1, 1], [], []>} : vector<2x128xf32>, vector<128x1xf32>, vector<2x1xf32> -> vector<2x1xf32>
    %c0_238 = arith.constant 0 : index
    %c0_239 = arith.constant 0 : index
    %750 = vector.load %arg7[%c0_238, %c0_239] : memref<1x1xf32, #tpu.memory_space<vmem>>, vector<1x1xf32>
    %751 = vector.broadcast %750 : vector<1x1xf32> to vector<2x1xf32>
    %752 = arith.addf %749, %751 : vector<2x1xf32>
    %c0_240 = arith.constant 0 : index
    %c0_241 = arith.constant 0 : index
    %753 = vector.load %arg8[%c0_240, %c0_241] : memref<2x1xf32, #tpu.memory_space<vmem>>, vector<2x1xf32>
    tpu.vector_store %arg8[%c0_240, %c0_241], %752 {strides = array<i32>} : memref<2x1xf32, #tpu.memory_space<vmem>>, vector<2x1xf32>,
    return
  }
  func.func @transform_0(%arg0: i32) -> (i32, i32, i32) {
    %c0_i32 = arith.constant 0 : i32
    %c0_i32_0 = arith.constant 0 : i32
    %c0_i32_1 = arith.constant 0 : i32
    return %c0_i32, %arg0, %c0_i32_0 : i32, i32, i32
  }
  func.func @transform_1(%arg0: i32) -> (i32, i32) {
    %c0_i32 = arith.constant 0 : i32
    %c0_i32_0 = arith.constant 0 : i32
    %c0_i32_1 = arith.constant 0 : i32
    return %c0_i32, %c0_i32_0 : i32, i32
  }
  func.func @transform_2(%arg0: i32) -> (i32, i32) {
    %c0_i32 = arith.constant 0 : i32
    %c0_i32_0 = arith.constant 0 : i32
    %c0_i32_1 = arith.constant 0 : i32
    return %c0_i32, %c0_i32_0 : i32, i32
  }
  func.func @transform_3(%arg0: i32) -> (i32, i32) {
    %c0_i32 = arith.constant 0 : i32
    %c0_i32_0 = arith.constant 0 : i32
    %c0_i32_1 = arith.constant 0 : i32
    return %c0_i32, %c0_i32_0 : i32, i32
  }
  func.func @transform_4(%arg0: i32) -> (i32, i32) {
    %c0_i32 = arith.constant 0 : i32
    %c0_i32_0 = arith.constant 0 : i32
    %c0_i32_1 = arith.constant 0 : i32
    return %c0_i32, %c0_i32_0 : i32, i32
  }
  func.func @transform_5(%arg0: i32) -> (i32, i32) {
    %c0_i32 = arith.constant 0 : i32
    %c0_i32_0 = arith.constant 0 : i32
    %c0_i32_1 = arith.constant 0 : i32
    return %c0_i32, %c0_i32_0 : i32, i32
  }
  func.func @transform_6(%arg0: i32) -> (i32, i32) {
    %c0_i32 = arith.constant 0 : i32
    %c0_i32_0 = arith.constant 0 : i32
    %c0_i32_1 = arith.constant 0 : i32
    return %c0_i32, %c0_i32_0 : i32, i32
  }
  func.func @transform_7(%arg0: i32) -> (i32, i32) {
    %c0_i32 = arith.constant 0 : i32
    %c0_i32_0 = arith.constant 0 : i32
    return %arg0, %c0_i32 : i32, i32
  }
}

</mosaic_0001>

<llo_original>
// kernel: tpu_custom_call.1
$region0: #{tpu_custom_call.1}
  #allocation0 [shape = 'u32[]', space=smem, size = 0x4, offset = 0x4, fixed_abs, tag = 'smem constant byte address 0x4 - core index']
  #allocation1 [shape = 'u32[144,128]{1,0:T(1,128)}', space=vmem, size = 0x12000, scoped, tag = 'internal scratch']
  #allocation2 [shape = 'f32[8,2,512]{2,1,0:T(2,128)}', space=vmem, size = 0x8000, scoped, tag = 'scratch operand']
  #allocation3 [shape = 'f32[1,1]{1,0:T(1,128)S(1)}', space=vmem, size = 0x200, scoped, tag = 'scoped memory for tpu_custom_call.1']
  %s0 = inlined_call_operand.vmem [shape: f32[8,2,3], index: 0, kind: input, shape index: {}]
  %s1 = inlined_call_operand.vmem [shape: f32[3,512], index: 1, kind: input, shape index: {}]
  %s2 = inlined_call_operand.vmem [shape: f32[1,512], index: 2, kind: input, shape index: {}]
  %s3 = inlined_call_operand.hbm [shape: f32[256,1024], index: 3, kind: input, shape index: {}]
  %s4 = inlined_call_operand.vmem [shape: f32[1,512], index: 4, kind: input, shape index: {}]
  %s5 = inlined_call_operand.vmem [shape: f32[128,1], index: 5, kind: input, shape index: {}]
  %s6 = inlined_call_operand.<no memory space> [shape: f32[1,1], index: 6, kind: input, shape index: {}]
  %s7 = inlined_call_operand.vmem [shape: f32[2,1], index: 7, kind: output, shape index: {}]
  %s8 = sld [smem:[#allocation0]]
  $region42: #{tpu_custom_call.1} parent=0
    _
  %s10 = ssub.s32 1, %s8
  %s11 = scalar_select 0, %s10, %s8
  %v12 = vstv %s6
  %13 = vst [vmem:[#allocation3] sm:$0x1] %v12
  $region1: #{tpu_custom_call.1} parent=0
    #allocation4 [shape = 'u8[1048576]{0}', space=vmem, size = 0x100000, scoped, tag = 'input window, operand 3, single buffered']
    #allocation5 [shape = 's32[1]{0}', space=sflag, size = 0x4, scoped, tag = 'scoped memory for tpu_custom_call.1']
    %14 = vsyncpa [#allocation5], 0
    // Predicated region
    $region2: #{tpu_custom_call.1} parent=1 // pred_check
      _
    $region3: #{tpu_custom_call.1} parent=1 // pred_check_branch
      %16 = sbr.rel (0) target = $region5
    $region4: #{tpu_custom_call.1} parent=1 // pred_region
      _
    $region5: #{tpu_custom_call.1} parent=1 // pred_fallthru
      _
    // Predicated region
    $region6: #{tpu_custom_call.1} parent=1 // pred_check
      _
    $region7: #{tpu_custom_call.1} parent=1 // pred_check_branch
      %18 = sbr.rel (0) target = $region9
    $region8: #{tpu_custom_call.1} parent=1 // pred_region
      _
    $region9: #{tpu_custom_call.1} parent=1 // pred_fallthru
      _
    // Predicated region
    $region10: #{tpu_custom_call.1} parent=1 // pred_check
      _
    $region11: #{tpu_custom_call.1} parent=1 // pred_check_branch
      %20 = sbr.rel (0) target = $region13
    $region12: #{tpu_custom_call.1} parent=1 // pred_region
      _
    $region13: #{tpu_custom_call.1} parent=1 // pred_fallthru
      _
    // Predicated region
    $region14: #{tpu_custom_call.1} parent=1 // pred_check
      _
    $region15: #{tpu_custom_call.1} parent=1 // pred_check_branch
      %22 = sbr.rel (0) target = $region17
    $region16: #{tpu_custom_call.1} parent=1 // pred_region
      %s24 = ssub.s32 32768, 32768
      %25 = vsyncadd [#allocation5], %s24
      %s26 = sshll.u32 [#allocation4], 4
      %s27 = int_to_ptr.vmem [resolvable:$true] %s26
      %32 = dma.hbm_to_vmem [thread:$0]  %s3, 32768, %s27, [#allocation5], 1024, 1024, 64
    $region17: #{tpu_custom_call.1} parent=1 // pred_fallthru
      _
    // Predicated region
    $region18: #{tpu_custom_call.1} parent=1 // pred_check
      _
    $region19: #{tpu_custom_call.1} parent=1 // pred_check_branch
      %34 = sbr.rel (0) target = $region21
    $region20: #{tpu_custom_call.1} parent=1 // pred_region
      _
    $region21: #{tpu_custom_call.1} parent=1 // pred_fallthru
      _
    // Predicated region
    $region22: #{tpu_custom_call.1} parent=1 // pred_check
      _
    $region23: #{tpu_custom_call.1} parent=1 // pred_check_branch
      %36 = sbr.rel (0) target = $region25
    $region24: #{tpu_custom_call.1} parent=1 // pred_region
      _
    $region25: #{tpu_custom_call.1} parent=1 // pred_fallthru
      _
    // Predicated region
    $region26: #{tpu_custom_call.1} parent=1 // pred_check
      _
    $region27: #{tpu_custom_call.1} parent=1 // pred_check_branch
      %38 = sbr.rel (0) target = $region29
    $region28: #{tpu_custom_call.1} parent=1 // pred_region
      _
    $region29: #{tpu_custom_call.1} parent=1 // pred_fallthru
      _
    // Predicated region
    $region30: #{tpu_custom_call.1} parent=1 // pred_check
      _
    $region31: #{tpu_custom_call.1} parent=1 // pred_check_branch
      %40 = sbr.rel (0) target = $region33
    $region32: #{tpu_custom_call.1} parent=1 // pred_region
      %41 = dma.done [#allocation5], 32768
    $region33: #{tpu_custom_call.1} parent=1 // pred_fallthru
      _
    %v42 = vld [vmem:[%s1] sm:$0x77]
    %v43 = vld [vmem:[%s1 + $0x8] sm:$0x77]
    %v44 = vld [vmem:[%s2] sm:$0xf]
    %v46 = vlaneseq
    %v47 = vshrl.u32 %v46, 7
    %v48 = vsub.s32 0, %v47
    %v49 = vrot.slane %v44, %v48
    %v50 = vlaneseq
    %v51 = vshrl.u32 %v50, 7
    %v52 = vsub.s32 1, %v51
    %v53 = vrot.slane %v44, %v52
    %v54 = vlaneseq
    %v55 = vshrl.u32 %v54, 7
    %v56 = vsub.s32 2, %v55
    %v57 = vrot.slane %v44, %v56
    %v58 = vlaneseq
    %v59 = vshrl.u32 %v58, 7
    %v60 = vsub.s32 3, %v59
    %v61 = vrot.slane %v44, %v60
    %v66 = vld [vmem:[%s0] sm:$0x3]
    %68 = vset.pattern.permute.xlu0 0
    %69 = vperm.xlu0 %68, %v66
    %v70 = vpop.permute.xlu0 %69
    %v74 = vlaneseq
    %v75 = vshrl.u32 %v74, 7
    %v76 = vsub.s32 0, %v75
    %v77 = vrot.slane %v42, %v76
    %v78 = vlaneseq
    %v79 = vshrl.u32 %v78, 7
    %v80 = vsub.s32 4, %v79
    %v81 = vrot.slane %v42, %v80
    %v82 = vlaneseq
    %v83 = vshrl.u32 %v82, 7
    %v84 = vsub.s32 0, %v83
    %v85 = vrot.slane %v43, %v84
    %v86 = vlaneseq
    %v87 = vshrl.u32 %v86, 7
    %v88 = vsub.s32 4, %v87
    %v89 = vrot.slane %v43, %v88
    %v94 = vlaneseq
    %v95 = vshrl.u32 %v94, 7
    %v96 = vsub.s32 0, %v95
    %v97 = vrot.slane %v77, %v96
    %v98 = vlaneseq
    %v99 = vshrl.u32 %v98, 7
    %v100 = vsub.s32 0, %v99
    %v101 = vrot.slane %v81, %v100
    %v102 = vlaneseq
    %v103 = vshrl.u32 %v102, 7
    %v104 = vsub.s32 0, %v103
    %v105 = vrot.slane %v85, %v104
    %v106 = vlaneseq
    %v107 = vshrl.u32 %v106, 7
    %v108 = vsub.s32 0, %v107
    %v109 = vrot.slane %v89, %v108
    %v110 = vmul.f32 %v70, %v97
    %v111 = vmul.f32 %v70, %v101
    %v112 = vmul.f32 %v70, %v105
    %v113 = vmul.f32 %v70, %v109
    %v114 = vadd.f32 %v49, %v110
    %v115 = vadd.f32 %v53, %v111
    %v116 = vadd.f32 %v57, %v112
    %v117 = vadd.f32 %v61, %v113
    %118 = vset.pattern.permute.xlu0 1
    %119 = vperm.xlu0 %118, %v66
    %v120 = vpop.permute.xlu0 %119
    %v122 = vlaneseq
    %v123 = vshrl.u32 %v122, 7
    %v124 = vsub.s32 1, %v123
    %v125 = vrot.slane %v42, %v124
    %v126 = vlaneseq
    %v127 = vshrl.u32 %v126, 7
    %v128 = vsub.s32 5, %v127
    %v129 = vrot.slane %v42, %v128
    %v130 = vlaneseq
    %v131 = vshrl.u32 %v130, 7
    %v132 = vsub.s32 1, %v131
    %v133 = vrot.slane %v43, %v132
    %v134 = vlaneseq
    %v135 = vshrl.u32 %v134, 7
    %v136 = vsub.s32 5, %v135
    %v137 = vrot.slane %v43, %v136
    %v142 = vlaneseq
    %v143 = vshrl.u32 %v142, 7
    %v144 = vsub.s32 1, %v143
    %v145 = vrot.slane %v125, %v144
    %v146 = vlaneseq
    %v147 = vshrl.u32 %v146, 7
    %v148 = vsub.s32 1, %v147
    %v149 = vrot.slane %v129, %v148
    %v150 = vlaneseq
    %v151 = vshrl.u32 %v150, 7
    %v152 = vsub.s32 1, %v151
    %v153 = vrot.slane %v133, %v152
    %v154 = vlaneseq
    %v155 = vshrl.u32 %v154, 7
    %v156 = vsub.s32 1, %v155
    %v157 = vrot.slane %v137, %v156
    %v158 = vmul.f32 %v120, %v145
    %v159 = vmul.f32 %v120, %v149
    %v160 = vmul.f32 %v120, %v153
    %v161 = vmul.f32 %v120, %v157
    %v162 = vadd.f32 %v114, %v158
    %v163 = vadd.f32 %v115, %v159
    %v164 = vadd.f32 %v116, %v160
    %v165 = vadd.f32 %v117, %v161
    %166 = vset.pattern.permute.xlu0 2
    %167 = vperm.xlu0 %166, %v66
    %v168 = vpop.permute.xlu0 %167
    %v170 = vlaneseq
    %v171 = vshrl.u32 %v170, 7
    %v172 = vsub.s32 2, %v171
    %v173 = vrot.slane %v42, %v172
    %v174 = vlaneseq
    %v175 = vshrl.u32 %v174, 7
    %v176 = vsub.s32 6, %v175
    %v177 = vrot.slane %v42, %v176
    %v178 = vlaneseq
    %v179 = vshrl.u32 %v178, 7
    %v180 = vsub.s32 2, %v179
    %v181 = vrot.slane %v43, %v180
    %v182 = vlaneseq
    %v183 = vshrl.u32 %v182, 7
    %v184 = vsub.s32 6, %v183
    %v185 = vrot.slane %v43, %v184
    %v190 = vlaneseq
    %v191 = vshrl.u32 %v190, 7
    %v192 = vsub.s32 2, %v191
    %v193 = vrot.slane %v173, %v192
    %v194 = vlaneseq
    %v195 = vshrl.u32 %v194, 7
    %v196 = vsub.s32 2, %v195
    %v197 = vrot.slane %v177, %v196
    %v198 = vlaneseq
    %v199 = vshrl.u32 %v198, 7
    %v200 = vsub.s32 2, %v199
    %v201 = vrot.slane %v181, %v200
    %v202 = vlaneseq
    %v203 = vshrl.u32 %v202, 7
    %v204 = vsub.s32 2, %v203
    %v205 = vrot.slane %v185, %v204
    %v206 = vmul.f32 %v168, %v193
    %v207 = vmul.f32 %v168, %v197
    %v208 = vmul.f32 %v168, %v201
    %v209 = vmul.f32 %v168, %v205
    %v210 = vadd.f32 %v162, %v206
    %v211 = vadd.f32 %v163, %v207
    %v212 = vadd.f32 %v164, %v208
    %v213 = vadd.f32 %v165, %v209
    %v218 = vcombine.low %v210, %v211
    %v219 = vcombine.low %v212, %v213
    %v221 = vunpack.c.l.s4 1983009808
    %v222 = vunpack.c.0.s8 %v221
    %v223 = vlaneseq
    %v224 = vshrl.u32 %v223, 7
    %v225 = vsub.s32 %v222, %v224
    %v226 = vrot.slane %v218, %v225
    %v228 = vunpack.c.l.s4 1983009808
    %v229 = vunpack.c.0.s8 %v228
    %v230 = vlaneseq
    %v231 = vshrl.u32 %v230, 7
    %v232 = vsub.s32 %v229, %v231
    %v233 = vrot.slane %v219, %v232
    %v234 = vcombine.low %v226, %v233
    %236 = vst [vmem:[#allocation2] sm:$0xff] %v234
    %s237 = scalar_lea.vmem %s0, 2
    %v238 = vld [vmem:[%s237] sm:$0x3]
    %240 = vset.pattern.permute.xlu0 0
    %241 = vperm.xlu0 %240, %v238
    %v242 = vpop.permute.xlu0 %241
    %v244 = vmul.f32 %v242, %v97
    %v245 = vmul.f32 %v242, %v101
    %v246 = vmul.f32 %v242, %v105
    %v247 = vmul.f32 %v242, %v109
    %v248 = vadd.f32 %v49, %v244
    %v249 = vadd.f32 %v53, %v245
    %v250 = vadd.f32 %v57, %v246
    %v251 = vadd.f32 %v61, %v247
    %252 = vset.pattern.permute.xlu0 1
    %253 = vperm.xlu0 %252, %v238
    %v254 = vpop.permute.xlu0 %253
    %v256 = vmul.f32 %v254, %v145
    %v257 = vmul.f32 %v254, %v149
    %v258 = vmul.f32 %v254, %v153
    %v259 = vmul.f32 %v254, %v157
    %v260 = vadd.f32 %v248, %v256
    %v261 = vadd.f32 %v249, %v257
    %v262 = vadd.f32 %v250, %v258
    %v263 = vadd.f32 %v251, %v259
    %264 = vset.pattern.permute.xlu0 2
    %265 = vperm.xlu0 %264, %v238
    %v266 = vpop.permute.xlu0 %265
    %v268 = vmul.f32 %v266, %v193
    %v269 = vmul.f32 %v266, %v197
    %v270 = vmul.f32 %v266, %v201
    %v271 = vmul.f32 %v266, %v205
    %v272 = vadd.f32 %v260, %v268
    %v273 = vadd.f32 %v261, %v269
    %v274 = vadd.f32 %v262, %v270
    %v275 = vadd.f32 %v263, %v271
    %v280 = vcombine.low %v272, %v273
    %v281 = vcombine.low %v274, %v275
    %v283 = vunpack.c.l.s4 1983009808
    %v284 = vunpack.c.0.s8 %v283
    %v285 = vlaneseq
    %v286 = vshrl.u32 %v285, 7
    %v287 = vsub.s32 %v284, %v286
    %v288 = vrot.slane %v280, %v287
    %v290 = vunpack.c.l.s4 1983009808
    %v291 = vunpack.c.0.s8 %v290
    %v292 = vlaneseq
    %v293 = vshrl.u32 %v292, 7
    %v294 = vsub.s32 %v291, %v293
    %v295 = vrot.slane %v281, %v294
    %v296 = vcombine.low %v288, %v295
    %s298 = scalar_lea.vmem [#allocation2], 8
    %299 = vst [vmem:[%s298] sm:$0xff] %v296
    %s300 = scalar_lea.vmem %s0, 4
    %v301 = vld [vmem:[%s300] sm:$0x3]
    %303 = vset.pattern.permute.xlu0 0
    %304 = vperm.xlu0 %303, %v301
    %v305 = vpop.permute.xlu0 %304
    %v307 = vmul.f32 %v305, %v97
    %v308 = vmul.f32 %v305, %v101
    %v309 = vmul.f32 %v305, %v105
    %v310 = vmul.f32 %v305, %v109
    %v311 = vadd.f32 %v49, %v307
    %v312 = vadd.f32 %v53, %v308
    %v313 = vadd.f32 %v57, %v309
    %v314 = vadd.f32 %v61, %v310
    %315 = vset.pattern.permute.xlu0 1
    %316 = vperm.xlu0 %315, %v301
    %v317 = vpop.permute.xlu0 %316
    %v319 = vmul.f32 %v317, %v145
    %v320 = vmul.f32 %v317, %v149
    %v321 = vmul.f32 %v317, %v153
    %v322 = vmul.f32 %v317, %v157
    %v323 = vadd.f32 %v311, %v319
    %v324 = vadd.f32 %v312, %v320
    %v325 = vadd.f32 %v313, %v321
    %v326 = vadd.f32 %v314, %v322
    %327 = vset.pattern.permute.xlu0 2
    %328 = vperm.xlu0 %327, %v301
    %v329 = vpop.permute.xlu0 %328
    %v331 = vmul.f32 %v329, %v193
    %v332 = vmul.f32 %v329, %v197
    %v333 = vmul.f32 %v329, %v201
    %v334 = vmul.f32 %v329, %v205
    %v335 = vadd.f32 %v323, %v331
    %v336 = vadd.f32 %v324, %v332
    %v337 = vadd.f32 %v325, %v333
    %v338 = vadd.f32 %v326, %v334
    %v343 = vcombine.low %v335, %v336
    %v344 = vcombine.low %v337, %v338
    %v346 = vunpack.c.l.s4 1983009808
    %v347 = vunpack.c.0.s8 %v346
    %v348 = vlaneseq
    %v349 = vshrl.u32 %v348, 7
    %v350 = vsub.s32 %v347, %v349
    %v351 = vrot.slane %v343, %v350
    %v353 = vunpack.c.l.s4 1983009808
    %v354 = vunpack.c.0.s8 %v353
    %v355 = vlaneseq
    %v356 = vshrl.u32 %v355, 7
    %v357 = vsub.s32 %v354, %v356
    %v358 = vrot.slane %v344, %v357
    %v359 = vcombine.low %v351, %v358
    %s361 = scalar_lea.vmem [#allocation2], 16
    %362 = vst [vmem:[%s361] sm:$0xff] %v359
    %s363 = scalar_lea.vmem %s0, 6
    %v364 = vld [vmem:[%s363] sm:$0x3]
    %366 = vset.pattern.permute.xlu0 0
    %367 = vperm.xlu0 %366, %v364
    %v368 = vpop.permute.xlu0 %367
    %v370 = vmul.f32 %v368, %v97
    %v371 = vmul.f32 %v368, %v101
    %v372 = vmul.f32 %v368, %v105
    %v373 = vmul.f32 %v368, %v109
    %v374 = vadd.f32 %v49, %v370
    %v375 = vadd.f32 %v53, %v371
    %v376 = vadd.f32 %v57, %v372
    %v377 = vadd.f32 %v61, %v373
    %378 = vset.pattern.permute.xlu0 1
    %379 = vperm.xlu0 %378, %v364
    %v380 = vpop.permute.xlu0 %379
    %v382 = vmul.f32 %v380, %v145
    %v383 = vmul.f32 %v380, %v149
    %v384 = vmul.f32 %v380, %v153
    %v385 = vmul.f32 %v380, %v157
    %v386 = vadd.f32 %v374, %v382
    %v387 = vadd.f32 %v375, %v383
    %v388 = vadd.f32 %v376, %v384
    %v389 = vadd.f32 %v377, %v385
    %390 = vset.pattern.permute.xlu0 2
    %391 = vperm.xlu0 %390, %v364
    %v392 = vpop.permute.xlu0 %391
    %v394 = vmul.f32 %v392, %v193
    %v395 = vmul.f32 %v392, %v197
    %v396 = vmul.f32 %v392, %v201
    %v397 = vmul.f32 %v392, %v205
    %v398 = vadd.f32 %v386, %v394
    %v399 = vadd.f32 %v387, %v395
    %v400 = vadd.f32 %v388, %v396
    %v401 = vadd.f32 %v389, %v397
    %v406 = vcombine.low %v398, %v399
    %v407 = vcombine.low %v400, %v401
    %v409 = vunpack.c.l.s4 1983009808
    %v410 = vunpack.c.0.s8 %v409
    %v411 = vlaneseq
    %v412 = vshrl.u32 %v411, 7
    %v413 = vsub.s32 %v410, %v412
    %v414 = vrot.slane %v406, %v413
    %v416 = vunpack.c.l.s4 1983009808
    %v417 = vunpack.c.0.s8 %v416
    %v418 = vlaneseq
    %v419 = vshrl.u32 %v418, 7
    %v420 = vsub.s32 %v417, %v419
    %v421 = vrot.slane %v407, %v420
    %v422 = vcombine.low %v414, %v421
    %s424 = scalar_lea.vmem [#allocation2], 24
    %425 = vst [vmem:[%s424] sm:$0xff] %v422
    %s426 = scalar_lea.vmem %s0, 8
    %v427 = vld [vmem:[%s426] sm:$0x3]
    %429 = vset.pattern.permute.xlu0 0
    %430 = vperm.xlu0 %429, %v427
    %v431 = vpop.permute.xlu0 %430
    %v433 = vmul.f32 %v431, %v97
    %v434 = vmul.f32 %v431, %v101
    %v435 = vmul.f32 %v431, %v105
    %v436 = vmul.f32 %v431, %v109
    %v437 = vadd.f32 %v49, %v433
    %v438 = vadd.f32 %v53, %v434
    %v439 = vadd.f32 %v57, %v435
    %v440 = vadd.f32 %v61, %v436
    %441 = vset.pattern.permute.xlu0 1
    %442 = vperm.xlu0 %441, %v427
    %v443 = vpop.permute.xlu0 %442
    %v445 = vmul.f32 %v443, %v145
    %v446 = vmul.f32 %v443, %v149
    %v447 = vmul.f32 %v443, %v153
    %v448 = vmul.f32 %v443, %v157
    %v449 = vadd.f32 %v437, %v445
    %v450 = vadd.f32 %v438, %v446
    %v451 = vadd.f32 %v439, %v447
    %v452 = vadd.f32 %v440, %v448
    %453 = vset.pattern.permute.xlu0 2
    %454 = vperm.xlu0 %453, %v427
    %v455 = vpop.permute.xlu0 %454
    %v457 = vmul.f32 %v455, %v193
    %v458 = vmul.f32 %v455, %v197
    %v459 = vmul.f32 %v455, %v201
    %v460 = vmul.f32 %v455, %v205
    %v461 = vadd.f32 %v449, %v457
    %v462 = vadd.f32 %v450, %v458
    %v463 = vadd.f32 %v451, %v459
    %v464 = vadd.f32 %v452, %v460
    %v469 = vcombine.low %v461, %v462
    %v470 = vcombine.low %v463, %v464
    %v472 = vunpack.c.l.s4 1983009808
    %v473 = vunpack.c.0.s8 %v472
    %v474 = vlaneseq
    %v475 = vshrl.u32 %v474, 7
    %v476 = vsub.s32 %v473, %v475
    %v477 = vrot.slane %v469, %v476
    %v479 = vunpack.c.l.s4 1983009808
    %v480 = vunpack.c.0.s8 %v479
    %v481 = vlaneseq
    %v482 = vshrl.u32 %v481, 7
    %v483 = vsub.s32 %v480, %v482
    %v484 = vrot.slane %v470, %v483
    %v485 = vcombine.low %v477, %v484
    %s487 = scalar_lea.vmem [#allocation2], 32
    %488 = vst [vmem:[%s487] sm:$0xff] %v485
    %s489 = scalar_lea.vmem %s0, 10
    %v490 = vld [vmem:[%s489] sm:$0x3]
    %492 = vset.pattern.permute.xlu0 0
    %493 = vperm.xlu0 %492, %v490
    %v494 = vpop.permute.xlu0 %493
    %v496 = vmul.f32 %v494, %v97
    %v497 = vmul.f32 %v494, %v101
    %v498 = vmul.f32 %v494, %v105
    %v499 = vmul.f32 %v494, %v109
    %v500 = vadd.f32 %v49, %v496
    %v501 = vadd.f32 %v53, %v497
    %v502 = vadd.f32 %v57, %v498
    %v503 = vadd.f32 %v61, %v499
    %504 = vset.pattern.permute.xlu0 1
    %505 = vperm.xlu0 %504, %v490
    %v506 = vpop.permute.xlu0 %505
    %v508 = vmul.f32 %v506, %v145
    %v509 = vmul.f32 %v506, %v149
    %v510 = vmul.f32 %v506, %v153
    %v511 = vmul.f32 %v506, %v157
    %v512 = vadd.f32 %v500, %v508
    %v513 = vadd.f32 %v501, %v509
    %v514 = vadd.f32 %v502, %v510
    %v515 = vadd.f32 %v503, %v511
    %516 = vset.pattern.permute.xlu0 2
    %517 = vperm.xlu0 %516, %v490
    %v518 = vpop.permute.xlu0 %517
    %v520 = vmul.f32 %v518, %v193
    %v521 = vmul.f32 %v518, %v197
    %v522 = vmul.f32 %v518, %v201
    %v523 = vmul.f32 %v518, %v205
    %v524 = vadd.f32 %v512, %v520
    %v525 = vadd.f32 %v513, %v521
    %v526 = vadd.f32 %v514, %v522
    %v527 = vadd.f32 %v515, %v523
    %v532 = vcombine.low %v524, %v525
    %v533 = vcombine.low %v526, %v527
    %v535 = vunpack.c.l.s4 1983009808
    %v536 = vunpack.c.0.s8 %v535
    %v537 = vlaneseq
    %v538 = vshrl.u32 %v537, 7
    %v539 = vsub.s32 %v536, %v538
    %v540 = vrot.slane %v532, %v539
    %v542 = vunpack.c.l.s4 1983009808
    %v543 = vunpack.c.0.s8 %v542
    %v544 = vlaneseq
    %v545 = vshrl.u32 %v544, 7
    %v546 = vsub.s32 %v543, %v545
    %v547 = vrot.slane %v533, %v546
    %v548 = vcombine.low %v540, %v547
    %s550 = scalar_lea.vmem [#allocation2], 40
    %551 = vst [vmem:[%s550] sm:$0xff] %v548
    %s552 = scalar_lea.vmem %s0, 12
    %v553 = vld [vmem:[%s552] sm:$0x3]
    %555 = vset.pattern.permute.xlu0 0
    %556 = vperm.xlu0 %555, %v553
    %v557 = vpop.permute.xlu0 %556
    %v559 = vmul.f32 %v557, %v97
    %v560 = vmul.f32 %v557, %v101
    %v561 = vmul.f32 %v557, %v105
    %v562 = vmul.f32 %v557, %v109
    %v563 = vadd.f32 %v49, %v559
    %v564 = vadd.f32 %v53, %v560
    %v565 = vadd.f32 %v57, %v561
    %v566 = vadd.f32 %v61, %v562
    %567 = vset.pattern.permute.xlu0 1
    %568 = vperm.xlu0 %567, %v553
    %v569 = vpop.permute.xlu0 %568
    %v571 = vmul.f32 %v569, %v145
    %v572 = vmul.f32 %v569, %v149
    %v573 = vmul.f32 %v569, %v153
    %v574 = vmul.f32 %v569, %v157
    %v575 = vadd.f32 %v563, %v571
    %v576 = vadd.f32 %v564, %v572
    %v577 = vadd.f32 %v565, %v573
    %v578 = vadd.f32 %v566, %v574
    %579 = vset.pattern.permute.xlu0 2
    %580 = vperm.xlu0 %579, %v553
    %v581 = vpop.permute.xlu0 %580
    %v583 = vmul.f32 %v581, %v193
    %v584 = vmul.f32 %v581, %v197
    %v585 = vmul.f32 %v581, %v201
    %v586 = vmul.f32 %v581, %v205
    %v587 = vadd.f32 %v575, %v583
    %v588 = vadd.f32 %v576, %v584
    %v589 = vadd.f32 %v577, %v585
    %v590 = vadd.f32 %v578, %v586
    %v595 = vcombine.low %v587, %v588
    %v596 = vcombine.low %v589, %v590
    %v598 = vunpack.c.l.s4 1983009808
    %v599 = vunpack.c.0.s8 %v598
    %v600 = vlaneseq
    %v601 = vshrl.u32 %v600, 7
    %v602 = vsub.s32 %v599, %v601
    %v603 = vrot.slane %v595, %v602
    %v605 = vunpack.c.l.s4 1983009808
    %v606 = vunpack.c.0.s8 %v605
    %v607 = vlaneseq
    %v608 = vshrl.u32 %v607, 7
    %v609 = vsub.s32 %v606, %v608
    %v610 = vrot.slane %v596, %v609
    %v611 = vcombine.low %v603, %v610
    %s613 = scalar_lea.vmem [#allocation2], 48
    %614 = vst [vmem:[%s613] sm:$0xff] %v611
    %s615 = scalar_lea.vmem %s0, 14
    %v616 = vld [vmem:[%s615] sm:$0x3]
    %618 = vset.pattern.permute.xlu0 0
    %619 = vperm.xlu0 %618, %v616
    %v620 = vpop.permute.xlu0 %619
    %v622 = vmul.f32 %v620, %v97
    %v623 = vmul.f32 %v620, %v101
    %v624 = vmul.f32 %v620, %v105
    %v625 = vmul.f32 %v620, %v109
    %v626 = vadd.f32 %v49, %v622
    %v627 = vadd.f32 %v53, %v623
    %v628 = vadd.f32 %v57, %v624
    %v629 = vadd.f32 %v61, %v625
    %630 = vset.pattern.permute.xlu0 1
    %631 = vperm.xlu0 %630, %v616
    %v632 = vpop.permute.xlu0 %631
    %v634 = vmul.f32 %v632, %v145
    %v635 = vmul.f32 %v632, %v149
    %v636 = vmul.f32 %v632, %v153
    %v637 = vmul.f32 %v632, %v157
    %v638 = vadd.f32 %v626, %v634
    %v639 = vadd.f32 %v627, %v635
    %v640 = vadd.f32 %v628, %v636
    %v641 = vadd.f32 %v629, %v637
    %642 = vset.pattern.permute.xlu0 2
    %643 = vperm.xlu0 %642, %v616
    %v644 = vpop.permute.xlu0 %643
    %v646 = vmul.f32 %v644, %v193
    %v647 = vmul.f32 %v644, %v197
    %v648 = vmul.f32 %v644, %v201
    %v649 = vmul.f32 %v644, %v205
    %v650 = vadd.f32 %v638, %v646
    %v651 = vadd.f32 %v639, %v647
    %v652 = vadd.f32 %v640, %v648
    %v653 = vadd.f32 %v641, %v649
    %v658 = vcombine.low %v650, %v651
    %v659 = vcombine.low %v652, %v653
    %v661 = vunpack.c.l.s4 1983009808
    %v662 = vunpack.c.0.s8 %v661
    %v663 = vlaneseq
    %v664 = vshrl.u32 %v663, 7
    %v665 = vsub.s32 %v662, %v664
    %v666 = vrot.slane %v658, %v665
    %v668 = vunpack.c.l.s4 1983009808
    %v669 = vunpack.c.0.s8 %v668
    %v670 = vlaneseq
    %v671 = vshrl.u32 %v670, 7
    %v672 = vsub.s32 %v669, %v671
    %v673 = vrot.slane %v659, %v672
    %v674 = vcombine.low %v666, %v673
    %s676 = scalar_lea.vmem [#allocation2], 56
    %677 = vst [vmem:[%s676] sm:$0xff] %v674
    %v678 = vld [vmem:[%s4] sm:$0xf]
    %v680 = vlaneseq
    %v681 = vshrl.u32 %v680, 7
    %v682 = vsub.s32 0, %v681
    %v683 = vrot.slane %v678, %v682
    %v684 = vlaneseq
    %v685 = vshrl.u32 %v684, 7
    %v686 = vsub.s32 1, %v685
    %v687 = vrot.slane %v678, %v686
    %v688 = vlaneseq
    %v689 = vshrl.u32 %v688, 7
    %v690 = vsub.s32 2, %v689
    %v691 = vrot.slane %v678, %v690
    %v692 = vlaneseq
    %v693 = vshrl.u32 %v692, 7
    %v694 = vsub.s32 3, %v693
    %v695 = vrot.slane %v678, %v694
    %v700 = vld [vmem:[#allocation2] sm:$0xff]
    %v701 = vmul.f32 %v700, 0.5
    %v702 = vtanh.pop %v701
    %v703 = vmul.f32 %v702, 0.5
    %v704 = vadd.f32 %v703, 0.5
    %v706 = vrot.slane %v700, 4
    %v708 = vtanh.pop %v706
    %v709 = vrot.slane %v700, 6
    %v711 = vmul.f32 %v709, 0.5
    %v712 = vtanh.pop %v711
    %v713 = vmul.f32 %v712, 0.5
    %v714 = vadd.f32 %v713, 0.5
    %v715 = vmul.f32 %v704, %v708
    %v716 = vtanh.pop %v715
    %v717 = vmul.f32 %v714, %v716
    %v718 = vld [vmem:[#allocation4] sm:$0xff]
    %v719 = vld [vmem:[#allocation4 + $0x8] sm:$0xff]
    %v720 = vld [vmem:[#allocation4 + $0x10] sm:$0xff]
    %v721 = vld [vmem:[#allocation4 + $0x18] sm:$0xff]
    %v722 = vld [vmem:[#allocation4 + $0x20] sm:$0xff]
    %v723 = vld [vmem:[#allocation4 + $0x28] sm:$0xff]
    %v724 = vld [vmem:[#allocation4 + $0x30] sm:$0xff]
    %v725 = vld [vmem:[#allocation4 + $0x38] sm:$0xff]
    %v726 = vld [vmem:[#allocation4 + $0x40] sm:$0xff]
    %v727 = vld [vmem:[#allocation4 + $0x48] sm:$0xff]
    %v728 = vld [vmem:[#allocation4 + $0x50] sm:$0xff]
    %v729 = vld [vmem:[#allocation4 + $0x58] sm:$0xff]
    %v730 = vld [vmem:[#allocation4 + $0x60] sm:$0xff]
    %v731 = vld [vmem:[#allocation4 + $0x68] sm:$0xff]
    %v732 = vld [vmem:[#allocation4 + $0x70] sm:$0xff]
    %v733 = vld [vmem:[#allocation4 + $0x78] sm:$0xff]
    %v734 = vld [vmem:[#allocation4 + $0x80] sm:$0xff]
    %v735 = vld [vmem:[#allocation4 + $0x88] sm:$0xff]
    %v736 = vld [vmem:[#allocation4 + $0x90] sm:$0xff]
    %v737 = vld [vmem:[#allocation4 + $0x98] sm:$0xff]
    %v738 = vld [vmem:[#allocation4 + $0xa0] sm:$0xff]
    %v739 = vld [vmem:[#allocation4 + $0xa8] sm:$0xff]
    %v740 = vld [vmem:[#allocation4 + $0xb0] sm:$0xff]
    %v741 = vld [vmem:[#allocation4 + $0xb8] sm:$0xff]
    %v742 = vld [vmem:[#allocation4 + $0xc0] sm:$0xff]
    %v743 = vld [vmem:[#allocation4 + $0xc8] sm:$0xff]
    %v744 = vld [vmem:[#allocation4 + $0xd0] sm:$0xff]
    %v745 = vld [vmem:[#allocation4 + $0xd8] sm:$0xff]
    %v746 = vld [vmem:[#allocation4 + $0xe0] sm:$0xff]
    %v747 = vld [vmem:[#allocation4 + $0xe8] sm:$0xff]
    %v748 = vld [vmem:[#allocation4 + $0xf0] sm:$0xff]
    %v749 = vld [vmem:[#allocation4 + $0xf8] sm:$0xff]
    %v750 = vld [vmem:[#allocation4 + $0x100] sm:$0xff]
    %v751 = vld [vmem:[#allocation4 + $0x108] sm:$0xff]
    %v752 = vld [vmem:[#allocation4 + $0x110] sm:$0xff]
    %v753 = vld [vmem:[#allocation4 + $0x118] sm:$0xff]
    %v754 = vld [vmem:[#allocation4 + $0x120] sm:$0xff]
    %v755 = vld [vmem:[#allocation4 + $0x128] sm:$0xff]
    %v756 = vld [vmem:[#allocation4 + $0x130] sm:$0xff]
    %v757 = vld [vmem:[#allocation4 + $0x138] sm:$0xff]
    %v758 = vld [vmem:[#allocation4 + $0x140] sm:$0xff]
    %v759 = vld [vmem:[#allocation4 + $0x148] sm:$0xff]
    %v760 = vld [vmem:[#allocation4 + $0x150] sm:$0xff]
    %v761 = vld [vmem:[#allocation4 + $0x158] sm:$0xff]
    %v762 = vld [vmem:[#allocation4 + $0x160] sm:$0xff]
    %v763 = vld [vmem:[#allocation4 + $0x168] sm:$0xff]
    %v764 = vld [vmem:[#allocation4 + $0x170] sm:$0xff]
    %v765 = vld [vmem:[#allocation4 + $0x178] sm:$0xff]
    %v766 = vld [vmem:[#allocation4 + $0x180] sm:$0xff]
    %v767 = vld [vmem:[#allocation4 + $0x188] sm:$0xff]
    %v768 = vld [vmem:[#allocation4 + $0x190] sm:$0xff]
    %v769 = vld [vmem:[#allocation4 + $0x198] sm:$0xff]
    %v770 = vld [vmem:[#allocation4 + $0x1a0] sm:$0xff]
    %v771 = vld [vmem:[#allocation4 + $0x1a8] sm:$0xff]
    %v772 = vld [vmem:[#allocation4 + $0x1b0] sm:$0xff]
    %v773 = vld [vmem:[#allocation4 + $0x1b8] sm:$0xff]
    %v774 = vld [vmem:[#allocation4 + $0x1c0] sm:$0xff]
    %v775 = vld [vmem:[#allocation4 + $0x1c8] sm:$0xff]
    %v776 = vld [vmem:[#allocation4 + $0x1d0] sm:$0xff]
    %v777 = vld [vmem:[#allocation4 + $0x1d8] sm:$0xff]
    %v778 = vld [vmem:[#allocation4 + $0x1e0] sm:$0xff]
    %v779 = vld [vmem:[#allocation4 + $0x1e8] sm:$0xff]
    %v780 = vld [vmem:[#allocation4 + $0x1f0] sm:$0xff]
    %v781 = vld [vmem:[#allocation4 + $0x1f8] sm:$0xff]
    %v782 = vld [vmem:[#allocation4 + $0x200] sm:$0xff]
    %v783 = vld [vmem:[#allocation4 + $0x208] sm:$0xff]
    %v784 = vld [vmem:[#allocation4 + $0x210] sm:$0xff]
    %v785 = vld [vmem:[#allocation4 + $0x218] sm:$0xff]
    %v786 = vld [vmem:[#allocation4 + $0x220] sm:$0xff]
    %v787 = vld [vmem:[#allocation4 + $0x228] sm:$0xff]
    %v788 = vld [vmem:[#allocation4 + $0x230] sm:$0xff]
    %v789 = vld [vmem:[#allocation4 + $0x238] sm:$0xff]
    %v790 = vld [vmem:[#allocation4 + $0x240] sm:$0xff]
    %v791 = vld [vmem:[#allocation4 + $0x248] sm:$0xff]
    %v792 = vld [vmem:[#allocation4 + $0x250] sm:$0xff]
    %v793 = vld [vmem:[#allocation4 + $0x258] sm:$0xff]
    %v794 = vld [vmem:[#allocation4 + $0x260] sm:$0xff]
    %v795 = vld [vmem:[#allocation4 + $0x268] sm:$0xff]
    %v796 = vld [vmem:[#allocation4 + $0x270] sm:$0xff]
    %v797 = vld [vmem:[#allocation4 + $0x278] sm:$0xff]
    %v798 = vld [vmem:[#allocation4 + $0x280] sm:$0xff]
    %v799 = vld [vmem:[#allocation4 + $0x288] sm:$0xff]
    %v800 = vld [vmem:[#allocation4 + $0x290] sm:$0xff]
    %v801 = vld [vmem:[#allocation4 + $0x298] sm:$0xff]
    %v802 = vld [vmem:[#allocation4 + $0x2a0] sm:$0xff]
    %v803 = vld [vmem:[#allocation4 + $0x2a8] sm:$0xff]
    %v804 = vld [vmem:[#allocation4 + $0x2b0] sm:$0xff]
    %v805 = vld [vmem:[#allocation4 + $0x2b8] sm:$0xff]
    %v806 = vld [vmem:[#allocation4 + $0x2c0] sm:$0xff]
    %v807 = vld [vmem:[#allocation4 + $0x2c8] sm:$0xff]
    %v808 = vld [vmem:[#allocation4 + $0x2d0] sm:$0xff]
    %v809 = vld [vmem:[#allocation4 + $0x2d8] sm:$0xff]
    %v810 = vld [vmem:[#allocation4 + $0x2e0] sm:$0xff]
    %v811 = vld [vmem:[#allocation4 + $0x2e8] sm:$0xff]
    %v812 = vld [vmem:[#allocation4 + $0x2f0] sm:$0xff]
    %v813 = vld [vmem:[#allocation4 + $0x2f8] sm:$0xff]
    %v814 = vld [vmem:[#allocation4 + $0x300] sm:$0xff]
    %v815 = vld [vmem:[#allocation4 + $0x308] sm:$0xff]
    %v816 = vld [vmem:[#allocation4 + $0x310] sm:$0xff]
    %v817 = vld [vmem:[#allocation4 + $0x318] sm:$0xff]
    %v818 = vld [vmem:[#allocation4 + $0x320] sm:$0xff]
    %v819 = vld [vmem:[#allocation4 + $0x328] sm:$0xff]
    %v820 = vld [vmem:[#allocation4 + $0x330] sm:$0xff]
    %v821 = vld [vmem:[#allocation4 + $0x338] sm:$0xff]
    %v822 = vld [vmem:[#allocation4 + $0x340] sm:$0xff]
    %v823 = vld [vmem:[#allocation4 + $0x348] sm:$0xff]
    %v824 = vld [vmem:[#allocation4 + $0x350] sm:$0xff]
    %v825 = vld [vmem:[#allocation4 + $0x358] sm:$0xff]
    %v826 = vld [vmem:[#allocation4 + $0x360] sm:$0xff]
    %v827 = vld [vmem:[#allocation4 + $0x368] sm:$0xff]
    %v828 = vld [vmem:[#allocation4 + $0x370] sm:$0xff]
    %v829 = vld [vmem:[#allocation4 + $0x378] sm:$0xff]
    %v830 = vld [vmem:[#allocation4 + $0x380] sm:$0xff]
    %v831 = vld [vmem:[#allocation4 + $0x388] sm:$0xff]
    %v832 = vld [vmem:[#allocation4 + $0x390] sm:$0xff]
    %v833 = vld [vmem:[#allocation4 + $0x398] sm:$0xff]
    %v834 = vld [vmem:[#allocation4 + $0x3a0] sm:$0xff]
    %v835 = vld [vmem:[#allocation4 + $0x3a8] sm:$0xff]
    %v836 = vld [vmem:[#allocation4 + $0x3b0] sm:$0xff]
    %v837 = vld [vmem:[#allocation4 + $0x3b8] sm:$0xff]
    %v838 = vld [vmem:[#allocation4 + $0x3c0] sm:$0xff]
    %v839 = vld [vmem:[#allocation4 + $0x3c8] sm:$0xff]
    %v840 = vld [vmem:[#allocation4 + $0x3d0] sm:$0xff]
    %v841 = vld [vmem:[#allocation4 + $0x3d8] sm:$0xff]
    %v842 = vld [vmem:[#allocation4 + $0x3e0] sm:$0xff]
    %v843 = vld [vmem:[#allocation4 + $0x3e8] sm:$0xff]
    %v844 = vld [vmem:[#allocation4 + $0x3f0] sm:$0xff]
    %v845 = vld [vmem:[#allocation4 + $0x3f8] sm:$0xff]
    %v846 = vld [vmem:[#allocation4 + $0x400] sm:$0xff]
    %v847 = vld [vmem:[#allocation4 + $0x408] sm:$0xff]
    %v848 = vld [vmem:[#allocation4 + $0x410] sm:$0xff]
    %v849 = vld [vmem:[#allocation4 + $0x418] sm:$0xff]
    %v850 = vld [vmem:[#allocation4 + $0x420] sm:$0xff]
    %v851 = vld [vmem:[#allocation4 + $0x428] sm:$0xff]
    %v852 = vld [vmem:[#allocation4 + $0x430] sm:$0xff]
    %v853 = vld [vmem:[#allocation4 + $0x438] sm:$0xff]
    %v854 = vld [vmem:[#allocation4 + $0x440] sm:$0xff]
    %v855 = vld [vmem:[#allocation4 + $0x448] sm:$0xff]
    %v856 = vld [vmem:[#allocation4 + $0x450] sm:$0xff]
    %v857 = vld [vmem:[#allocation4 + $0x458] sm:$0xff]
    %v858 = vld [vmem:[#allocation4 + $0x460] sm:$0xff]
    %v859 = vld [vmem:[#allocation4 + $0x468] sm:$0xff]
    %v860 = vld [vmem:[#allocation4 + $0x470] sm:$0xff]
    %v861 = vld [vmem:[#allocation4 + $0x478] sm:$0xff]
    %v862 = vld [vmem:[#allocation4 + $0x480] sm:$0xff]
    %v863 = vld [vmem:[#allocation4 + $0x488] sm:$0xff]
    %v864 = vld [vmem:[#allocation4 + $0x490] sm:$0xff]
    %v865 = vld [vmem:[#allocation4 + $0x498] sm:$0xff]
    %v866 = vld [vmem:[#allocation4 + $0x4a0] sm:$0xff]
    %v867 = vld [vmem:[#allocation4 + $0x4a8] sm:$0xff]
    %v868 = vld [vmem:[#allocation4 + $0x4b0] sm:$0xff]
    %v869 = vld [vmem:[#allocation4 + $0x4b8] sm:$0xff]
    %v870 = vld [vmem:[#allocation4 + $0x4c0] sm:$0xff]
    %v871 = vld [vmem:[#allocation4 + $0x4c8] sm:$0xff]
    %v872 = vld [vmem:[#allocation4 + $0x4d0] sm:$0xff]
    %v873 = vld [vmem:[#allocation4 + $0x4d8] sm:$0xff]
    %v874 = vld [vmem:[#allocation4 + $0x4e0] sm:$0xff]
    %v875 = vld [vmem:[#allocation4 + $0x4e8] sm:$0xff]
    %v876 = vld [vmem:[#allocation4 + $0x4f0] sm:$0xff]
    %v877 = vld [vmem:[#allocation4 + $0x4f8] sm:$0xff]
    %v878 = vld [vmem:[#allocation4 + $0x500] sm:$0xff]
    %v879 = vld [vmem:[#allocation4 + $0x508] sm:$0xff]
    %v880 = vld [vmem:[#allocation4 + $0x510] sm:$0xff]
    %v881 = vld [vmem:[#allocation4 + $0x518] sm:$0xff]
    %v882 = vld [vmem:[#allocation4 + $0x520] sm:$0xff]
    %v883 = vld [vmem:[#allocation4 + $0x528] sm:$0xff]
    %v884 = vld [vmem:[#allocation4 + $0x530] sm:$0xff]
    %v885 = vld [vmem:[#allocation4 + $0x538] sm:$0xff]
    %v886 = vld [vmem:[#allocation4 + $0x540] sm:$0xff]
    %v887 = vld [vmem:[#allocation4 + $0x548] sm:$0xff]
    %v888 = vld [vmem:[#allocation4 + $0x550] sm:$0xff]
    %v889 = vld [vmem:[#allocation4 + $0x558] sm:$0xff]
    %v890 = vld [vmem:[#allocation4 + $0x560] sm:$0xff]
    %v891 = vld [vmem:[#allocation4 + $0x568] sm:$0xff]
    %v892 = vld [vmem:[#allocation4 + $0x570] sm:$0xff]
    %v893 = vld [vmem:[#allocation4 + $0x578] sm:$0xff]
    %v894 = vld [vmem:[#allocation4 + $0x580] sm:$0xff]
    %v895 = vld [vmem:[#allocation4 + $0x588] sm:$0xff]
    %v896 = vld [vmem:[#allocation4 + $0x590] sm:$0xff]
    %v897 = vld [vmem:[#allocation4 + $0x598] sm:$0xff]
    %v898 = vld [vmem:[#allocation4 + $0x5a0] sm:$0xff]
    %v899 = vld [vmem:[#allocation4 + $0x5a8] sm:$0xff]
    %v900 = vld [vmem:[#allocation4 + $0x5b0] sm:$0xff]
    %v901 = vld [vmem:[#allocation4 + $0x5b8] sm:$0xff]
    %v902 = vld [vmem:[#allocation4 + $0x5c0] sm:$0xff]
    %v903 = vld [vmem:[#allocation4 + $0x5c8] sm:$0xff]
    %v904 = vld [vmem:[#allocation4 + $0x5d0] sm:$0xff]
    %v905 = vld [vmem:[#allocation4 + $0x5d8] sm:$0xff]
    %v906 = vld [vmem:[#allocation4 + $0x5e0] sm:$0xff]
    %v907 = vld [vmem:[#allocation4 + $0x5e8] sm:$0xff]
    %v908 = vld [vmem:[#allocation4 + $0x5f0] sm:$0xff]
    %v909 = vld [vmem:[#allocation4 + $0x5f8] sm:$0xff]
    %v910 = vld [vmem:[#allocation4 + $0x600] sm:$0xff]
    %v911 = vld [vmem:[#allocation4 + $0x608] sm:$0xff]
    %v912 = vld [vmem:[#allocation4 + $0x610] sm:$0xff]
    %v913 = vld [vmem:[#allocation4 + $0x618] sm:$0xff]
    %v914 = vld [vmem:[#allocation4 + $0x620] sm:$0xff]
    %v915 = vld [vmem:[#allocation4 + $0x628] sm:$0xff]
    %v916 = vld [vmem:[#allocation4 + $0x630] sm:$0xff]
    %v917 = vld [vmem:[#allocation4 + $0x638] sm:$0xff]
    %v918 = vld [vmem:[#allocation4 + $0x640] sm:$0xff]
    %v919 = vld [vmem:[#allocation4 + $0x648] sm:$0xff]
    %v920 = vld [vmem:[#allocation4 + $0x650] sm:$0xff]
    %v921 = vld [vmem:[#allocation4 + $0x658] sm:$0xff]
    %v922 = vld [vmem:[#allocation4 + $0x660] sm:$0xff]
    %v923 = vld [vmem:[#allocation4 + $0x668] sm:$0xff]
    %v924 = vld [vmem:[#allocation4 + $0x670] sm:$0xff]
    %v925 = vld [vmem:[#allocation4 + $0x678] sm:$0xff]
    %v926 = vld [vmem:[#allocation4 + $0x680] sm:$0xff]
    %v927 = vld [vmem:[#allocation4 + $0x688] sm:$0xff]
    %v928 = vld [vmem:[#allocation4 + $0x690] sm:$0xff]
    %v929 = vld [vmem:[#allocation4 + $0x698] sm:$0xff]
    %v930 = vld [vmem:[#allocation4 + $0x6a0] sm:$0xff]
    %v931 = vld [vmem:[#allocation4 + $0x6a8] sm:$0xff]
    %v932 = vld [vmem:[#allocation4 + $0x6b0] sm:$0xff]
    %v933 = vld [vmem:[#allocation4 + $0x6b8] sm:$0xff]
    %v934 = vld [vmem:[#allocation4 + $0x6c0] sm:$0xff]
    %v935 = vld [vmem:[#allocation4 + $0x6c8] sm:$0xff]
    %v936 = vld [vmem:[#allocation4 + $0x6d0] sm:$0xff]
    %v937 = vld [vmem:[#allocation4 + $0x6d8] sm:$0xff]
    %v938 = vld [vmem:[#allocation4 + $0x6e0] sm:$0xff]
    %v939 = vld [vmem:[#allocation4 + $0x6e8] sm:$0xff]
    %v940 = vld [vmem:[#allocation4 + $0x6f0] sm:$0xff]
    %v941 = vld [vmem:[#allocation4 + $0x6f8] sm:$0xff]
    %v942 = vld [vmem:[#allocation4 + $0x700] sm:$0xff]
    %v943 = vld [vmem:[#allocation4 + $0x708] sm:$0xff]
    %v944 = vld [vmem:[#allocation4 + $0x710] sm:$0xff]
    %v945 = vld [vmem:[#allocation4 + $0x718] sm:$0xff]
    %v946 = vld [vmem:[#allocation4 + $0x720] sm:$0xff]
    %v947 = vld [vmem:[#allocation4 + $0x728] sm:$0xff]
    %v948 = vld [vmem:[#allocation4 + $0x730] sm:$0xff]
    %v949 = vld [vmem:[#allocation4 + $0x738] sm:$0xff]
    %v950 = vld [vmem:[#allocation4 + $0x740] sm:$0xff]
    %v951 = vld [vmem:[#allocation4 + $0x748] sm:$0xff]
    %v952 = vld [vmem:[#allocation4 + $0x750] sm:$0xff]
    %v953 = vld [vmem:[#allocation4 + $0x758] sm:$0xff]
    %v954 = vld [vmem:[#allocation4 + $0x760] sm:$0xff]
    %v955 = vld [vmem:[#allocation4 + $0x768] sm:$0xff]
    %v956 = vld [vmem:[#allocation4 + $0x770] sm:$0xff]
    %v957 = vld [vmem:[#allocation4 + $0x778] sm:$0xff]
    %v958 = vld [vmem:[#allocation4 + $0x780] sm:$0xff]
    %v959 = vld [vmem:[#allocation4 + $0x788] sm:$0xff]
    %v960 = vld [vmem:[#allocation4 + $0x790] sm:$0xff]
    %v961 = vld [vmem:[#allocation4 + $0x798] sm:$0xff]
    %v962 = vld [vmem:[#allocation4 + $0x7a0] sm:$0xff]
    %v963 = vld [vmem:[#allocation4 + $0x7a8] sm:$0xff]
    %v964 = vld [vmem:[#allocation4 + $0x7b0] sm:$0xff]
    %v965 = vld [vmem:[#allocation4 + $0x7b8] sm:$0xff]
    %v966 = vld [vmem:[#allocation4 + $0x7c0] sm:$0xff]
    %v967 = vld [vmem:[#allocation4 + $0x7c8] sm:$0xff]
    %v968 = vld [vmem:[#allocation4 + $0x7d0] sm:$0xff]
    %v969 = vld [vmem:[#allocation4 + $0x7d8] sm:$0xff]
    %v970 = vld [vmem:[#allocation4 + $0x7e0] sm:$0xff]
    %v971 = vld [vmem:[#allocation4 + $0x7e8] sm:$0xff]
    %v972 = vld [vmem:[#allocation4 + $0x7f0] sm:$0xff]
    %v973 = vld [vmem:[#allocation4 + $0x7f8] sm:$0xff]
    %974 = vmatprep.subr.mxu0 %v719
    %975 = vmatpush1.msra.mxu0 %v718
    %976 = vmatprep.subr.mxu0 %v727
    %977 = vmatpush1.msra.mxu0 %v726
    %978 = vmatprep.subr.mxu0 %v735
    %979 = vmatpush1.msra.mxu0 %v734
    %980 = vmatprep.subr.mxu0 %v743
    %981 = vmatpush1.msra.mxu0 %v742
    %982 = vmatprep.subr.mxu0 %v751
    %983 = vmatpush1.msra.mxu0 %v750
    %984 = vmatprep.subr.mxu0 %v759
    %985 = vmatpush1.msra.mxu0 %v758
    %986 = vmatprep.subr.mxu0 %v767
    %987 = vmatpush1.msra.mxu0 %v766
    %988 = vmatprep.subr.mxu0 %v775
    %989 = vmatpush1.msra.mxu0 %v774
    %990 = vmatprep.subr.mxu0 %v783
    %991 = vmatpush1.msra.mxu0 %v782
    %992 = vmatprep.subr.mxu0 %v791
    %993 = vmatpush1.msra.mxu0 %v790
    %994 = vmatprep.subr.mxu0 %v799
    %995 = vmatpush1.msra.mxu0 %v798
    %996 = vmatprep.subr.mxu0 %v807
    %997 = vmatpush1.msra.mxu0 %v806
    %998 = vmatprep.subr.mxu0 %v815
    %999 = vmatpush1.msra.mxu0 %v814
    %1000 = vmatprep.subr.mxu0 %v823
    %1001 = vmatpush1.msra.mxu0 %v822
    %1002 = vmatprep.subr.mxu0 %v831
    %1003 = vmatpush1.msra.mxu0 %v830
    %1004 = vmatprep.subr.mxu0 %v839
    %1005 = vmatpush1.msra.mxu0 %v838
    %1006 = vmatprep.subr.mxu0 %v847
    %1007 = vmatpush1.msra.mxu0 %v846
    %1008 = vmatprep.subr.mxu0 %v855
    %1009 = vmatpush1.msra.mxu0 %v854
    %1010 = vmatprep.subr.mxu0 %v863
    %1011 = vmatpush1.msra.mxu0 %v862
    %1012 = vmatprep.subr.mxu0 %v871
    %1013 = vmatpush1.msra.mxu0 %v870
    %1014 = vmatprep.subr.mxu0 %v879
    %1015 = vmatpush1.msra.mxu0 %v878
    %1016 = vmatprep.subr.mxu0 %v887
    %1017 = vmatpush1.msra.mxu0 %v886
    %1018 = vmatprep.subr.mxu0 %v895
    %1019 = vmatpush1.msra.mxu0 %v894
    %1020 = vmatprep.subr.mxu0 %v903
    %1021 = vmatpush1.msra.mxu0 %v902
    %1022 = vmatprep.subr.mxu0 %v911
    %1023 = vmatpush1.msra.mxu0 %v910
    %1024 = vmatprep.subr.mxu0 %v919
    %1025 = vmatpush1.msra.mxu0 %v918
    %1026 = vmatprep.subr.mxu0 %v927
    %1027 = vmatpush1.msra.mxu0 %v926
    %1028 = vmatprep.subr.mxu0 %v935
    %1029 = vmatpush1.msra.mxu0 %v934
    %1030 = vmatprep.subr.mxu0 %v943
    %1031 = vmatpush1.msra.mxu0 %v942
    %1032 = vmatprep.subr.mxu0 %v951
    %1033 = vmatpush1.msra.mxu0 %v950
    %1034 = vmatprep.subr.mxu0 %v959
    %1035 = vmatpush1.msra.mxu0 %v958
    %1036 = vmatprep.subr.mxu0 %v967
    %1037 = vmatpush1.msra.mxu0 %v966
    %1038 = vmatprep.mubr.f32.mxu0 0.0
    %1039 = vmatmul.mubr.f32.gmra.mrb[0].mxu0 %v717
    %v1040 = vpop.f32.mrb[0].mxu0
    %v1041 = vadd.f32 0.0, %v1040
    %v1042 = vpop.f32.mrb[0].mxu0
    %v1043 = vadd.f32 0.0, %v1042
    %1044 = vdwg.mxu0
    %1045 = vmatprep.subr.mxu0 %v721
    %1046 = vmatpush1.msra.mxu0 %v720
    %1047 = vmatprep.subr.mxu0 %v729
    %1048 = vmatpush1.msra.mxu0 %v728
    %1049 = vmatprep.subr.mxu0 %v737
    %1050 = vmatpush1.msra.mxu0 %v736
    %1051 = vmatprep.subr.mxu0 %v745
    %1052 = vmatpush1.msra.mxu0 %v744
    %1053 = vmatprep.subr.mxu0 %v753
    %1054 = vmatpush1.msra.mxu0 %v752
    %1055 = vmatprep.subr.mxu0 %v761
    %1056 = vmatpush1.msra.mxu0 %v760
    %1057 = vmatprep.subr.mxu0 %v769
    %1058 = vmatpush1.msra.mxu0 %v768
    %1059 = vmatprep.subr.mxu0 %v777
    %1060 = vmatpush1.msra.mxu0 %v776
    %1061 = vmatprep.subr.mxu0 %v785
    %1062 = vmatpush1.msra.mxu0 %v784
    %1063 = vmatprep.subr.mxu0 %v793
    %1064 = vmatpush1.msra.mxu0 %v792
    %1065 = vmatprep.subr.mxu0 %v801
    %1066 = vmatpush1.msra.mxu0 %v800
    %1067 = vmatprep.subr.mxu0 %v809
    %1068 = vmatpush1.msra.mxu0 %v808
    %1069 = vmatprep.subr.mxu0 %v817
    %1070 = vmatpush1.msra.mxu0 %v816
    %1071 = vmatprep.subr.mxu0 %v825
    %1072 = vmatpush1.msra.mxu0 %v824
    %1073 = vmatprep.subr.mxu0 %v833
    %1074 = vmatpush1.msra.mxu0 %v832
    %1075 = vmatprep.subr.mxu0 %v841
    %1076 = vmatpush1.msra.mxu0 %v840
    %1077 = vmatprep.subr.mxu0 %v849
    %1078 = vmatpush1.msra.mxu0 %v848
    %1079 = vmatprep.subr.mxu0 %v857
    %1080 = vmatpush1.msra.mxu0 %v856
    %1081 = vmatprep.subr.mxu0 %v865
    %1082 = vmatpush1.msra.mxu0 %v864
    %1083 = vmatprep.subr.mxu0 %v873
    %1084 = vmatpush1.msra.mxu0 %v872
    %1085 = vmatprep.subr.mxu0 %v881
    %1086 = vmatpush1.msra.mxu0 %v880
    %1087 = vmatprep.subr.mxu0 %v889
    %1088 = vmatpush1.msra.mxu0 %v888
    %1089 = vmatprep.subr.mxu0 %v897
    %1090 = vmatpush1.msra.mxu0 %v896
    %1091 = vmatprep.subr.mxu0 %v905
    %1092 = vmatpush1.msra.mxu0 %v904
    %1093 = vmatprep.subr.mxu0 %v913
    %1094 = vmatpush1.msra.mxu0 %v912
    %1095 = vmatprep.subr.mxu0 %v921
    %1096 = vmatpush1.msra.mxu0 %v920
    %1097 = vmatprep.subr.mxu0 %v929
    %1098 = vmatpush1.msra.mxu0 %v928
    %1099 = vmatprep.subr.mxu0 %v937
    %1100 = vmatpush1.msra.mxu0 %v936
    %1101 = vmatprep.subr.mxu0 %v945
    %1102 = vmatpush1.msra.mxu0 %v944
    %1103 = vmatprep.subr.mxu0 %v953
    %1104 = vmatpush1.msra.mxu0 %v952
    %1105 = vmatprep.subr.mxu0 %v961
    %1106 = vmatpush1.msra.mxu0 %v960
    %1107 = vmatprep.subr.mxu0 %v969
    %1108 = vmatpush1.msra.mxu0 %v968
    %1109 = vmatprep.mubr.f32.mxu0 0.0
    %1110 = vmatmul.mubr.f32.gmra.mrb[0].mxu0 %v717
    %v1111 = vpop.f32.mrb[0].mxu0
    %v1112 = vadd.f32 0.0, %v1111
    %v1113 = vpop.f32.mrb[0].mxu0
    %v1114 = vadd.f32 0.0, %v1113
    %1115 = vdwg.mxu0
    %1116 = vmatprep.subr.mxu0 %v723
    %1117 = vmatpush1.msra.mxu0 %v722
    %1118 = vmatprep.subr.mxu0 %v731
    %1119 = vmatpush1.msra.mxu0 %v730
    %1120 = vmatprep.subr.mxu0 %v739
    %1121 = vmatpush1.msra.mxu0 %v738
    %1122 = vmatprep.subr.mxu0 %v747
    %1123 = vmatpush1.msra.mxu0 %v746
    %1124 = vmatprep.subr.mxu0 %v755
    %1125 = vmatpush1.msra.mxu0 %v754
    %1126 = vmatprep.subr.mxu0 %v763
    %1127 = vmatpush1.msra.mxu0 %v762
    %1128 = vmatprep.subr.mxu0 %v771
    %1129 = vmatpush1.msra.mxu0 %v770
    %1130 = vmatprep.subr.mxu0 %v779
    %1131 = vmatpush1.msra.mxu0 %v778
    %1132 = vmatprep.subr.mxu0 %v787
    %1133 = vmatpush1.msra.mxu0 %v786
    %1134 = vmatprep.subr.mxu0 %v795
    %1135 = vmatpush1.msra.mxu0 %v794
    %1136 = vmatprep.subr.mxu0 %v803
    %1137 = vmatpush1.msra.mxu0 %v802
    %1138 = vmatprep.subr.mxu0 %v811
    %1139 = vmatpush1.msra.mxu0 %v810
    %1140 = vmatprep.subr.mxu0 %v819
    %1141 = vmatpush1.msra.mxu0 %v818
    %1142 = vmatprep.subr.mxu0 %v827
    %1143 = vmatpush1.msra.mxu0 %v826
    %1144 = vmatprep.subr.mxu0 %v835
    %1145 = vmatpush1.msra.mxu0 %v834
    %1146 = vmatprep.subr.mxu0 %v843
    %1147 = vmatpush1.msra.mxu0 %v842
    %1148 = vmatprep.subr.mxu0 %v851
    %1149 = vmatpush1.msra.mxu0 %v850
    %1150 = vmatprep.subr.mxu0 %v859
    %1151 = vmatpush1.msra.mxu0 %v858
    %1152 = vmatprep.subr.mxu0 %v867
    %1153 = vmatpush1.msra.mxu0 %v866
    %1154 = vmatprep.subr.mxu0 %v875
    %1155 = vmatpush1.msra.mxu0 %v874
    %1156 = vmatprep.subr.mxu0 %v883
    %1157 = vmatpush1.msra.mxu0 %v882
    %1158 = vmatprep.subr.mxu0 %v891
    %1159 = vmatpush1.msra.mxu0 %v890
    %1160 = vmatprep.subr.mxu0 %v899
    %1161 = vmatpush1.msra.mxu0 %v898
    %1162 = vmatprep.subr.mxu0 %v907
    %1163 = vmatpush1.msra.mxu0 %v906
    %1164 = vmatprep.subr.mxu0 %v915
    %1165 = vmatpush1.msra.mxu0 %v914
    %1166 = vmatprep.subr.mxu0 %v923
    %1167 = vmatpush1.msra.mxu0 %v922
    %1168 = vmatprep.subr.mxu0 %v931
    %1169 = vmatpush1.msra.mxu0 %v930
    %1170 = vmatprep.subr.mxu0 %v939
    %1171 = vmatpush1.msra.mxu0 %v938
    %1172 = vmatprep.subr.mxu0 %v947
    %1173 = vmatpush1.msra.mxu0 %v946
    %1174 = vmatprep.subr.mxu0 %v955
    %1175 = vmatpush1.msra.mxu0 %v954
    %1176 = vmatprep.subr.mxu0 %v963
    %1177 = vmatpush1.msra.mxu0 %v962
    %1178 = vmatprep.subr.mxu0 %v971
    %1179 = vmatpush1.msra.mxu0 %v970
    %1180 = vmatprep.mubr.f32.mxu0 0.0
    %1181 = vmatmul.mubr.f32.gmra.mrb[0].mxu0 %v717
    %v1182 = vpop.f32.mrb[0].mxu0
    %v1183 = vadd.f32 0.0, %v1182
    %v1184 = vpop.f32.mrb[0].mxu0
    %v1185 = vadd.f32 0.0, %v1184
    %1186 = vdwg.mxu0
    %1187 = vmatprep.subr.mxu0 %v725
    %1188 = vmatpush1.msra.mxu0 %v724
    %1189 = vmatprep.subr.mxu0 %v733
    %1190 = vmatpush1.msra.mxu0 %v732
    %1191 = vmatprep.subr.mxu0 %v741
    %1192 = vmatpush1.msra.mxu0 %v740
    %1193 = vmatprep.subr.mxu0 %v749
    %1194 = vmatpush1.msra.mxu0 %v748
    %1195 = vmatprep.subr.mxu0 %v757
    %1196 = vmatpush1.msra.mxu0 %v756
    %1197 = vmatprep.subr.mxu0 %v765
    %1198 = vmatpush1.msra.mxu0 %v764
    %1199 = vmatprep.subr.mxu0 %v773
    %1200 = vmatpush1.msra.mxu0 %v772
    %1201 = vmatprep.subr.mxu0 %v781
    %1202 = vmatpush1.msra.mxu0 %v780
    %1203 = vmatprep.subr.mxu0 %v789
    %1204 = vmatpush1.msra.mxu0 %v788
    %1205 = vmatprep.subr.mxu0 %v797
    %1206 = vmatpush1.msra.mxu0 %v796
    %1207 = vmatprep.subr.mxu0 %v805
    %1208 = vmatpush1.msra.mxu0 %v804
    %1209 = vmatprep.subr.mxu0 %v813
    %1210 = vmatpush1.msra.mxu0 %v812
    %1211 = vmatprep.subr.mxu0 %v821
    %1212 = vmatpush1.msra.mxu0 %v820
    %1213 = vmatprep.subr.mxu0 %v829
    %1214 = vmatpush1.msra.mxu0 %v828
    %1215 = vmatprep.subr.mxu0 %v837
    %1216 = vmatpush1.msra.mxu0 %v836
    %1217 = vmatprep.subr.mxu0 %v845
    %1218 = vmatpush1.msra.mxu0 %v844
    %1219 = vmatprep.subr.mxu0 %v853
    %1220 = vmatpush1.msra.mxu0 %v852
    %1221 = vmatprep.subr.mxu0 %v861
    %1222 = vmatpush1.msra.mxu0 %v860
    %1223 = vmatprep.subr.mxu0 %v869
    %1224 = vmatpush1.msra.mxu0 %v868
    %1225 = vmatprep.subr.mxu0 %v877
    %1226 = vmatpush1.msra.mxu0 %v876
    %1227 = vmatprep.subr.mxu0 %v885
    %1228 = vmatpush1.msra.mxu0 %v884
    %1229 = vmatprep.subr.mxu0 %v893
    %1230 = vmatpush1.msra.mxu0 %v892
    %1231 = vmatprep.subr.mxu0 %v901
    %1232 = vmatpush1.msra.mxu0 %v900
    %1233 = vmatprep.subr.mxu0 %v909
    %1234 = vmatpush1.msra.mxu0 %v908
    %1235 = vmatprep.subr.mxu0 %v917
    %1236 = vmatpush1.msra.mxu0 %v916
    %1237 = vmatprep.subr.mxu0 %v925
    %1238 = vmatpush1.msra.mxu0 %v924
    %1239 = vmatprep.subr.mxu0 %v933
    %1240 = vmatpush1.msra.mxu0 %v932
    %1241 = vmatprep.subr.mxu0 %v941
    %1242 = vmatpush1.msra.mxu0 %v940
    %1243 = vmatprep.subr.mxu0 %v949
    %1244 = vmatpush1.msra.mxu0 %v948
    %1245 = vmatprep.subr.mxu0 %v957
    %1246 = vmatpush1.msra.mxu0 %v956
    %1247 = vmatprep.subr.mxu0 %v965
    %1248 = vmatpush1.msra.mxu0 %v964
    %1249 = vmatprep.subr.mxu0 %v973
    %1250 = vmatpush1.msra.mxu0 %v972
    %1251 = vmatprep.mubr.f32.mxu0 0.0
    %1252 = vmatmul.mubr.f32.gmra.mrb[0].mxu0 %v717
    %v1253 = vpop.f32.mrb[0].mxu0
    %v1254 = vadd.f32 0.0, %v1253
    %v1255 = vpop.f32.mrb[0].mxu0
    %v1256 = vadd.f32 0.0, %v1255
    %1257 = vdwg.mxu0
    %v1258 = vadd.f32 %v1041, %v683
    %v1259 = vadd.f32 %v1043, %v687
    %v1260 = vadd.f32 %v1112, %v691
    %v1261 = vadd.f32 %v1114, %v695
    %v1262 = vmul.f32 %v1258, 0.5
    %v1263 = vtanh.pop %v1262
    %v1264 = vmul.f32 %v1263, 0.5
    %v1265 = vadd.f32 %v1264, 0.5
    %v1266 = vmul.f32 %v1259, 0.5
    %v1267 = vtanh.pop %v1266
    %v1268 = vmul.f32 %v1267, 0.5
    %v1269 = vadd.f32 %v1268, 0.5
    %v1270 = vtanh.pop %v1260
    %v1271 = vmul.f32 %v1261, 0.5
    %v1272 = vtanh.pop %v1271
    %v1273 = vmul.f32 %v1272, 0.5
    %v1274 = vadd.f32 %v1273, 0.5
    %v1275 = vmul.f32 %v1269, 0.0
    %v1276 = vmul.f32 %v1265, %v1270
    %v1277 = vadd.f32 %v1275, %v1276
    %v1278 = vtanh.pop %v1277
    %v1279 = vmul.f32 %v1274, %v1278
    %v1280 = vld [vmem:[%s298] sm:$0xff]
    %v1285 = vcombine.low %v1183, %v1185
    %v1286 = vcombine.low %v1254, %v1256
    %v1288 = vunpack.c.l.s4 1983009808
    %v1289 = vunpack.c.0.s8 %v1288
    %v1290 = vlaneseq
    %v1291 = vshrl.u32 %v1290, 7
    %v1292 = vsub.s32 %v1289, %v1291
    %v1293 = vrot.slane %v1285, %v1292
    %v1295 = vunpack.c.l.s4 1983009808
    %v1296 = vunpack.c.0.s8 %v1295
    %v1297 = vlaneseq
    %v1298 = vshrl.u32 %v1297, 7
    %v1299 = vsub.s32 %v1296, %v1298
    %v1300 = vrot.slane %v1286, %v1299
    %v1301 = vcombine.low %v1293, %v1300
    %v1303 = vadd.f32 %v1280, %v1301
    %v1304 = vmul.f32 %v1303, 0.5
    %v1305 = vtanh.pop %v1304
    %v1306 = vmul.f32 %v1305, 0.5
    %v1307 = vadd.f32 %v1306, 0.5
    %v1309 = vrot.slane %v1303, 2
    %v1311 = vmul.f32 %v1309, 0.5
    %v1312 = vtanh.pop %v1311
    %v1313 = vmul.f32 %v1312, 0.5
    %v1314 = vadd.f32 %v1313, 0.5
    %v1315 = vrot.slane %v1303, 4
    %v1317 = vtanh.pop %v1315
    %v1318 = vrot.slane %v1303, 6
    %v1320 = vmul.f32 %v1318, 0.5
    %v1321 = vtanh.pop %v1320
    %v1322 = vmul.f32 %v1321, 0.5
    %v1323 = vadd.f32 %v1322, 0.5
    %v1324 = vmul.f32 %v1314, %v715
    %v1325 = vmul.f32 %v1307, %v1317
    %v1326 = vadd.f32 %v1324, %v1325
    %v1327 = vtanh.pop %v1326
    %v1328 = vmul.f32 %v1323, %v1327
    %1329 = vmatprep.subr.mxu0 %v719
    %1330 = vmatpush1.msra.mxu0 %v718
    %1331 = vmatprep.subr.mxu0 %v727
    %1332 = vmatpush1.msra.mxu0 %v726
    %1333 = vmatprep.subr.mxu0 %v735
    %1334 = vmatpush1.msra.mxu0 %v734
    %1335 = vmatprep.subr.mxu0 %v743
    %1336 = vmatpush1.msra.mxu0 %v742
    %1337 = vmatprep.subr.mxu0 %v751
    %1338 = vmatpush1.msra.mxu0 %v750
    %1339 = vmatprep.subr.mxu0 %v759
    %1340 = vmatpush1.msra.mxu0 %v758
    %1341 = vmatprep.subr.mxu0 %v767
    %1342 = vmatpush1.msra.mxu0 %v766
    %1343 = vmatprep.subr.mxu0 %v775
    %1344 = vmatpush1.msra.mxu0 %v774
    %1345 = vmatprep.subr.mxu0 %v783
    %1346 = vmatpush1.msra.mxu0 %v782
    %1347 = vmatprep.subr.mxu0 %v791
    %1348 = vmatpush1.msra.mxu0 %v790
    %1349 = vmatprep.subr.mxu0 %v799
    %1350 = vmatpush1.msra.mxu0 %v798
    %1351 = vmatprep.subr.mxu0 %v807
    %1352 = vmatpush1.msra.mxu0 %v806
    %1353 = vmatprep.subr.mxu0 %v815
    %1354 = vmatpush1.msra.mxu0 %v814
    %1355 = vmatprep.subr.mxu0 %v823
    %1356 = vmatpush1.msra.mxu0 %v822
    %1357 = vmatprep.subr.mxu0 %v831
    %1358 = vmatpush1.msra.mxu0 %v830
    %1359 = vmatprep.subr.mxu0 %v839
    %1360 = vmatpush1.msra.mxu0 %v838
    %1361 = vmatprep.subr.mxu0 %v847
    %1362 = vmatpush1.msra.mxu0 %v846
    %1363 = vmatprep.subr.mxu0 %v855
    %1364 = vmatpush1.msra.mxu0 %v854
    %1365 = vmatprep.subr.mxu0 %v863
    %1366 = vmatpush1.msra.mxu0 %v862
    %1367 = vmatprep.subr.mxu0 %v871
    %1368 = vmatpush1.msra.mxu0 %v870
    %1369 = vmatprep.subr.mxu0 %v879
    %1370 = vmatpush1.msra.mxu0 %v878
    %1371 = vmatprep.subr.mxu0 %v887
    %1372 = vmatpush1.msra.mxu0 %v886
    %1373 = vmatprep.subr.mxu0 %v895
    %1374 = vmatpush1.msra.mxu0 %v894
    %1375 = vmatprep.subr.mxu0 %v903
    %1376 = vmatpush1.msra.mxu0 %v902
    %1377 = vmatprep.subr.mxu0 %v911
    %1378 = vmatpush1.msra.mxu0 %v910
    %1379 = vmatprep.subr.mxu0 %v919
    %1380 = vmatpush1.msra.mxu0 %v918
    %1381 = vmatprep.subr.mxu0 %v927
    %1382 = vmatpush1.msra.mxu0 %v926
    %1383 = vmatprep.subr.mxu0 %v935
    %1384 = vmatpush1.msra.mxu0 %v934
    %1385 = vmatprep.subr.mxu0 %v943
    %1386 = vmatpush1.msra.mxu0 %v942
    %1387 = vmatprep.subr.mxu0 %v951
    %1388 = vmatpush1.msra.mxu0 %v950
    %1389 = vmatprep.subr.mxu0 %v959
    %1390 = vmatpush1.msra.mxu0 %v958
    %1391 = vmatprep.subr.mxu0 %v967
    %1392 = vmatpush1.msra.mxu0 %v966
    %1393 = vmatprep.mubr.f32.mxu0 %v1279
    %1394 = vmatmul.mubr.f32.gmra.mrb[0].mxu0 %v1328
    %v1395 = vpop.f32.mrb[0].mxu0
    %v1396 = vadd.f32 0.0, %v1395
    %v1397 = vpop.f32.mrb[0].mxu0
    %v1398 = vadd.f32 0.0, %v1397
    %1399 = vdwg.mxu0
    %1400 = vmatprep.subr.mxu0 %v721
    %1401 = vmatpush1.msra.mxu0 %v720
    %1402 = vmatprep.subr.mxu0 %v729
    %1403 = vmatpush1.msra.mxu0 %v728
    %1404 = vmatprep.subr.mxu0 %v737
    %1405 = vmatpush1.msra.mxu0 %v736
    %1406 = vmatprep.subr.mxu0 %v745
    %1407 = vmatpush1.msra.mxu0 %v744
    %1408 = vmatprep.subr.mxu0 %v753
    %1409 = vmatpush1.msra.mxu0 %v752
    %1410 = vmatprep.subr.mxu0 %v761
    %1411 = vmatpush1.msra.mxu0 %v760
    %1412 = vmatprep.subr.mxu0 %v769
    %1413 = vmatpush1.msra.mxu0 %v768
    %1414 = vmatprep.subr.mxu0 %v777
    %1415 = vmatpush1.msra.mxu0 %v776
    %1416 = vmatprep.subr.mxu0 %v785
    %1417 = vmatpush1.msra.mxu0 %v784
    %1418 = vmatprep.subr.mxu0 %v793
    %1419 = vmatpush1.msra.mxu0 %v792
    %1420 = vmatprep.subr.mxu0 %v801
    %1421 = vmatpush1.msra.mxu0 %v800
    %1422 = vmatprep.subr.mxu0 %v809
    %1423 = vmatpush1.msra.mxu0 %v808
    %1424 = vmatprep.subr.mxu0 %v817
    %1425 = vmatpush1.msra.mxu0 %v816
    %1426 = vmatprep.subr.mxu0 %v825
    %1427 = vmatpush1.msra.mxu0 %v824
    %1428 = vmatprep.subr.mxu0 %v833
    %1429 = vmatpush1.msra.mxu0 %v832
    %1430 = vmatprep.subr.mxu0 %v841
    %1431 = vmatpush1.msra.mxu0 %v840
    %1432 = vmatprep.subr.mxu0 %v849
    %1433 = vmatpush1.msra.mxu0 %v848
    %1434 = vmatprep.subr.mxu0 %v857
    %1435 = vmatpush1.msra.mxu0 %v856
    %1436 = vmatprep.subr.mxu0 %v865
    %1437 = vmatpush1.msra.mxu0 %v864
    %1438 = vmatprep.subr.mxu0 %v873
    %1439 = vmatpush1.msra.mxu0 %v872
    %1440 = vmatprep.subr.mxu0 %v881
    %1441 = vmatpush1.msra.mxu0 %v880
    %1442 = vmatprep.subr.mxu0 %v889
    %1443 = vmatpush1.msra.mxu0 %v888
    %1444 = vmatprep.subr.mxu0 %v897
    %1445 = vmatpush1.msra.mxu0 %v896
    %1446 = vmatprep.subr.mxu0 %v905
    %1447 = vmatpush1.msra.mxu0 %v904
    %1448 = vmatprep.subr.mxu0 %v913
    %1449 = vmatpush1.msra.mxu0 %v912
    %1450 = vmatprep.subr.mxu0 %v921
    %1451 = vmatpush1.msra.mxu0 %v920
    %1452 = vmatprep.subr.mxu0 %v929
    %1453 = vmatpush1.msra.mxu0 %v928
    %1454 = vmatprep.subr.mxu0 %v937
    %1455 = vmatpush1.msra.mxu0 %v936
    %1456 = vmatprep.subr.mxu0 %v945
    %1457 = vmatpush1.msra.mxu0 %v944
    %1458 = vmatprep.subr.mxu0 %v953
    %1459 = vmatpush1.msra.mxu0 %v952
    %1460 = vmatprep.subr.mxu0 %v961
    %1461 = vmatpush1.msra.mxu0 %v960
    %1462 = vmatprep.subr.mxu0 %v969
    %1463 = vmatpush1.msra.mxu0 %v968
    %1464 = vmatprep.mubr.f32.mxu0 %v1279
    %1465 = vmatmul.mubr.f32.gmra.mrb[0].mxu0 %v1328
    %v1466 = vpop.f32.mrb[0].mxu0
    %v1467 = vadd.f32 0.0, %v1466
    %v1468 = vpop.f32.mrb[0].mxu0
    %v1469 = vadd.f32 0.0, %v1468
    %1470 = vdwg.mxu0
    %1471 = vmatprep.subr.mxu0 %v723
    %1472 = vmatpush1.msra.mxu0 %v722
    %1473 = vmatprep.subr.mxu0 %v731
    %1474 = vmatpush1.msra.mxu0 %v730
    %1475 = vmatprep.subr.mxu0 %v739
    %1476 = vmatpush1.msra.mxu0 %v738
    %1477 = vmatprep.subr.mxu0 %v747
    %1478 = vmatpush1.msra.mxu0 %v746
    %1479 = vmatprep.subr.mxu0 %v755
    %1480 = vmatpush1.msra.mxu0 %v754
    %1481 = vmatprep.subr.mxu0 %v763
    %1482 = vmatpush1.msra.mxu0 %v762
    %1483 = vmatprep.subr.mxu0 %v771
    %1484 = vmatpush1.msra.mxu0 %v770
    %1485 = vmatprep.subr.mxu0 %v779
    %1486 = vmatpush1.msra.mxu0 %v778
    %1487 = vmatprep.subr.mxu0 %v787
    %1488 = vmatpush1.msra.mxu0 %v786
    %1489 = vmatprep.subr.mxu0 %v795
    %1490 = vmatpush1.msra.mxu0 %v794
    %1491 = vmatprep.subr.mxu0 %v803
    %1492 = vmatpush1.msra.mxu0 %v802
    %1493 = vmatprep.subr.mxu0 %v811
    %1494 = vmatpush1.msra.mxu0 %v810
    %1495 = vmatprep.subr.mxu0 %v819
    %1496 = vmatpush1.msra.mxu0 %v818
    %1497 = vmatprep.subr.mxu0 %v827
    %1498 = vmatpush1.msra.mxu0 %v826
    %1499 = vmatprep.subr.mxu0 %v835
    %1500 = vmatpush1.msra.mxu0 %v834
    %1501 = vmatprep.subr.mxu0 %v843
    %1502 = vmatpush1.msra.mxu0 %v842
    %1503 = vmatprep.subr.mxu0 %v851
    %1504 = vmatpush1.msra.mxu0 %v850
    %1505 = vmatprep.subr.mxu0 %v859
    %1506 = vmatpush1.msra.mxu0 %v858
    %1507 = vmatprep.subr.mxu0 %v867
    %1508 = vmatpush1.msra.mxu0 %v866
    %1509 = vmatprep.subr.mxu0 %v875
    %1510 = vmatpush1.msra.mxu0 %v874
    %1511 = vmatprep.subr.mxu0 %v883
    %1512 = vmatpush1.msra.mxu0 %v882
    %1513 = vmatprep.subr.mxu0 %v891
    %1514 = vmatpush1.msra.mxu0 %v890
    %1515 = vmatprep.subr.mxu0 %v899
    %1516 = vmatpush1.msra.mxu0 %v898
    %1517 = vmatprep.subr.mxu0 %v907
    %1518 = vmatpush1.msra.mxu0 %v906
    %1519 = vmatprep.subr.mxu0 %v915
    %1520 = vmatpush1.msra.mxu0 %v914
    %1521 = vmatprep.subr.mxu0 %v923
    %1522 = vmatpush1.msra.mxu0 %v922
    %1523 = vmatprep.subr.mxu0 %v931
    %1524 = vmatpush1.msra.mxu0 %v930
    %1525 = vmatprep.subr.mxu0 %v939
    %1526 = vmatpush1.msra.mxu0 %v938
    %1527 = vmatprep.subr.mxu0 %v947
    %1528 = vmatpush1.msra.mxu0 %v946
    %1529 = vmatprep.subr.mxu0 %v955
    %1530 = vmatpush1.msra.mxu0 %v954
    %1531 = vmatprep.subr.mxu0 %v963
    %1532 = vmatpush1.msra.mxu0 %v962
    %1533 = vmatprep.subr.mxu0 %v971
    %1534 = vmatpush1.msra.mxu0 %v970
    %1535 = vmatprep.mubr.f32.mxu0 %v1279
    %1536 = vmatmul.mubr.f32.gmra.mrb[0].mxu0 %v1328
    %v1537 = vpop.f32.mrb[0].mxu0
    %v1538 = vadd.f32 0.0, %v1537
    %v1539 = vpop.f32.mrb[0].mxu0
    %v1540 = vadd.f32 0.0, %v1539
    %1541 = vdwg.mxu0
    %1542 = vmatprep.subr.mxu0 %v725
    %1543 = vmatpush1.msra.mxu0 %v724
    %1544 = vmatprep.subr.mxu0 %v733
    %1545 = vmatpush1.msra.mxu0 %v732
    %1546 = vmatprep.subr.mxu0 %v741
    %1547 = vmatpush1.msra.mxu0 %v740
    %1548 = vmatprep.subr.mxu0 %v749
    %1549 = vmatpush1.msra.mxu0 %v748
    %1550 = vmatprep.subr.mxu0 %v757
    %1551 = vmatpush1.msra.mxu0 %v756
    %1552 = vmatprep.subr.mxu0 %v765
    %1553 = vmatpush1.msra.mxu0 %v764
    %1554 = vmatprep.subr.mxu0 %v773
    %1555 = vmatpush1.msra.mxu0 %v772
    %1556 = vmatprep.subr.mxu0 %v781
    %1557 = vmatpush1.msra.mxu0 %v780
    %1558 = vmatprep.subr.mxu0 %v789
    %1559 = vmatpush1.msra.mxu0 %v788
    %1560 = vmatprep.subr.mxu0 %v797
    %1561 = vmatpush1.msra.mxu0 %v796
    %1562 = vmatprep.subr.mxu0 %v805
    %1563 = vmatpush1.msra.mxu0 %v804
    %1564 = vmatprep.subr.mxu0 %v813
    %1565 = vmatpush1.msra.mxu0 %v812
    %1566 = vmatprep.subr.mxu0 %v821
    %1567 = vmatpush1.msra.mxu0 %v820
    %1568 = vmatprep.subr.mxu0 %v829
    %1569 = vmatpush1.msra.mxu0 %v828
    %1570 = vmatprep.subr.mxu0 %v837
    %1571 = vmatpush1.msra.mxu0 %v836
    %1572 = vmatprep.subr.mxu0 %v845
    %1573 = vmatpush1.msra.mxu0 %v844
    %1574 = vmatprep.subr.mxu0 %v853
    %1575 = vmatpush1.msra.mxu0 %v852
    %1576 = vmatprep.subr.mxu0 %v861
    %1577 = vmatpush1.msra.mxu0 %v860
    %1578 = vmatprep.subr.mxu0 %v869
    %1579 = vmatpush1.msra.mxu0 %v868
    %1580 = vmatprep.subr.mxu0 %v877
    %1581 = vmatpush1.msra.mxu0 %v876
    %1582 = vmatprep.subr.mxu0 %v885
    %1583 = vmatpush1.msra.mxu0 %v884
    %1584 = vmatprep.subr.mxu0 %v893
    %1585 = vmatpush1.msra.mxu0 %v892
    %1586 = vmatprep.subr.mxu0 %v901
    %1587 = vmatpush1.msra.mxu0 %v900
    %1588 = vmatprep.subr.mxu0 %v909
    %1589 = vmatpush1.msra.mxu0 %v908
    %1590 = vmatprep.subr.mxu0 %v917
    %1591 = vmatpush1.msra.mxu0 %v916
    %1592 = vmatprep.subr.mxu0 %v925
    %1593 = vmatpush1.msra.mxu0 %v924
    %1594 = vmatprep.subr.mxu0 %v933
    %1595 = vmatpush1.msra.mxu0 %v932
    %1596 = vmatprep.subr.mxu0 %v941
    %1597 = vmatpush1.msra.mxu0 %v940
    %1598 = vmatprep.subr.mxu0 %v949
    %1599 = vmatpush1.msra.mxu0 %v948
    %1600 = vmatprep.subr.mxu0 %v957
    %1601 = vmatpush1.msra.mxu0 %v956
    %1602 = vmatprep.subr.mxu0 %v965
    %1603 = vmatpush1.msra.mxu0 %v964
    %1604 = vmatprep.subr.mxu0 %v973
    %1605 = vmatpush1.msra.mxu0 %v972
    %1606 = vmatprep.mubr.f32.mxu0 %v1279
    %1607 = vmatmul.mubr.f32.gmra.mrb[0].mxu0 %v1328
    %v1608 = vpop.f32.mrb[0].mxu0
    %v1609 = vadd.f32 0.0, %v1608
    %v1610 = vpop.f32.mrb[0].mxu0
    %v1611 = vadd.f32 0.0, %v1610
    %1612 = vdwg.mxu0
    %v1613 = vadd.f32 %v1396, %v683
    %v1614 = vadd.f32 %v1398, %v687
    %v1615 = vadd.f32 %v1467, %v691
    %v1616 = vadd.f32 %v1469, %v695
    %v1617 = vmul.f32 %v1613, 0.5
    %v1618 = vtanh.pop %v1617
    %v1619 = vmul.f32 %v1618, 0.5
    %v1620 = vadd.f32 %v1619, 0.5
    %v1621 = vmul.f32 %v1614, 0.5
    %v1622 = vtanh.pop %v1621
    %v1623 = vmul.f32 %v1622, 0.5
    %v1624 = vadd.f32 %v1623, 0.5
    %v1625 = vtanh.pop %v1615
    %v1626 = vmul.f32 %v1616, 0.5
    %v1627 = vtanh.pop %v1626
    %v1628 = vmul.f32 %v1627, 0.5
    %v1629 = vadd.f32 %v1628, 0.5
    %v1630 = vmul.f32 %v1624, %v1277
    %v1631 = vmul.f32 %v1620, %v1625
    %v1632 = vadd.f32 %v1630, %v1631
    %v1633 = vtanh.pop %v1632
    %v1634 = vmul.f32 %v1629, %v1633
    %v1635 = vld [vmem:[%s361] sm:$0xff]
    %v1640 = vcombine.low %v1538, %v1540
    %v1641 = vcombine.low %v1609, %v1611
    %v1643 = vunpack.c.l.s4 1983009808
    %v1644 = vunpack.c.0.s8 %v1643
    %v1645 = vlaneseq
    %v1646 = vshrl.u32 %v1645, 7
    %v1647 = vsub.s32 %v1644, %v1646
    %v1648 = vrot.slane %v1640, %v1647
    %v1650 = vunpack.c.l.s4 1983009808
    %v1651 = vunpack.c.0.s8 %v1650
    %v1652 = vlaneseq
    %v1653 = vshrl.u32 %v1652, 7
    %v1654 = vsub.s32 %v1651, %v1653
    %v1655 = vrot.slane %v1641, %v1654
    %v1656 = vcombine.low %v1648, %v1655
    %v1658 = vadd.f32 %v1635, %v1656
    %v1659 = vmul.f32 %v1658, 0.5
    %v1660 = vtanh.pop %v1659
    %v1661 = vmul.f32 %v1660, 0.5
    %v1662 = vadd.f32 %v1661, 0.5
    %v1664 = vrot.slane %v1658, 2
    %v1666 = vmul.f32 %v1664, 0.5
    %v1667 = vtanh.pop %v1666
    %v1668 = vmul.f32 %v1667, 0.5
    %v1669 = vadd.f32 %v1668, 0.5
    %v1670 = vrot.slane %v1658, 4
    %v1672 = vtanh.pop %v1670
    %v1673 = vrot.slane %v1658, 6
    %v1675 = vmul.f32 %v1673, 0.5
    %v1676 = vtanh.pop %v1675
    %v1677 = vmul.f32 %v1676, 0.5
    %v1678 = vadd.f32 %v1677, 0.5
    %v1679 = vmul.f32 %v1669, %v1326
    %v1680 = vmul.f32 %v1662, %v1672
    %v1681 = vadd.f32 %v1679, %v1680
    %v1682 = vtanh.pop %v1681
    %v1683 = vmul.f32 %v1678, %v1682
    %1684 = vmatprep.subr.mxu0 %v719
    %1685 = vmatpush1.msra.mxu0 %v718
    %1686 = vmatprep.subr.mxu0 %v727
    %1687 = vmatpush1.msra.mxu0 %v726
    %1688 = vmatprep.subr.mxu0 %v735
    %1689 = vmatpush1.msra.mxu0 %v734
    %1690 = vmatprep.subr.mxu0 %v743
    %1691 = vmatpush1.msra.mxu0 %v742
    %1692 = vmatprep.subr.mxu0 %v751
    %1693 = vmatpush1.msra.mxu0 %v750
    %1694 = vmatprep.subr.mxu0 %v759
    %1695 = vmatpush1.msra.mxu0 %v758
    %1696 = vmatprep.subr.mxu0 %v767
    %1697 = vmatpush1.msra.mxu0 %v766
    %1698 = vmatprep.subr.mxu0 %v775
    %1699 = vmatpush1.msra.mxu0 %v774
    %1700 = vmatprep.subr.mxu0 %v783
    %1701 = vmatpush1.msra.mxu0 %v782
    %1702 = vmatprep.subr.mxu0 %v791
    %1703 = vmatpush1.msra.mxu0 %v790
    %1704 = vmatprep.subr.mxu0 %v799
    %1705 = vmatpush1.msra.mxu0 %v798
    %1706 = vmatprep.subr.mxu0 %v807
    %1707 = vmatpush1.msra.mxu0 %v806
    %1708 = vmatprep.subr.mxu0 %v815
    %1709 = vmatpush1.msra.mxu0 %v814
    %1710 = vmatprep.subr.mxu0 %v823
    %1711 = vmatpush1.msra.mxu0 %v822
    %1712 = vmatprep.subr.mxu0 %v831
    %1713 = vmatpush1.msra.mxu0 %v830
    %1714 = vmatprep.subr.mxu0 %v839
    %1715 = vmatpush1.msra.mxu0 %v838
    %1716 = vmatprep.subr.mxu0 %v847
    %1717 = vmatpush1.msra.mxu0 %v846
    %1718 = vmatprep.subr.mxu0 %v855
    %1719 = vmatpush1.msra.mxu0 %v854
    %1720 = vmatprep.subr.mxu0 %v863
    %1721 = vmatpush1.msra.mxu0 %v862
    %1722 = vmatprep.subr.mxu0 %v871
    %1723 = vmatpush1.msra.mxu0 %v870
    %1724 = vmatprep.subr.mxu0 %v879
    %1725 = vmatpush1.msra.mxu0 %v878
    %1726 = vmatprep.subr.mxu0 %v887
    %1727 = vmatpush1.msra.mxu0 %v886
    %1728 = vmatprep.subr.mxu0 %v895
    %1729 = vmatpush1.msra.mxu0 %v894
    %1730 = vmatprep.subr.mxu0 %v903
    %1731 = vmatpush1.msra.mxu0 %v902
    %1732 = vmatprep.subr.mxu0 %v911
    %1733 = vmatpush1.msra.mxu0 %v910
    %1734 = vmatprep.subr.mxu0 %v919
    %1735 = vmatpush1.msra.mxu0 %v918
    %1736 = vmatprep.subr.mxu0 %v927
    %1737 = vmatpush1.msra.mxu0 %v926
    %1738 = vmatprep.subr.mxu0 %v935
    %1739 = vmatpush1.msra.mxu0 %v934
    %1740 = vmatprep.subr.mxu0 %v943
    %1741 = vmatpush1.msra.mxu0 %v942
    %1742 = vmatprep.subr.mxu0 %v951
    %1743 = vmatpush1.msra.mxu0 %v950
    %1744 = vmatprep.subr.mxu0 %v959
    %1745 = vmatpush1.msra.mxu0 %v958
    %1746 = vmatprep.subr.mxu0 %v967
    %1747 = vmatpush1.msra.mxu0 %v966
    %1748 = vmatprep.mubr.f32.mxu0 %v1634
    %1749 = vmatmul.mubr.f32.gmra.mrb[0].mxu0 %v1683
    %v1750 = vpop.f32.mrb[0].mxu0
    %v1751 = vadd.f32 0.0, %v1750
    %v1752 = vpop.f32.mrb[0].mxu0
    %v1753 = vadd.f32 0.0, %v1752
    %1754 = vdwg.mxu0
    %1755 = vmatprep.subr.mxu0 %v721
    %1756 = vmatpush1.msra.mxu0 %v720
    %1757 = vmatprep.subr.mxu0 %v729
    %1758 = vmatpush1.msra.mxu0 %v728
    %1759 = vmatprep.subr.mxu0 %v737
    %1760 = vmatpush1.msra.mxu0 %v736
    %1761 = vmatprep.subr.mxu0 %v745
    %1762 = vmatpush1.msra.mxu0 %v744
    %1763 = vmatprep.subr.mxu0 %v753
    %1764 = vmatpush1.msra.mxu0 %v752
    %1765 = vmatprep.subr.mxu0 %v761
    %1766 = vmatpush1.msra.mxu0 %v760
    %1767 = vmatprep.subr.mxu0 %v769
    %1768 = vmatpush1.msra.mxu0 %v768
    %1769 = vmatprep.subr.mxu0 %v777
    %1770 = vmatpush1.msra.mxu0 %v776
    %1771 = vmatprep.subr.mxu0 %v785
    %1772 = vmatpush1.msra.mxu0 %v784
    %1773 = vmatprep.subr.mxu0 %v793
    %1774 = vmatpush1.msra.mxu0 %v792
    %1775 = vmatprep.subr.mxu0 %v801
    %1776 = vmatpush1.msra.mxu0 %v800
    %1777 = vmatprep.subr.mxu0 %v809
    %1778 = vmatpush1.msra.mxu0 %v808
    %1779 = vmatprep.subr.mxu0 %v817
    %1780 = vmatpush1.msra.mxu0 %v816
    %1781 = vmatprep.subr.mxu0 %v825
    %1782 = vmatpush1.msra.mxu0 %v824
    %1783 = vmatprep.subr.mxu0 %v833
    %1784 = vmatpush1.msra.mxu0 %v832
    %1785 = vmatprep.subr.mxu0 %v841
    %1786 = vmatpush1.msra.mxu0 %v840
    %1787 = vmatprep.subr.mxu0 %v849
    %1788 = vmatpush1.msra.mxu0 %v848
    %1789 = vmatprep.subr.mxu0 %v857
    %1790 = vmatpush1.msra.mxu0 %v856
    %1791 = vmatprep.subr.mxu0 %v865
    %1792 = vmatpush1.msra.mxu0 %v864
    %1793 = vmatprep.subr.mxu0 %v873
    %1794 = vmatpush1.msra.mxu0 %v872
    %1795 = vmatprep.subr.mxu0 %v881
    %1796 = vmatpush1.msra.mxu0 %v880
    %1797 = vmatprep.subr.mxu0 %v889
    %1798 = vmatpush1.msra.mxu0 %v888
    %1799 = vmatprep.subr.mxu0 %v897
    %1800 = vmatpush1.msra.mxu0 %v896
    %1801 = vmatprep.subr.mxu0 %v905
    %1802 = vmatpush1.msra.mxu0 %v904
    %1803 = vmatprep.subr.mxu0 %v913
    %1804 = vmatpush1.msra.mxu0 %v912
    %1805 = vmatprep.subr.mxu0 %v921
    %1806 = vmatpush1.msra.mxu0 %v920
    %1807 = vmatprep.subr.mxu0 %v929
    %1808 = vmatpush1.msra.mxu0 %v928
    %1809 = vmatprep.subr.mxu0 %v937
    %1810 = vmatpush1.msra.mxu0 %v936
    %1811 = vmatprep.subr.mxu0 %v945
    %1812 = vmatpush1.msra.mxu0 %v944
    %1813 = vmatprep.subr.mxu0 %v953
    %1814 = vmatpush1.msra.mxu0 %v952
    %1815 = vmatprep.subr.mxu0 %v961
    %1816 = vmatpush1.msra.mxu0 %v960
    %1817 = vmatprep.subr.mxu0 %v969
    %1818 = vmatpush1.msra.mxu0 %v968
    %1819 = vmatprep.mubr.f32.mxu0 %v1634
    %1820 = vmatmul.mubr.f32.gmra.mrb[0].mxu0 %v1683
    %v1821 = vpop.f32.mrb[0].mxu0
    %v1822 = vadd.f32 0.0, %v1821
    %v1823 = vpop.f32.mrb[0].mxu0
    %v1824 = vadd.f32 0.0, %v1823
    %1825 = vdwg.mxu0
    %1826 = vmatprep.subr.mxu0 %v723
    %1827 = vmatpush1.msra.mxu0 %v722
    %1828 = vmatprep.subr.mxu0 %v731
    %1829 = vmatpush1.msra.mxu0 %v730
    %1830 = vmatprep.subr.mxu0 %v739
    %1831 = vmatpush1.msra.mxu0 %v738
    %1832 = vmatprep.subr.mxu0 %v747
    %1833 = vmatpush1.msra.mxu0 %v746
    %1834 = vmatprep.subr.mxu0 %v755
    %1835 = vmatpush1.msra.mxu0 %v754
    %1836 = vmatprep.subr.mxu0 %v763
    %1837 = vmatpush1.msra.mxu0 %v762
    %1838 = vmatprep.subr.mxu0 %v771
    %1839 = vmatpush1.msra.mxu0 %v770
    %1840 = vmatprep.subr.mxu0 %v779
    %1841 = vmatpush1.msra.mxu0 %v778
    %1842 = vmatprep.subr.mxu0 %v787
    %1843 = vmatpush1.msra.mxu0 %v786
    %1844 = vmatprep.subr.mxu0 %v795
    %1845 = vmatpush1.msra.mxu0 %v794
    %1846 = vmatprep.subr.mxu0 %v803
    %1847 = vmatpush1.msra.mxu0 %v802
    %1848 = vmatprep.subr.mxu0 %v811
    %1849 = vmatpush1.msra.mxu0 %v810
    %1850 = vmatprep.subr.mxu0 %v819
    %1851 = vmatpush1.msra.mxu0 %v818
    %1852 = vmatprep.subr.mxu0 %v827
    %1853 = vmatpush1.msra.mxu0 %v826
    %1854 = vmatprep.subr.mxu0 %v835
    %1855 = vmatpush1.msra.mxu0 %v834
    %1856 = vmatprep.subr.mxu0 %v843
    %1857 = vmatpush1.msra.mxu0 %v842
    %1858 = vmatprep.subr.mxu0 %v851
    %1859 = vmatpush1.msra.mxu0 %v850
    %1860 = vmatprep.subr.mxu0 %v859
    %1861 = vmatpush1.msra.mxu0 %v858
    %1862 = vmatprep.subr.mxu0 %v867
    %1863 = vmatpush1.msra.mxu0 %v866
    %1864 = vmatprep.subr.mxu0 %v875
    %1865 = vmatpush1.msra.mxu0 %v874
    %1866 = vmatprep.subr.mxu0 %v883
    %1867 = vmatpush1.msra.mxu0 %v882
    %1868 = vmatprep.subr.mxu0 %v891
    %1869 = vmatpush1.msra.mxu0 %v890
    %1870 = vmatprep.subr.mxu0 %v899
    %1871 = vmatpush1.msra.mxu0 %v898
    %1872 = vmatprep.subr.mxu0 %v907
    %1873 = vmatpush1.msra.mxu0 %v906
    %1874 = vmatprep.subr.mxu0 %v915
    %1875 = vmatpush1.msra.mxu0 %v914
    %1876 = vmatprep.subr.mxu0 %v923
    %1877 = vmatpush1.msra.mxu0 %v922
    %1878 = vmatprep.subr.mxu0 %v931
    %1879 = vmatpush1.msra.mxu0 %v930
    %1880 = vmatprep.subr.mxu0 %v939
    %1881 = vmatpush1.msra.mxu0 %v938
    %1882 = vmatprep.subr.mxu0 %v947
    %1883 = vmatpush1.msra.mxu0 %v946
    %1884 = vmatprep.subr.mxu0 %v955
    %1885 = vmatpush1.msra.mxu0 %v954
    %1886 = vmatprep.subr.mxu0 %v963
    %1887 = vmatpush1.msra.mxu0 %v962
    %1888 = vmatprep.subr.mxu0 %v971
    %1889 = vmatpush1.msra.mxu0 %v970
    %1890 = vmatprep.mubr.f32.mxu0 %v1634
    %1891 = vmatmul.mubr.f32.gmra.mrb[0].mxu0 %v1683
    %v1892 = vpop.f32.mrb[0].mxu0
    %v1893 = vadd.f32 0.0, %v1892
    %v1894 = vpop.f32.mrb[0].mxu0
    %v1895 = vadd.f32 0.0, %v1894
    %1896 = vdwg.mxu0
    %1897 = vmatprep.subr.mxu0 %v725
    %1898 = vmatpush1.msra.mxu0 %v724
    %1899 = vmatprep.subr.mxu0 %v733
    %1900 = vmatpush1.msra.mxu0 %v732
    %1901 = vmatprep.subr.mxu0 %v741
    %1902 = vmatpush1.msra.mxu0 %v740
    %1903 = vmatprep.subr.mxu0 %v749
    %1904 = vmatpush1.msra.mxu0 %v748
    %1905 = vmatprep.subr.mxu0 %v757
    %1906 = vmatpush1.msra.mxu0 %v756
    %1907 = vmatprep.subr.mxu0 %v765
    %1908 = vmatpush1.msra.mxu0 %v764
    %1909 = vmatprep.subr.mxu0 %v773
    %1910 = vmatpush1.msra.mxu0 %v772
    %1911 = vmatprep.subr.mxu0 %v781
    %1912 = vmatpush1.msra.mxu0 %v780
    %1913 = vmatprep.subr.mxu0 %v789
    %1914 = vmatpush1.msra.mxu0 %v788
    %1915 = vmatprep.subr.mxu0 %v797
    %1916 = vmatpush1.msra.mxu0 %v796
    %1917 = vmatprep.subr.mxu0 %v805
    %1918 = vmatpush1.msra.mxu0 %v804
    %1919 = vmatprep.subr.mxu0 %v813
    %1920 = vmatpush1.msra.mxu0 %v812
    %1921 = vmatprep.subr.mxu0 %v821
    %1922 = vmatpush1.msra.mxu0 %v820
    %1923 = vmatprep.subr.mxu0 %v829
    %1924 = vmatpush1.msra.mxu0 %v828
    %1925 = vmatprep.subr.mxu0 %v837
    %1926 = vmatpush1.msra.mxu0 %v836
    %1927 = vmatprep.subr.mxu0 %v845
    %1928 = vmatpush1.msra.mxu0 %v844
    %1929 = vmatprep.subr.mxu0 %v853
    %1930 = vmatpush1.msra.mxu0 %v852
    %1931 = vmatprep.subr.mxu0 %v861
    %1932 = vmatpush1.msra.mxu0 %v860
    %1933 = vmatprep.subr.mxu0 %v869
    %1934 = vmatpush1.msra.mxu0 %v868
    %1935 = vmatprep.subr.mxu0 %v877
    %1936 = vmatpush1.msra.mxu0 %v876
    %1937 = vmatprep.subr.mxu0 %v885
    %1938 = vmatpush1.msra.mxu0 %v884
    %1939 = vmatprep.subr.mxu0 %v893
    %1940 = vmatpush1.msra.mxu0 %v892
    %1941 = vmatprep.subr.mxu0 %v901
    %1942 = vmatpush1.msra.mxu0 %v900
    %1943 = vmatprep.subr.mxu0 %v909
    %1944 = vmatpush1.msra.mxu0 %v908
    %1945 = vmatprep.subr.mxu0 %v917
    %1946 = vmatpush1.msra.mxu0 %v916
    %1947 = vmatprep.subr.mxu0 %v925
    %1948 = vmatpush1.msra.mxu0 %v924
    %1949 = vmatprep.subr.mxu0 %v933
    %1950 = vmatpush1.msra.mxu0 %v932
    %1951 = vmatprep.subr.mxu0 %v941
    %1952 = vmatpush1.msra.mxu0 %v940
    %1953 = vmatprep.subr.mxu0 %v949
    %1954 = vmatpush1.msra.mxu0 %v948
    %1955 = vmatprep.subr.mxu0 %v957
    %1956 = vmatpush1.msra.mxu0 %v956
    %1957 = vmatprep.subr.mxu0 %v965
    %1958 = vmatpush1.msra.mxu0 %v964
    %1959 = vmatprep.subr.mxu0 %v973
    %1960 = vmatpush1.msra.mxu0 %v972
    %1961 = vmatprep.mubr.f32.mxu0 %v1634
    %1962 = vmatmul.mubr.f32.gmra.mrb[0].mxu0 %v1683
    %v1963 = vpop.f32.mrb[0].mxu0
    %v1964 = vadd.f32 0.0, %v1963
    %v1965 = vpop.f32.mrb[0].mxu0
    %v1966 = vadd.f32 0.0, %v1965
    %1967 = vdwg.mxu0
    %v1968 = vadd.f32 %v1751, %v683
    %v1969 = vadd.f32 %v1753, %v687
    %v1970 = vadd.f32 %v1822, %v691
    %v1971 = vadd.f32 %v1824, %v695
    %v1972 = vmul.f32 %v1968, 0.5
    %v1973 = vtanh.pop %v1972
    %v1974 = vmul.f32 %v1973, 0.5
    %v1975 = vadd.f32 %v1974, 0.5
    %v1976 = vmul.f32 %v1969, 0.5
    %v1977 = vtanh.pop %v1976
    %v1978 = vmul.f32 %v1977, 0.5
    %v1979 = vadd.f32 %v1978, 0.5
    %v1980 = vtanh.pop %v1970
    %v1981 = vmul.f32 %v1971, 0.5
    %v1982 = vtanh.pop %v1981
    %v1983 = vmul.f32 %v1982, 0.5
    %v1984 = vadd.f32 %v1983, 0.5
    %v1985 = vmul.f32 %v1979, %v1632
    %v1986 = vmul.f32 %v1975, %v1980
    %v1987 = vadd.f32 %v1985, %v1986
    %v1988 = vtanh.pop %v1987
    %v1989 = vmul.f32 %v1984, %v1988
    %v1990 = vld [vmem:[%s424] sm:$0xff]
    %v1995 = vcombine.low %v1893, %v1895
    %v1996 = vcombine.low %v1964, %v1966
    %v1998 = vunpack.c.l.s4 1983009808
    %v1999 = vunpack.c.0.s8 %v1998
    %v2000 = vlaneseq
    %v2001 = vshrl.u32 %v2000, 7
    %v2002 = vsub.s32 %v1999, %v2001
    %v2003 = vrot.slane %v1995, %v2002
    %v2005 = vunpack.c.l.s4 1983009808
    %v2006 = vunpack.c.0.s8 %v2005
    %v2007 = vlaneseq
    %v2008 = vshrl.u32 %v2007, 7
    %v2009 = vsub.s32 %v2006, %v2008
    %v2010 = vrot.slane %v1996, %v2009
    %v2011 = vcombine.low %v2003, %v2010
    %v2013 = vadd.f32 %v1990, %v2011
    %v2014 = vmul.f32 %v2013, 0.5
    %v2015 = vtanh.pop %v2014
    %v2016 = vmul.f32 %v2015, 0.5
    %v2017 = vadd.f32 %v2016, 0.5
    %v2019 = vrot.slane %v2013, 2
    %v2021 = vmul.f32 %v2019, 0.5
    %v2022 = vtanh.pop %v2021
    %v2023 = vmul.f32 %v2022, 0.5
    %v2024 = vadd.f32 %v2023, 0.5
    %v2025 = vrot.slane %v2013, 4
    %v2027 = vtanh.pop %v2025
    %v2028 = vrot.slane %v2013, 6
    %v2030 = vmul.f32 %v2028, 0.5
    %v2031 = vtanh.pop %v2030
    %v2032 = vmul.f32 %v2031, 0.5
    %v2033 = vadd.f32 %v2032, 0.5
    %v2034 = vmul.f32 %v2024, %v1681
    %v2035 = vmul.f32 %v2017, %v2027
    %v2036 = vadd.f32 %v2034, %v2035
    %v2037 = vtanh.pop %v2036
    %v2038 = vmul.f32 %v2033, %v2037
    %2039 = vmatprep.subr.mxu0 %v719
    %2040 = vmatpush1.msra.mxu0 %v718
    %2041 = vmatprep.subr.mxu0 %v727
    %2042 = vmatpush1.msra.mxu0 %v726
    %2043 = vmatprep.subr.mxu0 %v735
    %2044 = vmatpush1.msra.mxu0 %v734
    %2045 = vmatprep.subr.mxu0 %v743
    %2046 = vmatpush1.msra.mxu0 %v742
    %2047 = vmatprep.subr.mxu0 %v751
    %2048 = vmatpush1.msra.mxu0 %v750
    %2049 = vmatprep.subr.mxu0 %v759
    %2050 = vmatpush1.msra.mxu0 %v758
    %2051 = vmatprep.subr.mxu0 %v767
    %2052 = vmatpush1.msra.mxu0 %v766
    %2053 = vmatprep.subr.mxu0 %v775
    %2054 = vmatpush1.msra.mxu0 %v774
    %2055 = vmatprep.subr.mxu0 %v783
    %2056 = vmatpush1.msra.mxu0 %v782
    %2057 = vmatprep.subr.mxu0 %v791
    %2058 = vmatpush1.msra.mxu0 %v790
    %2059 = vmatprep.subr.mxu0 %v799
    %2060 = vmatpush1.msra.mxu0 %v798
    %2061 = vmatprep.subr.mxu0 %v807
    %2062 = vmatpush1.msra.mxu0 %v806
    %2063 = vmatprep.subr.mxu0 %v815
    %2064 = vmatpush1.msra.mxu0 %v814
    %2065 = vmatprep.subr.mxu0 %v823
    %2066 = vmatpush1.msra.mxu0 %v822
    %2067 = vmatprep.subr.mxu0 %v831
    %2068 = vmatpush1.msra.mxu0 %v830
    %2069 = vmatprep.subr.mxu0 %v839
    %2070 = vmatpush1.msra.mxu0 %v838
    %2071 = vmatprep.subr.mxu0 %v847
    %2072 = vmatpush1.msra.mxu0 %v846
    %2073 = vmatprep.subr.mxu0 %v855
    %2074 = vmatpush1.msra.mxu0 %v854
    %2075 = vmatprep.subr.mxu0 %v863
    %2076 = vmatpush1.msra.mxu0 %v862
    %2077 = vmatprep.subr.mxu0 %v871
    %2078 = vmatpush1.msra.mxu0 %v870
    %2079 = vmatprep.subr.mxu0 %v879
    %2080 = vmatpush1.msra.mxu0 %v878
    %2081 = vmatprep.subr.mxu0 %v887
    %2082 = vmatpush1.msra.mxu0 %v886
    %2083 = vmatprep.subr.mxu0 %v895
    %2084 = vmatpush1.msra.mxu0 %v894
    %2085 = vmatprep.subr.mxu0 %v903
    %2086 = vmatpush1.msra.mxu0 %v902
    %2087 = vmatprep.subr.mxu0 %v911
    %2088 = vmatpush1.msra.mxu0 %v910
    %2089 = vmatprep.subr.mxu0 %v919
    %2090 = vmatpush1.msra.mxu0 %v918
    %2091 = vmatprep.subr.mxu0 %v927
    %2092 = vmatpush1.msra.mxu0 %v926
    %2093 = vmatprep.subr.mxu0 %v935
    %2094 = vmatpush1.msra.mxu0 %v934
    %2095 = vmatprep.subr.mxu0 %v943
    %2096 = vmatpush1.msra.mxu0 %v942
    %2097 = vmatprep.subr.mxu0 %v951
    %2098 = vmatpush1.msra.mxu0 %v950
    %2099 = vmatprep.subr.mxu0 %v959
    %2100 = vmatpush1.msra.mxu0 %v958
    %2101 = vmatprep.subr.mxu0 %v967
    %2102 = vmatpush1.msra.mxu0 %v966
    %2103 = vmatprep.mubr.f32.mxu0 %v1989
    %2104 = vmatmul.mubr.f32.gmra.mrb[0].mxu0 %v2038
    %v2105 = vpop.f32.mrb[0].mxu0
    %v2106 = vadd.f32 0.0, %v2105
    %v2107 = vpop.f32.mrb[0].mxu0
    %v2108 = vadd.f32 0.0, %v2107
    %2109 = vdwg.mxu0
    %2110 = vmatprep.subr.mxu0 %v721
    %2111 = vmatpush1.msra.mxu0 %v720
    %2112 = vmatprep.subr.mxu0 %v729
    %2113 = vmatpush1.msra.mxu0 %v728
    %2114 = vmatprep.subr.mxu0 %v737
    %2115 = vmatpush1.msra.mxu0 %v736
    %2116 = vmatprep.subr.mxu0 %v745
    %2117 = vmatpush1.msra.mxu0 %v744
    %2118 = vmatprep.subr.mxu0 %v753
    %2119 = vmatpush1.msra.mxu0 %v752
    %2120 = vmatprep.subr.mxu0 %v761
    %2121 = vmatpush1.msra.mxu0 %v760
    %2122 = vmatprep.subr.mxu0 %v769
    %2123 = vmatpush1.msra.mxu0 %v768
    %2124 = vmatprep.subr.mxu0 %v777
    %2125 = vmatpush1.msra.mxu0 %v776
    %2126 = vmatprep.subr.mxu0 %v785
    %2127 = vmatpush1.msra.mxu0 %v784
    %2128 = vmatprep.subr.mxu0 %v793
    %2129 = vmatpush1.msra.mxu0 %v792
    %2130 = vmatprep.subr.mxu0 %v801
    %2131 = vmatpush1.msra.mxu0 %v800
    %2132 = vmatprep.subr.mxu0 %v809
    %2133 = vmatpush1.msra.mxu0 %v808
    %2134 = vmatprep.subr.mxu0 %v817
    %2135 = vmatpush1.msra.mxu0 %v816
    %2136 = vmatprep.subr.mxu0 %v825
    %2137 = vmatpush1.msra.mxu0 %v824
    %2138 = vmatprep.subr.mxu0 %v833
    %2139 = vmatpush1.msra.mxu0 %v832
    %2140 = vmatprep.subr.mxu0 %v841
    %2141 = vmatpush1.msra.mxu0 %v840
    %2142 = vmatprep.subr.mxu0 %v849
    %2143 = vmatpush1.msra.mxu0 %v848
    %2144 = vmatprep.subr.mxu0 %v857
    %2145 = vmatpush1.msra.mxu0 %v856
    %2146 = vmatprep.subr.mxu0 %v865
    %2147 = vmatpush1.msra.mxu0 %v864
    %2148 = vmatprep.subr.mxu0 %v873
    %2149 = vmatpush1.msra.mxu0 %v872
    %2150 = vmatprep.subr.mxu0 %v881
    %2151 = vmatpush1.msra.mxu0 %v880
    %2152 = vmatprep.subr.mxu0 %v889
    %2153 = vmatpush1.msra.mxu0 %v888
    %2154 = vmatprep.subr.mxu0 %v897
    %2155 = vmatpush1.msra.mxu0 %v896
    %2156 = vmatprep.subr.mxu0 %v905
    %2157 = vmatpush1.msra.mxu0 %v904
    %2158 = vmatprep.subr.mxu0 %v913
    %2159 = vmatpush1.msra.mxu0 %v912
    %2160 = vmatprep.subr.mxu0 %v921
    %2161 = vmatpush1.msra.mxu0 %v920
    %2162 = vmatprep.subr.mxu0 %v929
    %2163 = vmatpush1.msra.mxu0 %v928
    %2164 = vmatprep.subr.mxu0 %v937
    %2165 = vmatpush1.msra.mxu0 %v936
    %2166 = vmatprep.subr.mxu0 %v945
    %2167 = vmatpush1.msra.mxu0 %v944
    %2168 = vmatprep.subr.mxu0 %v953
    %2169 = vmatpush1.msra.mxu0 %v952
    %2170 = vmatprep.subr.mxu0 %v961
    %2171 = vmatpush1.msra.mxu0 %v960
    %2172 = vmatprep.subr.mxu0 %v969
    %2173 = vmatpush1.msra.mxu0 %v968
    %2174 = vmatprep.mubr.f32.mxu0 %v1989
    %2175 = vmatmul.mubr.f32.gmra.mrb[0].mxu0 %v2038
    %v2176 = vpop.f32.mrb[0].mxu0
    %v2177 = vadd.f32 0.0, %v2176
    %v2178 = vpop.f32.mrb[0].mxu0
    %v2179 = vadd.f32 0.0, %v2178
    %2180 = vdwg.mxu0
    %2181 = vmatprep.subr.mxu0 %v723
    %2182 = vmatpush1.msra.mxu0 %v722
    %2183 = vmatprep.subr.mxu0 %v731
    %2184 = vmatpush1.msra.mxu0 %v730
    %2185 = vmatprep.subr.mxu0 %v739
    %2186 = vmatpush1.msra.mxu0 %v738
    %2187 = vmatprep.subr.mxu0 %v747
    %2188 = vmatpush1.msra.mxu0 %v746
    %2189 = vmatprep.subr.mxu0 %v755
    %2190 = vmatpush1.msra.mxu0 %v754
    %2191 = vmatprep.subr.mxu0 %v763
    %2192 = vmatpush1.msra.mxu0 %v762
    %2193 = vmatprep.subr.mxu0 %v771
    %2194 = vmatpush1.msra.mxu0 %v770
    %2195 = vmatprep.subr.mxu0 %v779
    %2196 = vmatpush1.msra.mxu0 %v778
    %2197 = vmatprep.subr.mxu0 %v787
    %2198 = vmatpush1.msra.mxu0 %v786
    %2199 = vmatprep.subr.mxu0 %v795
    %2200 = vmatpush1.msra.mxu0 %v794
    %2201 = vmatprep.subr.mxu0 %v803
    %2202 = vmatpush1.msra.mxu0 %v802
    %2203 = vmatprep.subr.mxu0 %v811
    %2204 = vmatpush1.msra.mxu0 %v810
    %2205 = vmatprep.subr.mxu0 %v819
    %2206 = vmatpush1.msra.mxu0 %v818
    %2207 = vmatprep.subr.mxu0 %v827
    %2208 = vmatpush1.msra.mxu0 %v826
    %2209 = vmatprep.subr.mxu0 %v835
    %2210 = vmatpush1.msra.mxu0 %v834
    %2211 = vmatprep.subr.mxu0 %v843
    %2212 = vmatpush1.msra.mxu0 %v842
    %2213 = vmatprep.subr.mxu0 %v851
    %2214 = vmatpush1.msra.mxu0 %v850
    %2215 = vmatprep.subr.mxu0 %v859
    %2216 = vmatpush1.msra.mxu0 %v858
    %2217 = vmatprep.subr.mxu0 %v867
    %2218 = vmatpush1.msra.mxu0 %v866
    %2219 = vmatprep.subr.mxu0 %v875
    %2220 = vmatpush1.msra.mxu0 %v874
    %2221 = vmatprep.subr.mxu0 %v883
    %2222 = vmatpush1.msra.mxu0 %v882
    %2223 = vmatprep.subr.mxu0 %v891
    %2224 = vmatpush1.msra.mxu0 %v890
    %2225 = vmatprep.subr.mxu0 %v899
    %2226 = vmatpush1.msra.mxu0 %v898
    %2227 = vmatprep.subr.mxu0 %v907
    %2228 = vmatpush1.msra.mxu0 %v906
    %2229 = vmatprep.subr.mxu0 %v915
    %2230 = vmatpush1.msra.mxu0 %v914
    %2231 = vmatprep.subr.mxu0 %v923
    %2232 = vmatpush1.msra.mxu0 %v922
    %2233 = vmatprep.subr.mxu0 %v931
    %2234 = vmatpush1.msra.mxu0 %v930
    %2235 = vmatprep.subr.mxu0 %v939
    %2236 = vmatpush1.msra.mxu0 %v938
    %2237 = vmatprep.subr.mxu0 %v947
    %2238 = vmatpush1.msra.mxu0 %v946
    %2239 = vmatprep.subr.mxu0 %v955
    %2240 = vmatpush1.msra.mxu0 %v954
    %2241 = vmatprep.subr.mxu0 %v963
    %2242 = vmatpush1.msra.mxu0 %v962
    %2243 = vmatprep.subr.mxu0 %v971
    %2244 = vmatpush1.msra.mxu0 %v970
    %2245 = vmatprep.mubr.f32.mxu0 %v1989
    %2246 = vmatmul.mubr.f32.gmra.mrb[0].mxu0 %v2038
    %v2247 = vpop.f32.mrb[0].mxu0
    %v2248 = vadd.f32 0.0, %v2247
    %v2249 = vpop.f32.mrb[0].mxu0
    %v2250 = vadd.f32 0.0, %v2249
    %2251 = vdwg.mxu0
    %2252 = vmatprep.subr.mxu0 %v725
    %2253 = vmatpush1.msra.mxu0 %v724
    %2254 = vmatprep.subr.mxu0 %v733
    %2255 = vmatpush1.msra.mxu0 %v732
    %2256 = vmatprep.subr.mxu0 %v741
    %2257 = vmatpush1.msra.mxu0 %v740
    %2258 = vmatprep.subr.mxu0 %v749
    %2259 = vmatpush1.msra.mxu0 %v748
    %2260 = vmatprep.subr.mxu0 %v757
    %2261 = vmatpush1.msra.mxu0 %v756
    %2262 = vmatprep.subr.mxu0 %v765
    %2263 = vmatpush1.msra.mxu0 %v764
    %2264 = vmatprep.subr.mxu0 %v773
    %2265 = vmatpush1.msra.mxu0 %v772
    %2266 = vmatprep.subr.mxu0 %v781
    %2267 = vmatpush1.msra.mxu0 %v780
    %2268 = vmatprep.subr.mxu0 %v789
    %2269 = vmatpush1.msra.mxu0 %v788
    %2270 = vmatprep.subr.mxu0 %v797
    %2271 = vmatpush1.msra.mxu0 %v796
    %2272 = vmatprep.subr.mxu0 %v805
    %2273 = vmatpush1.msra.mxu0 %v804
    %2274 = vmatprep.subr.mxu0 %v813
    %2275 = vmatpush1.msra.mxu0 %v812
    %2276 = vmatprep.subr.mxu0 %v821
    %2277 = vmatpush1.msra.mxu0 %v820
    %2278 = vmatprep.subr.mxu0 %v829
    %2279 = vmatpush1.msra.mxu0 %v828
    %2280 = vmatprep.subr.mxu0 %v837
    %2281 = vmatpush1.msra.mxu0 %v836
    %2282 = vmatprep.subr.mxu0 %v845
    %2283 = vmatpush1.msra.mxu0 %v844
    %2284 = vmatprep.subr.mxu0 %v853
    %2285 = vmatpush1.msra.mxu0 %v852
    %2286 = vmatprep.subr.mxu0 %v861
    %2287 = vmatpush1.msra.mxu0 %v860
    %2288 = vmatprep.subr.mxu0 %v869
    %2289 = vmatpush1.msra.mxu0 %v868
    %2290 = vmatprep.subr.mxu0 %v877
    %2291 = vmatpush1.msra.mxu0 %v876
    %2292 = vmatprep.subr.mxu0 %v885
    %2293 = vmatpush1.msra.mxu0 %v884
    %2294 = vmatprep.subr.mxu0 %v893
    %2295 = vmatpush1.msra.mxu0 %v892
    %2296 = vmatprep.subr.mxu0 %v901
    %2297 = vmatpush1.msra.mxu0 %v900
    %2298 = vmatprep.subr.mxu0 %v909
    %2299 = vmatpush1.msra.mxu0 %v908
    %2300 = vmatprep.subr.mxu0 %v917
    %2301 = vmatpush1.msra.mxu0 %v916
    %2302 = vmatprep.subr.mxu0 %v925
    %2303 = vmatpush1.msra.mxu0 %v924
    %2304 = vmatprep.subr.mxu0 %v933
    %2305 = vmatpush1.msra.mxu0 %v932
    %2306 = vmatprep.subr.mxu0 %v941
    %2307 = vmatpush1.msra.mxu0 %v940
    %2308 = vmatprep.subr.mxu0 %v949
    %2309 = vmatpush1.msra.mxu0 %v948
    %2310 = vmatprep.subr.mxu0 %v957
    %2311 = vmatpush1.msra.mxu0 %v956
    %2312 = vmatprep.subr.mxu0 %v965
    %2313 = vmatpush1.msra.mxu0 %v964
    %2314 = vmatprep.subr.mxu0 %v973
    %2315 = vmatpush1.msra.mxu0 %v972
    %2316 = vmatprep.mubr.f32.mxu0 %v1989
    %2317 = vmatmul.mubr.f32.gmra.mrb[0].mxu0 %v2038
    %v2318 = vpop.f32.mrb[0].mxu0
    %v2319 = vadd.f32 0.0, %v2318
    %v2320 = vpop.f32.mrb[0].mxu0
    %v2321 = vadd.f32 0.0, %v2320
    %2322 = vdwg.mxu0
    %v2323 = vadd.f32 %v2106, %v683
    %v2324 = vadd.f32 %v2108, %v687
    %v2325 = vadd.f32 %v2177, %v691
    %v2326 = vadd.f32 %v2179, %v695
    %v2327 = vmul.f32 %v2323, 0.5
    %v2328 = vtanh.pop %v2327
    %v2329 = vmul.f32 %v2328, 0.5
    %v2330 = vadd.f32 %v2329, 0.5
    %v2331 = vmul.f32 %v2324, 0.5
    %v2332 = vtanh.pop %v2331
    %v2333 = vmul.f32 %v2332, 0.5
    %v2334 = vadd.f32 %v2333, 0.5
    %v2335 = vtanh.pop %v2325
    %v2336 = vmul.f32 %v2326, 0.5
    %v2337 = vtanh.pop %v2336
    %v2338 = vmul.f32 %v2337, 0.5
    %v2339 = vadd.f32 %v2338, 0.5
    %v2340 = vmul.f32 %v2334, %v1987
    %v2341 = vmul.f32 %v2330, %v2335
    %v2342 = vadd.f32 %v2340, %v2341
    %v2343 = vtanh.pop %v2342
    %v2344 = vmul.f32 %v2339, %v2343
    %v2345 = vld [vmem:[%s487] sm:$0xff]
    %v2350 = vcombine.low %v2248, %v2250
    %v2351 = vcombine.low %v2319, %v2321
    %v2353 = vunpack.c.l.s4 1983009808
    %v2354 = vunpack.c.0.s8 %v2353
    %v2355 = vlaneseq
    %v2356 = vshrl.u32 %v2355, 7
    %v2357 = vsub.s32 %v2354, %v2356
    %v2358 = vrot.slane %v2350, %v2357
    %v2360 = vunpack.c.l.s4 1983009808
    %v2361 = vunpack.c.0.s8 %v2360
    %v2362 = vlaneseq
    %v2363 = vshrl.u32 %v2362, 7
    %v2364 = vsub.s32 %v2361, %v2363
    %v2365 = vrot.slane %v2351, %v2364
    %v2366 = vcombine.low %v2358, %v2365
    %v2368 = vadd.f32 %v2345, %v2366
    %v2369 = vmul.f32 %v2368, 0.5
    %v2370 = vtanh.pop %v2369
    %v2371 = vmul.f32 %v2370, 0.5
    %v2372 = vadd.f32 %v2371, 0.5
    %v2374 = vrot.slane %v2368, 2
    %v2376 = vmul.f32 %v2374, 0.5
    %v2377 = vtanh.pop %v2376
    %v2378 = vmul.f32 %v2377, 0.5
    %v2379 = vadd.f32 %v2378, 0.5
    %v2380 = vrot.slane %v2368, 4
    %v2382 = vtanh.pop %v2380
    %v2383 = vrot.slane %v2368, 6
    %v2385 = vmul.f32 %v2383, 0.5
    %v2386 = vtanh.pop %v2385
    %v2387 = vmul.f32 %v2386, 0.5
    %v2388 = vadd.f32 %v2387, 0.5
    %v2389 = vmul.f32 %v2379, %v2036
    %v2390 = vmul.f32 %v2372, %v2382
    %v2391 = vadd.f32 %v2389, %v2390
    %v2392 = vtanh.pop %v2391
    %v2393 = vmul.f32 %v2388, %v2392
    %2394 = vmatprep.subr.mxu0 %v719
    %2395 = vmatpush1.msra.mxu0 %v718
    %2396 = vmatprep.subr.mxu0 %v727
    %2397 = vmatpush1.msra.mxu0 %v726
    %2398 = vmatprep.subr.mxu0 %v735
    %2399 = vmatpush1.msra.mxu0 %v734
    %2400 = vmatprep.subr.mxu0 %v743
    %2401 = vmatpush1.msra.mxu0 %v742
    %2402 = vmatprep.subr.mxu0 %v751
    %2403 = vmatpush1.msra.mxu0 %v750
    %2404 = vmatprep.subr.mxu0 %v759
    %2405 = vmatpush1.msra.mxu0 %v758
    %2406 = vmatprep.subr.mxu0 %v767
    %2407 = vmatpush1.msra.mxu0 %v766
    %2408 = vmatprep.subr.mxu0 %v775
    %2409 = vmatpush1.msra.mxu0 %v774
    %2410 = vmatprep.subr.mxu0 %v783
    %2411 = vmatpush1.msra.mxu0 %v782
    %2412 = vmatprep.subr.mxu0 %v791
    %2413 = vmatpush1.msra.mxu0 %v790
    %2414 = vmatprep.subr.mxu0 %v799
    %2415 = vmatpush1.msra.mxu0 %v798
    %2416 = vmatprep.subr.mxu0 %v807
    %2417 = vmatpush1.msra.mxu0 %v806
    %2418 = vmatprep.subr.mxu0 %v815
    %2419 = vmatpush1.msra.mxu0 %v814
    %2420 = vmatprep.subr.mxu0 %v823
    %2421 = vmatpush1.msra.mxu0 %v822
    %2422 = vmatprep.subr.mxu0 %v831
    %2423 = vmatpush1.msra.mxu0 %v830
    %2424 = vmatprep.subr.mxu0 %v839
    %2425 = vmatpush1.msra.mxu0 %v838
    %2426 = vmatprep.subr.mxu0 %v847
    %2427 = vmatpush1.msra.mxu0 %v846
    %2428 = vmatprep.subr.mxu0 %v855
    %2429 = vmatpush1.msra.mxu0 %v854
    %2430 = vmatprep.subr.mxu0 %v863
    %2431 = vmatpush1.msra.mxu0 %v862
    %2432 = vmatprep.subr.mxu0 %v871
    %2433 = vmatpush1.msra.mxu0 %v870
    %2434 = vmatprep.subr.mxu0 %v879
    %2435 = vmatpush1.msra.mxu0 %v878
    %2436 = vmatprep.subr.mxu0 %v887
    %2437 = vmatpush1.msra.mxu0 %v886
    %2438 = vmatprep.subr.mxu0 %v895
    %2439 = vmatpush1.msra.mxu0 %v894
    %2440 = vmatprep.subr.mxu0 %v903
    %2441 = vmatpush1.msra.mxu0 %v902
    %2442 = vmatprep.subr.mxu0 %v911
    %2443 = vmatpush1.msra.mxu0 %v910
    %2444 = vmatprep.subr.mxu0 %v919
    %2445 = vmatpush1.msra.mxu0 %v918
    %2446 = vmatprep.subr.mxu0 %v927
    %2447 = vmatpush1.msra.mxu0 %v926
    %2448 = vmatprep.subr.mxu0 %v935
    %2449 = vmatpush1.msra.mxu0 %v934
    %2450 = vmatprep.subr.mxu0 %v943
    %2451 = vmatpush1.msra.mxu0 %v942
    %2452 = vmatprep.subr.mxu0 %v951
    %2453 = vmatpush1.msra.mxu0 %v950
    %2454 = vmatprep.subr.mxu0 %v959
    %2455 = vmatpush1.msra.mxu0 %v958
    %2456 = vmatprep.subr.mxu0 %v967
    %2457 = vmatpush1.msra.mxu0 %v966
    %2458 = vmatprep.mubr.f32.mxu0 %v2344
    %2459 = vmatmul.mubr.f32.gmra.mrb[0].mxu0 %v2393
    %v2460 = vpop.f32.mrb[0].mxu0
    %v2461 = vadd.f32 0.0, %v2460
    %v2462 = vpop.f32.mrb[0].mxu0
    %v2463 = vadd.f32 0.0, %v2462
    %2464 = vdwg.mxu0
    %2465 = vmatprep.subr.mxu0 %v721
    %2466 = vmatpush1.msra.mxu0 %v720
    %2467 = vmatprep.subr.mxu0 %v729
    %2468 = vmatpush1.msra.mxu0 %v728
    %2469 = vmatprep.subr.mxu0 %v737
    %2470 = vmatpush1.msra.mxu0 %v736
    %2471 = vmatprep.subr.mxu0 %v745
    %2472 = vmatpush1.msra.mxu0 %v744
    %2473 = vmatprep.subr.mxu0 %v753
    %2474 = vmatpush1.msra.mxu0 %v752
    %2475 = vmatprep.subr.mxu0 %v761
    %2476 = vmatpush1.msra.mxu0 %v760
    %2477 = vmatprep.subr.mxu0 %v769
    %2478 = vmatpush1.msra.mxu0 %v768
    %2479 = vmatprep.subr.mxu0 %v777
    %2480 = vmatpush1.msra.mxu0 %v776
    %2481 = vmatprep.subr.mxu0 %v785
    %2482 = vmatpush1.msra.mxu0 %v784
    %2483 = vmatprep.subr.mxu0 %v793
    %2484 = vmatpush1.msra.mxu0 %v792
    %2485 = vmatprep.subr.mxu0 %v801
    %2486 = vmatpush1.msra.mxu0 %v800
    %2487 = vmatprep.subr.mxu0 %v809
    %2488 = vmatpush1.msra.mxu0 %v808
    %2489 = vmatprep.subr.mxu0 %v817
    %2490 = vmatpush1.msra.mxu0 %v816
    %2491 = vmatprep.subr.mxu0 %v825
    %2492 = vmatpush1.msra.mxu0 %v824
    %2493 = vmatprep.subr.mxu0 %v833
    %2494 = vmatpush1.msra.mxu0 %v832
    %2495 = vmatprep.subr.mxu0 %v841
    %2496 = vmatpush1.msra.mxu0 %v840
    %2497 = vmatprep.subr.mxu0 %v849
    %2498 = vmatpush1.msra.mxu0 %v848
    %2499 = vmatprep.subr.mxu0 %v857
    %2500 = vmatpush1.msra.mxu0 %v856
    %2501 = vmatprep.subr.mxu0 %v865
    %2502 = vmatpush1.msra.mxu0 %v864
    %2503 = vmatprep.subr.mxu0 %v873
    %2504 = vmatpush1.msra.mxu0 %v872
    %2505 = vmatprep.subr.mxu0 %v881
    %2506 = vmatpush1.msra.mxu0 %v880
    %2507 = vmatprep.subr.mxu0 %v889
    %2508 = vmatpush1.msra.mxu0 %v888
    %2509 = vmatprep.subr.mxu0 %v897
    %2510 = vmatpush1.msra.mxu0 %v896
    %2511 = vmatprep.subr.mxu0 %v905
    %2512 = vmatpush1.msra.mxu0 %v904
    %2513 = vmatprep.subr.mxu0 %v913
    %2514 = vmatpush1.msra.mxu0 %v912
    %2515 = vmatprep.subr.mxu0 %v921
    %2516 = vmatpush1.msra.mxu0 %v920
    %2517 = vmatprep.subr.mxu0 %v929
    %2518 = vmatpush1.msra.mxu0 %v928
    %2519 = vmatprep.subr.mxu0 %v937
    %2520 = vmatpush1.msra.mxu0 %v936
    %2521 = vmatprep.subr.mxu0 %v945
    %2522 = vmatpush1.msra.mxu0 %v944
    %2523 = vmatprep.subr.mxu0 %v953
    %2524 = vmatpush1.msra.mxu0 %v952
    %2525 = vmatprep.subr.mxu0 %v961
    %2526 = vmatpush1.msra.mxu0 %v960
    %2527 = vmatprep.subr.mxu0 %v969
    %2528 = vmatpush1.msra.mxu0 %v968
    %2529 = vmatprep.mubr.f32.mxu0 %v2344
    %2530 = vmatmul.mubr.f32.gmra.mrb[0].mxu0 %v2393
    %v2531 = vpop.f32.mrb[0].mxu0
    %v2532 = vadd.f32 0.0, %v2531
    %v2533 = vpop.f32.mrb[0].mxu0
    %v2534 = vadd.f32 0.0, %v2533
    %2535 = vdwg.mxu0
    %2536 = vmatprep.subr.mxu0 %v723
    %2537 = vmatpush1.msra.mxu0 %v722
    %2538 = vmatprep.subr.mxu0 %v731
    %2539 = vmatpush1.msra.mxu0 %v730
    %2540 = vmatprep.subr.mxu0 %v739
    %2541 = vmatpush1.msra.mxu0 %v738
    %2542 = vmatprep.subr.mxu0 %v747
    %2543 = vmatpush1.msra.mxu0 %v746
    %2544 = vmatprep.subr.mxu0 %v755
    %2545 = vmatpush1.msra.mxu0 %v754
    %2546 = vmatprep.subr.mxu0 %v763
    %2547 = vmatpush1.msra.mxu0 %v762
    %2548 = vmatprep.subr.mxu0 %v771
    %2549 = vmatpush1.msra.mxu0 %v770
    %2550 = vmatprep.subr.mxu0 %v779
    %2551 = vmatpush1.msra.mxu0 %v778
    %2552 = vmatprep.subr.mxu0 %v787
    %2553 = vmatpush1.msra.mxu0 %v786
    %2554 = vmatprep.subr.mxu0 %v795
    %2555 = vmatpush1.msra.mxu0 %v794
    %2556 = vmatprep.subr.mxu0 %v803
    %2557 = vmatpush1.msra.mxu0 %v802
    %2558 = vmatprep.subr.mxu0 %v811
    %2559 = vmatpush1.msra.mxu0 %v810
    %2560 = vmatprep.subr.mxu0 %v819
    %2561 = vmatpush1.msra.mxu0 %v818
    %2562 = vmatprep.subr.mxu0 %v827
    %2563 = vmatpush1.msra.mxu0 %v826
    %2564 = vmatprep.subr.mxu0 %v835
    %2565 = vmatpush1.msra.mxu0 %v834
    %2566 = vmatprep.subr.mxu0 %v843
    %2567 = vmatpush1.msra.mxu0 %v842
    %2568 = vmatprep.subr.mxu0 %v851
    %2569 = vmatpush1.msra.mxu0 %v850
    %2570 = vmatprep.subr.mxu0 %v859
    %2571 = vmatpush1.msra.mxu0 %v858
    %2572 = vmatprep.subr.mxu0 %v867
    %2573 = vmatpush1.msra.mxu0 %v866
    %2574 = vmatprep.subr.mxu0 %v875
    %2575 = vmatpush1.msra.mxu0 %v874
    %2576 = vmatprep.subr.mxu0 %v883
    %2577 = vmatpush1.msra.mxu0 %v882
    %2578 = vmatprep.subr.mxu0 %v891
    %2579 = vmatpush1.msra.mxu0 %v890
    %2580 = vmatprep.subr.mxu0 %v899
    %2581 = vmatpush1.msra.mxu0 %v898
    %2582 = vmatprep.subr.mxu0 %v907
    %2583 = vmatpush1.msra.mxu0 %v906
    %2584 = vmatprep.subr.mxu0 %v915
    %2585 = vmatpush1.msra.mxu0 %v914
    %2586 = vmatprep.subr.mxu0 %v923
    %2587 = vmatpush1.msra.mxu0 %v922
    %2588 = vmatprep.subr.mxu0 %v931
    %2589 = vmatpush1.msra.mxu0 %v930
    %2590 = vmatprep.subr.mxu0 %v939
    %2591 = vmatpush1.msra.mxu0 %v938
    %2592 = vmatprep.subr.mxu0 %v947
    %2593 = vmatpush1.msra.mxu0 %v946
    %2594 = vmatprep.subr.mxu0 %v955
    %2595 = vmatpush1.msra.mxu0 %v954
    %2596 = vmatprep.subr.mxu0 %v963
    %2597 = vmatpush1.msra.mxu0 %v962
    %2598 = vmatprep.subr.mxu0 %v971
    %2599 = vmatpush1.msra.mxu0 %v970
    %2600 = vmatprep.mubr.f32.mxu0 %v2344
    %2601 = vmatmul.mubr.f32.gmra.mrb[0].mxu0 %v2393
    %v2602 = vpop.f32.mrb[0].mxu0
    %v2603 = vadd.f32 0.0, %v2602
    %v2604 = vpop.f32.mrb[0].mxu0
    %v2605 = vadd.f32 0.0, %v2604
    %2606 = vdwg.mxu0
    %2607 = vmatprep.subr.mxu0 %v725
    %2608 = vmatpush1.msra.mxu0 %v724
    %2609 = vmatprep.subr.mxu0 %v733
    %2610 = vmatpush1.msra.mxu0 %v732
    %2611 = vmatprep.subr.mxu0 %v741
    %2612 = vmatpush1.msra.mxu0 %v740
    %2613 = vmatprep.subr.mxu0 %v749
    %2614 = vmatpush1.msra.mxu0 %v748
    %2615 = vmatprep.subr.mxu0 %v757
    %2616 = vmatpush1.msra.mxu0 %v756
    %2617 = vmatprep.subr.mxu0 %v765
    %2618 = vmatpush1.msra.mxu0 %v764
    %2619 = vmatprep.subr.mxu0 %v773
    %2620 = vmatpush1.msra.mxu0 %v772
    %2621 = vmatprep.subr.mxu0 %v781
    %2622 = vmatpush1.msra.mxu0 %v780
    %2623 = vmatprep.subr.mxu0 %v789
    %2624 = vmatpush1.msra.mxu0 %v788
    %2625 = vmatprep.subr.mxu0 %v797
    %2626 = vmatpush1.msra.mxu0 %v796
    %2627 = vmatprep.subr.mxu0 %v805
    %2628 = vmatpush1.msra.mxu0 %v804
    %2629 = vmatprep.subr.mxu0 %v813
    %2630 = vmatpush1.msra.mxu0 %v812
    %2631 = vmatprep.subr.mxu0 %v821
    %2632 = vmatpush1.msra.mxu0 %v820
    %2633 = vmatprep.subr.mxu0 %v829
    %2634 = vmatpush1.msra.mxu0 %v828
    %2635 = vmatprep.subr.mxu0 %v837
    %2636 = vmatpush1.msra.mxu0 %v836
    %2637 = vmatprep.subr.mxu0 %v845
    %2638 = vmatpush1.msra.mxu0 %v844
    %2639 = vmatprep.subr.mxu0 %v853
    %2640 = vmatpush1.msra.mxu0 %v852
    %2641 = vmatprep.subr.mxu0 %v861
    %2642 = vmatpush1.msra.mxu0 %v860
    %2643 = vmatprep.subr.mxu0 %v869
    %2644 = vmatpush1.msra.mxu0 %v868
    %2645 = vmatprep.subr.mxu0 %v877
    %2646 = vmatpush1.msra.mxu0 %v876
    %2647 = vmatprep.subr.mxu0 %v885
    %2648 = vmatpush1.msra.mxu0 %v884
    %2649 = vmatprep.subr.mxu0 %v893
    %2650 = vmatpush1.msra.mxu0 %v892
    %2651 = vmatprep.subr.mxu0 %v901
    %2652 = vmatpush1.msra.mxu0 %v900
    %2653 = vmatprep.subr.mxu0 %v909
    %2654 = vmatpush1.msra.mxu0 %v908
    %2655 = vmatprep.subr.mxu0 %v917
    %2656 = vmatpush1.msra.mxu0 %v916
    %2657 = vmatprep.subr.mxu0 %v925
    %2658 = vmatpush1.msra.mxu0 %v924
    %2659 = vmatprep.subr.mxu0 %v933
    %2660 = vmatpush1.msra.mxu0 %v932
    %2661 = vmatprep.subr.mxu0 %v941
    %2662 = vmatpush1.msra.mxu0 %v940
    %2663 = vmatprep.subr.mxu0 %v949
    %2664 = vmatpush1.msra.mxu0 %v948
    %2665 = vmatprep.subr.mxu0 %v957
    %2666 = vmatpush1.msra.mxu0 %v956
    %2667 = vmatprep.subr.mxu0 %v965
    %2668 = vmatpush1.msra.mxu0 %v964
    %2669 = vmatprep.subr.mxu0 %v973
    %2670 = vmatpush1.msra.mxu0 %v972
    %2671 = vmatprep.mubr.f32.mxu0 %v2344
    %2672 = vmatmul.mubr.f32.gmra.mrb[0].mxu0 %v2393
    %v2673 = vpop.f32.mrb[0].mxu0
    %v2674 = vadd.f32 0.0, %v2673
    %v2675 = vpop.f32.mrb[0].mxu0
    %v2676 = vadd.f32 0.0, %v2675
    %2677 = vdwg.mxu0
    %v2678 = vadd.f32 %v2461, %v683
    %v2679 = vadd.f32 %v2463, %v687
    %v2680 = vadd.f32 %v2532, %v691
    %v2681 = vadd.f32 %v2534, %v695
    %v2682 = vmul.f32 %v2678, 0.5
    %v2683 = vtanh.pop %v2682
    %v2684 = vmul.f32 %v2683, 0.5
    %v2685 = vadd.f32 %v2684, 0.5
    %v2686 = vmul.f32 %v2679, 0.5
    %v2687 = vtanh.pop %v2686
    %v2688 = vmul.f32 %v2687, 0.5
    %v2689 = vadd.f32 %v2688, 0.5
    %v2690 = vtanh.pop %v2680
    %v2691 = vmul.f32 %v2681, 0.5
    %v2692 = vtanh.pop %v2691
    %v2693 = vmul.f32 %v2692, 0.5
    %v2694 = vadd.f32 %v2693, 0.5
    %v2695 = vmul.f32 %v2689, %v2342
    %v2696 = vmul.f32 %v2685, %v2690
    %v2697 = vadd.f32 %v2695, %v2696
    %v2698 = vtanh.pop %v2697
    %v2699 = vmul.f32 %v2694, %v2698
    %v2700 = vld [vmem:[%s550] sm:$0xff]
    %v2705 = vcombine.low %v2603, %v2605
    %v2706 = vcombine.low %v2674, %v2676
    %v2708 = vunpack.c.l.s4 1983009808
    %v2709 = vunpack.c.0.s8 %v2708
    %v2710 = vlaneseq
    %v2711 = vshrl.u32 %v2710, 7
    %v2712 = vsub.s32 %v2709, %v2711
    %v2713 = vrot.slane %v2705, %v2712
    %v2715 = vunpack.c.l.s4 1983009808
    %v2716 = vunpack.c.0.s8 %v2715
    %v2717 = vlaneseq
    %v2718 = vshrl.u32 %v2717, 7
    %v2719 = vsub.s32 %v2716, %v2718
    %v2720 = vrot.slane %v2706, %v2719
    %v2721 = vcombine.low %v2713, %v2720
    %v2723 = vadd.f32 %v2700, %v2721
    %v2724 = vmul.f32 %v2723, 0.5
    %v2725 = vtanh.pop %v2724
    %v2726 = vmul.f32 %v2725, 0.5
    %v2727 = vadd.f32 %v2726, 0.5
    %v2729 = vrot.slane %v2723, 2
    %v2731 = vmul.f32 %v2729, 0.5
    %v2732 = vtanh.pop %v2731
    %v2733 = vmul.f32 %v2732, 0.5
    %v2734 = vadd.f32 %v2733, 0.5
    %v2735 = vrot.slane %v2723, 4
    %v2737 = vtanh.pop %v2735
    %v2738 = vrot.slane %v2723, 6
    %v2740 = vmul.f32 %v2738, 0.5
    %v2741 = vtanh.pop %v2740
    %v2742 = vmul.f32 %v2741, 0.5
    %v2743 = vadd.f32 %v2742, 0.5
    %v2744 = vmul.f32 %v2734, %v2391
    %v2745 = vmul.f32 %v2727, %v2737
    %v2746 = vadd.f32 %v2744, %v2745
    %v2747 = vtanh.pop %v2746
    %v2748 = vmul.f32 %v2743, %v2747
    %2749 = vmatprep.subr.mxu0 %v719
    %2750 = vmatpush1.msra.mxu0 %v718
    %2751 = vmatprep.subr.mxu0 %v727
    %2752 = vmatpush1.msra.mxu0 %v726
    %2753 = vmatprep.subr.mxu0 %v735
    %2754 = vmatpush1.msra.mxu0 %v734
    %2755 = vmatprep.subr.mxu0 %v743
    %2756 = vmatpush1.msra.mxu0 %v742
    %2757 = vmatprep.subr.mxu0 %v751
    %2758 = vmatpush1.msra.mxu0 %v750
    %2759 = vmatprep.subr.mxu0 %v759
    %2760 = vmatpush1.msra.mxu0 %v758
    %2761 = vmatprep.subr.mxu0 %v767
    %2762 = vmatpush1.msra.mxu0 %v766
    %2763 = vmatprep.subr.mxu0 %v775
    %2764 = vmatpush1.msra.mxu0 %v774
    %2765 = vmatprep.subr.mxu0 %v783
    %2766 = vmatpush1.msra.mxu0 %v782
    %2767 = vmatprep.subr.mxu0 %v791
    %2768 = vmatpush1.msra.mxu0 %v790
    %2769 = vmatprep.subr.mxu0 %v799
    %2770 = vmatpush1.msra.mxu0 %v798
    %2771 = vmatprep.subr.mxu0 %v807
    %2772 = vmatpush1.msra.mxu0 %v806
    %2773 = vmatprep.subr.mxu0 %v815
    %2774 = vmatpush1.msra.mxu0 %v814
    %2775 = vmatprep.subr.mxu0 %v823
    %2776 = vmatpush1.msra.mxu0 %v822
    %2777 = vmatprep.subr.mxu0 %v831
    %2778 = vmatpush1.msra.mxu0 %v830
    %2779 = vmatprep.subr.mxu0 %v839
    %2780 = vmatpush1.msra.mxu0 %v838
    %2781 = vmatprep.subr.mxu0 %v847
    %2782 = vmatpush1.msra.mxu0 %v846
    %2783 = vmatprep.subr.mxu0 %v855
    %2784 = vmatpush1.msra.mxu0 %v854
    %2785 = vmatprep.subr.mxu0 %v863
    %2786 = vmatpush1.msra.mxu0 %v862
    %2787 = vmatprep.subr.mxu0 %v871
    %2788 = vmatpush1.msra.mxu0 %v870
    %2789 = vmatprep.subr.mxu0 %v879
    %2790 = vmatpush1.msra.mxu0 %v878
    %2791 = vmatprep.subr.mxu0 %v887
    %2792 = vmatpush1.msra.mxu0 %v886
    %2793 = vmatprep.subr.mxu0 %v895
    %2794 = vmatpush1.msra.mxu0 %v894
    %2795 = vmatprep.subr.mxu0 %v903
    %2796 = vmatpush1.msra.mxu0 %v902
    %2797 = vmatprep.subr.mxu0 %v911
    %2798 = vmatpush1.msra.mxu0 %v910
    %2799 = vmatprep.subr.mxu0 %v919
    %2800 = vmatpush1.msra.mxu0 %v918
    %2801 = vmatprep.subr.mxu0 %v927
    %2802 = vmatpush1.msra.mxu0 %v926
    %2803 = vmatprep.subr.mxu0 %v935
    %2804 = vmatpush1.msra.mxu0 %v934
    %2805 = vmatprep.subr.mxu0 %v943
    %2806 = vmatpush1.msra.mxu0 %v942
    %2807 = vmatprep.subr.mxu0 %v951
    %2808 = vmatpush1.msra.mxu0 %v950
    %2809 = vmatprep.subr.mxu0 %v959
    %2810 = vmatpush1.msra.mxu0 %v958
    %2811 = vmatprep.subr.mxu0 %v967
    %2812 = vmatpush1.msra.mxu0 %v966
    %2813 = vmatprep.mubr.f32.mxu0 %v2699
    %2814 = vmatmul.mubr.f32.gmra.mrb[0].mxu0 %v2748
    %v2815 = vpop.f32.mrb[0].mxu0
    %v2816 = vadd.f32 0.0, %v2815
    %v2817 = vpop.f32.mrb[0].mxu0
    %v2818 = vadd.f32 0.0, %v2817
    %2819 = vdwg.mxu0
    %2820 = vmatprep.subr.mxu0 %v721
    %2821 = vmatpush1.msra.mxu0 %v720
    %2822 = vmatprep.subr.mxu0 %v729
    %2823 = vmatpush1.msra.mxu0 %v728
    %2824 = vmatprep.subr.mxu0 %v737
    %2825 = vmatpush1.msra.mxu0 %v736
    %2826 = vmatprep.subr.mxu0 %v745
    %2827 = vmatpush1.msra.mxu0 %v744
    %2828 = vmatprep.subr.mxu0 %v753
    %2829 = vmatpush1.msra.mxu0 %v752
    %2830 = vmatprep.subr.mxu0 %v761
    %2831 = vmatpush1.msra.mxu0 %v760
    %2832 = vmatprep.subr.mxu0 %v769
    %2833 = vmatpush1.msra.mxu0 %v768
    %2834 = vmatprep.subr.mxu0 %v777
    %2835 = vmatpush1.msra.mxu0 %v776
    %2836 = vmatprep.subr.mxu0 %v785
    %2837 = vmatpush1.msra.mxu0 %v784
    %2838 = vmatprep.subr.mxu0 %v793
    %2839 = vmatpush1.msra.mxu0 %v792
    %2840 = vmatprep.subr.mxu0 %v801
    %2841 = vmatpush1.msra.mxu0 %v800
    %2842 = vmatprep.subr.mxu0 %v809
    %2843 = vmatpush1.msra.mxu0 %v808
    %2844 = vmatprep.subr.mxu0 %v817
    %2845 = vmatpush1.msra.mxu0 %v816
    %2846 = vmatprep.subr.mxu0 %v825
    %2847 = vmatpush1.msra.mxu0 %v824
    %2848 = vmatprep.subr.mxu0 %v833
    %2849 = vmatpush1.msra.mxu0 %v832
    %2850 = vmatprep.subr.mxu0 %v841
    %2851 = vmatpush1.msra.mxu0 %v840
    %2852 = vmatprep.subr.mxu0 %v849
    %2853 = vmatpush1.msra.mxu0 %v848
    %2854 = vmatprep.subr.mxu0 %v857
    %2855 = vmatpush1.msra.mxu0 %v856
    %2856 = vmatprep.subr.mxu0 %v865
    %2857 = vmatpush1.msra.mxu0 %v864
    %2858 = vmatprep.subr.mxu0 %v873
    %2859 = vmatpush1.msra.mxu0 %v872
    %2860 = vmatprep.subr.mxu0 %v881
    %2861 = vmatpush1.msra.mxu0 %v880
    %2862 = vmatprep.subr.mxu0 %v889
    %2863 = vmatpush1.msra.mxu0 %v888
    %2864 = vmatprep.subr.mxu0 %v897
    %2865 = vmatpush1.msra.mxu0 %v896
    %2866 = vmatprep.subr.mxu0 %v905
    %2867 = vmatpush1.msra.mxu0 %v904
    %2868 = vmatprep.subr.mxu0 %v913
    %2869 = vmatpush1.msra.mxu0 %v912
    %2870 = vmatprep.subr.mxu0 %v921
    %2871 = vmatpush1.msra.mxu0 %v920
    %2872 = vmatprep.subr.mxu0 %v929
    %2873 = vmatpush1.msra.mxu0 %v928
    %2874 = vmatprep.subr.mxu0 %v937
    %2875 = vmatpush1.msra.mxu0 %v936
    %2876 = vmatprep.subr.mxu0 %v945
    %2877 = vmatpush1.msra.mxu0 %v944
    %2878 = vmatprep.subr.mxu0 %v953
    %2879 = vmatpush1.msra.mxu0 %v952
    %2880 = vmatprep.subr.mxu0 %v961
    %2881 = vmatpush1.msra.mxu0 %v960
    %2882 = vmatprep.subr.mxu0 %v969
    %2883 = vmatpush1.msra.mxu0 %v968
    %2884 = vmatprep.mubr.f32.mxu0 %v2699
    %2885 = vmatmul.mubr.f32.gmra.mrb[0].mxu0 %v2748
    %v2886 = vpop.f32.mrb[0].mxu0
    %v2887 = vadd.f32 0.0, %v2886
    %v2888 = vpop.f32.mrb[0].mxu0
    %v2889 = vadd.f32 0.0, %v2888
    %2890 = vdwg.mxu0
    %2891 = vmatprep.subr.mxu0 %v723
    %2892 = vmatpush1.msra.mxu0 %v722
    %2893 = vmatprep.subr.mxu0 %v731
    %2894 = vmatpush1.msra.mxu0 %v730
    %2895 = vmatprep.subr.mxu0 %v739
    %2896 = vmatpush1.msra.mxu0 %v738
    %2897 = vmatprep.subr.mxu0 %v747
    %2898 = vmatpush1.msra.mxu0 %v746
    %2899 = vmatprep.subr.mxu0 %v755
    %2900 = vmatpush1.msra.mxu0 %v754
    %2901 = vmatprep.subr.mxu0 %v763
    %2902 = vmatpush1.msra.mxu0 %v762
    %2903 = vmatprep.subr.mxu0 %v771
    %2904 = vmatpush1.msra.mxu0 %v770
    %2905 = vmatprep.subr.mxu0 %v779
    %2906 = vmatpush1.msra.mxu0 %v778
    %2907 = vmatprep.subr.mxu0 %v787
    %2908 = vmatpush1.msra.mxu0 %v786
    %2909 = vmatprep.subr.mxu0 %v795
    %2910 = vmatpush1.msra.mxu0 %v794
    %2911 = vmatprep.subr.mxu0 %v803
    %2912 = vmatpush1.msra.mxu0 %v802
    %2913 = vmatprep.subr.mxu0 %v811
    %2914 = vmatpush1.msra.mxu0 %v810
    %2915 = vmatprep.subr.mxu0 %v819
    %2916 = vmatpush1.msra.mxu0 %v818
    %2917 = vmatprep.subr.mxu0 %v827
    %2918 = vmatpush1.msra.mxu0 %v826
    %2919 = vmatprep.subr.mxu0 %v835
    %2920 = vmatpush1.msra.mxu0 %v834
    %2921 = vmatprep.subr.mxu0 %v843
    %2922 = vmatpush1.msra.mxu0 %v842
    %2923 = vmatprep.subr.mxu0 %v851
    %2924 = vmatpush1.msra.mxu0 %v850
    %2925 = vmatprep.subr.mxu0 %v859
    %2926 = vmatpush1.msra.mxu0 %v858
    %2927 = vmatprep.subr.mxu0 %v867
    %2928 = vmatpush1.msra.mxu0 %v866
    %2929 = vmatprep.subr.mxu0 %v875
    %2930 = vmatpush1.msra.mxu0 %v874
    %2931 = vmatprep.subr.mxu0 %v883
    %2932 = vmatpush1.msra.mxu0 %v882
    %2933 = vmatprep.subr.mxu0 %v891
    %2934 = vmatpush1.msra.mxu0 %v890
    %2935 = vmatprep.subr.mxu0 %v899
    %2936 = vmatpush1.msra.mxu0 %v898
    %2937 = vmatprep.subr.mxu0 %v907
    %2938 = vmatpush1.msra.mxu0 %v906
    %2939 = vmatprep.subr.mxu0 %v915
    %2940 = vmatpush1.msra.mxu0 %v914
    %2941 = vmatprep.subr.mxu0 %v923
    %2942 = vmatpush1.msra.mxu0 %v922
    %2943 = vmatprep.subr.mxu0 %v931
    %2944 = vmatpush1.msra.mxu0 %v930
    %2945 = vmatprep.subr.mxu0 %v939
    %2946 = vmatpush1.msra.mxu0 %v938
    %2947 = vmatprep.subr.mxu0 %v947
    %2948 = vmatpush1.msra.mxu0 %v946
    %2949 = vmatprep.subr.mxu0 %v955
    %2950 = vmatpush1.msra.mxu0 %v954
    %2951 = vmatprep.subr.mxu0 %v963
    %2952 = vmatpush1.msra.mxu0 %v962
    %2953 = vmatprep.subr.mxu0 %v971
    %2954 = vmatpush1.msra.mxu0 %v970
    %2955 = vmatprep.mubr.f32.mxu0 %v2699
    %2956 = vmatmul.mubr.f32.gmra.mrb[0].mxu0 %v2748
    %v2957 = vpop.f32.mrb[0].mxu0
    %v2958 = vadd.f32 0.0, %v2957
    %v2959 = vpop.f32.mrb[0].mxu0
    %v2960 = vadd.f32 0.0, %v2959
    %2961 = vdwg.mxu0
    %2962 = vmatprep.subr.mxu0 %v725
    %2963 = vmatpush1.msra.mxu0 %v724
    %2964 = vmatprep.subr.mxu0 %v733
    %2965 = vmatpush1.msra.mxu0 %v732
    %2966 = vmatprep.subr.mxu0 %v741
    %2967 = vmatpush1.msra.mxu0 %v740
    %2968 = vmatprep.subr.mxu0 %v749
    %2969 = vmatpush1.msra.mxu0 %v748
    %2970 = vmatprep.subr.mxu0 %v757
    %2971 = vmatpush1.msra.mxu0 %v756
    %2972 = vmatprep.subr.mxu0 %v765
    %2973 = vmatpush1.msra.mxu0 %v764
    %2974 = vmatprep.subr.mxu0 %v773
    %2975 = vmatpush1.msra.mxu0 %v772
    %2976 = vmatprep.subr.mxu0 %v781
    %2977 = vmatpush1.msra.mxu0 %v780
    %2978 = vmatprep.subr.mxu0 %v789
    %2979 = vmatpush1.msra.mxu0 %v788
    %2980 = vmatprep.subr.mxu0 %v797
    %2981 = vmatpush1.msra.mxu0 %v796
    %2982 = vmatprep.subr.mxu0 %v805
    %2983 = vmatpush1.msra.mxu0 %v804
    %2984 = vmatprep.subr.mxu0 %v813
    %2985 = vmatpush1.msra.mxu0 %v812
    %2986 = vmatprep.subr.mxu0 %v821
    %2987 = vmatpush1.msra.mxu0 %v820
    %2988 = vmatprep.subr.mxu0 %v829
    %2989 = vmatpush1.msra.mxu0 %v828
    %2990 = vmatprep.subr.mxu0 %v837
    %2991 = vmatpush1.msra.mxu0 %v836
    %2992 = vmatprep.subr.mxu0 %v845
    %2993 = vmatpush1.msra.mxu0 %v844
    %2994 = vmatprep.subr.mxu0 %v853
    %2995 = vmatpush1.msra.mxu0 %v852
    %2996 = vmatprep.subr.mxu0 %v861
    %2997 = vmatpush1.msra.mxu0 %v860
    %2998 = vmatprep.subr.mxu0 %v869
    %2999 = vmatpush1.msra.mxu0 %v868
    %3000 = vmatprep.subr.mxu0 %v877
    %3001 = vmatpush1.msra.mxu0 %v876
    %3002 = vmatprep.subr.mxu0 %v885
    %3003 = vmatpush1.msra.mxu0 %v884
    %3004 = vmatprep.subr.mxu0 %v893
    %3005 = vmatpush1.msra.mxu0 %v892
    %3006 = vmatprep.subr.mxu0 %v901
    %3007 = vmatpush1.msra.mxu0 %v900
    %3008 = vmatprep.subr.mxu0 %v909
    %3009 = vmatpush1.msra.mxu0 %v908
    %3010 = vmatprep.subr.mxu0 %v917
    %3011 = vmatpush1.msra.mxu0 %v916
    %3012 = vmatprep.subr.mxu0 %v925
    %3013 = vmatpush1.msra.mxu0 %v924
    %3014 = vmatprep.subr.mxu0 %v933
    %3015 = vmatpush1.msra.mxu0 %v932
    %3016 = vmatprep.subr.mxu0 %v941
    %3017 = vmatpush1.msra.mxu0 %v940
    %3018 = vmatprep.subr.mxu0 %v949
    %3019 = vmatpush1.msra.mxu0 %v948
    %3020 = vmatprep.subr.mxu0 %v957
    %3021 = vmatpush1.msra.mxu0 %v956
    %3022 = vmatprep.subr.mxu0 %v965
    %3023 = vmatpush1.msra.mxu0 %v964
    %3024 = vmatprep.subr.mxu0 %v973
    %3025 = vmatpush1.msra.mxu0 %v972
    %3026 = vmatprep.mubr.f32.mxu0 %v2699
    %3027 = vmatmul.mubr.f32.gmra.mrb[0].mxu0 %v2748
    %v3028 = vpop.f32.mrb[0].mxu0
    %v3029 = vadd.f32 0.0, %v3028
    %v3030 = vpop.f32.mrb[0].mxu0
    %v3031 = vadd.f32 0.0, %v3030
    %3032 = vdwg.mxu0
    %v3033 = vadd.f32 %v2816, %v683
    %v3034 = vadd.f32 %v2818, %v687
    %v3035 = vadd.f32 %v2887, %v691
    %v3036 = vadd.f32 %v2889, %v695
    %v3037 = vmul.f32 %v3033, 0.5
    %v3038 = vtanh.pop %v3037
    %v3039 = vmul.f32 %v3038, 0.5
    %v3040 = vadd.f32 %v3039, 0.5
    %v3041 = vmul.f32 %v3034, 0.5
    %v3042 = vtanh.pop %v3041
    %v3043 = vmul.f32 %v3042, 0.5
    %v3044 = vadd.f32 %v3043, 0.5
    %v3045 = vtanh.pop %v3035
    %v3046 = vmul.f32 %v3036, 0.5
    %v3047 = vtanh.pop %v3046
    %v3048 = vmul.f32 %v3047, 0.5
    %v3049 = vadd.f32 %v3048, 0.5
    %v3050 = vmul.f32 %v3044, %v2697
    %v3051 = vmul.f32 %v3040, %v3045
    %v3052 = vadd.f32 %v3050, %v3051
    %v3053 = vtanh.pop %v3052
    %v3054 = vmul.f32 %v3049, %v3053
    %v3055 = vld [vmem:[%s613] sm:$0xff]
    %v3060 = vcombine.low %v2958, %v2960
    %v3061 = vcombine.low %v3029, %v3031
    %v3063 = vunpack.c.l.s4 1983009808
    %v3064 = vunpack.c.0.s8 %v3063
    %v3065 = vlaneseq
    %v3066 = vshrl.u32 %v3065, 7
    %v3067 = vsub.s32 %v3064, %v3066
    %v3068 = vrot.slane %v3060, %v3067
    %v3070 = vunpack.c.l.s4 1983009808
    %v3071 = vunpack.c.0.s8 %v3070
    %v3072 = vlaneseq
    %v3073 = vshrl.u32 %v3072, 7
    %v3074 = vsub.s32 %v3071, %v3073
    %v3075 = vrot.slane %v3061, %v3074
    %v3076 = vcombine.low %v3068, %v3075
    %v3078 = vadd.f32 %v3055, %v3076
    %v3079 = vmul.f32 %v3078, 0.5
    %v3080 = vtanh.pop %v3079
    %v3081 = vmul.f32 %v3080, 0.5
    %v3082 = vadd.f32 %v3081, 0.5
    %v3084 = vrot.slane %v3078, 2
    %v3086 = vmul.f32 %v3084, 0.5
    %v3087 = vtanh.pop %v3086
    %v3088 = vmul.f32 %v3087, 0.5
    %v3089 = vadd.f32 %v3088, 0.5
    %v3090 = vrot.slane %v3078, 4
    %v3092 = vtanh.pop %v3090
    %v3093 = vrot.slane %v3078, 6
    %v3095 = vmul.f32 %v3093, 0.5
    %v3096 = vtanh.pop %v3095
    %v3097 = vmul.f32 %v3096, 0.5
    %v3098 = vadd.f32 %v3097, 0.5
    %v3099 = vmul.f32 %v3089, %v2746
    %v3100 = vmul.f32 %v3082, %v3092
    %v3101 = vadd.f32 %v3099, %v3100
    %v3102 = vtanh.pop %v3101
    %v3103 = vmul.f32 %v3098, %v3102
    %3104 = vmatprep.subr.mxu0 %v719
    %3105 = vmatpush1.msra.mxu0 %v718
    %3106 = vmatprep.subr.mxu0 %v727
    %3107 = vmatpush1.msra.mxu0 %v726
    %3108 = vmatprep.subr.mxu0 %v735
    %3109 = vmatpush1.msra.mxu0 %v734
    %3110 = vmatprep.subr.mxu0 %v743
    %3111 = vmatpush1.msra.mxu0 %v742
    %3112 = vmatprep.subr.mxu0 %v751
    %3113 = vmatpush1.msra.mxu0 %v750
    %3114 = vmatprep.subr.mxu0 %v759
    %3115 = vmatpush1.msra.mxu0 %v758
    %3116 = vmatprep.subr.mxu0 %v767
    %3117 = vmatpush1.msra.mxu0 %v766
    %3118 = vmatprep.subr.mxu0 %v775
    %3119 = vmatpush1.msra.mxu0 %v774
    %3120 = vmatprep.subr.mxu0 %v783
    %3121 = vmatpush1.msra.mxu0 %v782
    %3122 = vmatprep.subr.mxu0 %v791
    %3123 = vmatpush1.msra.mxu0 %v790
    %3124 = vmatprep.subr.mxu0 %v799
    %3125 = vmatpush1.msra.mxu0 %v798
    %3126 = vmatprep.subr.mxu0 %v807
    %3127 = vmatpush1.msra.mxu0 %v806
    %3128 = vmatprep.subr.mxu0 %v815
    %3129 = vmatpush1.msra.mxu0 %v814
    %3130 = vmatprep.subr.mxu0 %v823
    %3131 = vmatpush1.msra.mxu0 %v822
    %3132 = vmatprep.subr.mxu0 %v831
    %3133 = vmatpush1.msra.mxu0 %v830
    %3134 = vmatprep.subr.mxu0 %v839
    %3135 = vmatpush1.msra.mxu0 %v838
    %3136 = vmatprep.subr.mxu0 %v847
    %3137 = vmatpush1.msra.mxu0 %v846
    %3138 = vmatprep.subr.mxu0 %v855
    %3139 = vmatpush1.msra.mxu0 %v854
    %3140 = vmatprep.subr.mxu0 %v863
    %3141 = vmatpush1.msra.mxu0 %v862
    %3142 = vmatprep.subr.mxu0 %v871
    %3143 = vmatpush1.msra.mxu0 %v870
    %3144 = vmatprep.subr.mxu0 %v879
    %3145 = vmatpush1.msra.mxu0 %v878
    %3146 = vmatprep.subr.mxu0 %v887
    %3147 = vmatpush1.msra.mxu0 %v886
    %3148 = vmatprep.subr.mxu0 %v895
    %3149 = vmatpush1.msra.mxu0 %v894
    %3150 = vmatprep.subr.mxu0 %v903
    %3151 = vmatpush1.msra.mxu0 %v902
    %3152 = vmatprep.subr.mxu0 %v911
    %3153 = vmatpush1.msra.mxu0 %v910
    %3154 = vmatprep.subr.mxu0 %v919
    %3155 = vmatpush1.msra.mxu0 %v918
    %3156 = vmatprep.subr.mxu0 %v927
    %3157 = vmatpush1.msra.mxu0 %v926
    %3158 = vmatprep.subr.mxu0 %v935
    %3159 = vmatpush1.msra.mxu0 %v934
    %3160 = vmatprep.subr.mxu0 %v943
    %3161 = vmatpush1.msra.mxu0 %v942
    %3162 = vmatprep.subr.mxu0 %v951
    %3163 = vmatpush1.msra.mxu0 %v950
    %3164 = vmatprep.subr.mxu0 %v959
    %3165 = vmatpush1.msra.mxu0 %v958
    %3166 = vmatprep.subr.mxu0 %v967
    %3167 = vmatpush1.msra.mxu0 %v966
    %3168 = vmatprep.mubr.f32.mxu0 %v3054
    %3169 = vmatmul.mubr.f32.gmra.mrb[0].mxu0 %v3103
    %v3170 = vpop.f32.mrb[0].mxu0
    %v3171 = vadd.f32 0.0, %v3170
    %v3172 = vpop.f32.mrb[0].mxu0
    %v3173 = vadd.f32 0.0, %v3172
    %3174 = vdwg.mxu0
    %3175 = vmatprep.subr.mxu0 %v721
    %3176 = vmatpush1.msra.mxu0 %v720
    %3177 = vmatprep.subr.mxu0 %v729
    %3178 = vmatpush1.msra.mxu0 %v728
    %3179 = vmatprep.subr.mxu0 %v737
    %3180 = vmatpush1.msra.mxu0 %v736
    %3181 = vmatprep.subr.mxu0 %v745
    %3182 = vmatpush1.msra.mxu0 %v744
    %3183 = vmatprep.subr.mxu0 %v753
    %3184 = vmatpush1.msra.mxu0 %v752
    %3185 = vmatprep.subr.mxu0 %v761
    %3186 = vmatpush1.msra.mxu0 %v760
    %3187 = vmatprep.subr.mxu0 %v769
    %3188 = vmatpush1.msra.mxu0 %v768
    %3189 = vmatprep.subr.mxu0 %v777
    %3190 = vmatpush1.msra.mxu0 %v776
    %3191 = vmatprep.subr.mxu0 %v785
    %3192 = vmatpush1.msra.mxu0 %v784
    %3193 = vmatprep.subr.mxu0 %v793
    %3194 = vmatpush1.msra.mxu0 %v792
    %3195 = vmatprep.subr.mxu0 %v801
    %3196 = vmatpush1.msra.mxu0 %v800
    %3197 = vmatprep.subr.mxu0 %v809
    %3198 = vmatpush1.msra.mxu0 %v808
    %3199 = vmatprep.subr.mxu0 %v817
    %3200 = vmatpush1.msra.mxu0 %v816
    %3201 = vmatprep.subr.mxu0 %v825
    %3202 = vmatpush1.msra.mxu0 %v824
    %3203 = vmatprep.subr.mxu0 %v833
    %3204 = vmatpush1.msra.mxu0 %v832
    %3205 = vmatprep.subr.mxu0 %v841
    %3206 = vmatpush1.msra.mxu0 %v840
    %3207 = vmatprep.subr.mxu0 %v849
    %3208 = vmatpush1.msra.mxu0 %v848
    %3209 = vmatprep.subr.mxu0 %v857
    %3210 = vmatpush1.msra.mxu0 %v856
    %3211 = vmatprep.subr.mxu0 %v865
    %3212 = vmatpush1.msra.mxu0 %v864
    %3213 = vmatprep.subr.mxu0 %v873
    %3214 = vmatpush1.msra.mxu0 %v872
    %3215 = vmatprep.subr.mxu0 %v881
    %3216 = vmatpush1.msra.mxu0 %v880
    %3217 = vmatprep.subr.mxu0 %v889
    %3218 = vmatpush1.msra.mxu0 %v888
    %3219 = vmatprep.subr.mxu0 %v897
    %3220 = vmatpush1.msra.mxu0 %v896
    %3221 = vmatprep.subr.mxu0 %v905
    %3222 = vmatpush1.msra.mxu0 %v904
    %3223 = vmatprep.subr.mxu0 %v913
    %3224 = vmatpush1.msra.mxu0 %v912
    %3225 = vmatprep.subr.mxu0 %v921
    %3226 = vmatpush1.msra.mxu0 %v920
    %3227 = vmatprep.subr.mxu0 %v929
    %3228 = vmatpush1.msra.mxu0 %v928
    %3229 = vmatprep.subr.mxu0 %v937
    %3230 = vmatpush1.msra.mxu0 %v936
    %3231 = vmatprep.subr.mxu0 %v945
    %3232 = vmatpush1.msra.mxu0 %v944
    %3233 = vmatprep.subr.mxu0 %v953
    %3234 = vmatpush1.msra.mxu0 %v952
    %3235 = vmatprep.subr.mxu0 %v961
    %3236 = vmatpush1.msra.mxu0 %v960
    %3237 = vmatprep.subr.mxu0 %v969
    %3238 = vmatpush1.msra.mxu0 %v968
    %3239 = vmatprep.mubr.f32.mxu0 %v3054
    %3240 = vmatmul.mubr.f32.gmra.mrb[0].mxu0 %v3103
    %v3241 = vpop.f32.mrb[0].mxu0
    %v3242 = vadd.f32 0.0, %v3241
    %v3243 = vpop.f32.mrb[0].mxu0
    %v3244 = vadd.f32 0.0, %v3243
    %3245 = vdwg.mxu0
    %3246 = vmatprep.subr.mxu0 %v723
    %3247 = vmatpush1.msra.mxu0 %v722
    %3248 = vmatprep.subr.mxu0 %v731
    %3249 = vmatpush1.msra.mxu0 %v730
    %3250 = vmatprep.subr.mxu0 %v739
    %3251 = vmatpush1.msra.mxu0 %v738
    %3252 = vmatprep.subr.mxu0 %v747
    %3253 = vmatpush1.msra.mxu0 %v746
    %3254 = vmatprep.subr.mxu0 %v755
    %3255 = vmatpush1.msra.mxu0 %v754
    %3256 = vmatprep.subr.mxu0 %v763
    %3257 = vmatpush1.msra.mxu0 %v762
    %3258 = vmatprep.subr.mxu0 %v771
    %3259 = vmatpush1.msra.mxu0 %v770
    %3260 = vmatprep.subr.mxu0 %v779
    %3261 = vmatpush1.msra.mxu0 %v778
    %3262 = vmatprep.subr.mxu0 %v787
    %3263 = vmatpush1.msra.mxu0 %v786
    %3264 = vmatprep.subr.mxu0 %v795
    %3265 = vmatpush1.msra.mxu0 %v794
    %3266 = vmatprep.subr.mxu0 %v803
    %3267 = vmatpush1.msra.mxu0 %v802
    %3268 = vmatprep.subr.mxu0 %v811
    %3269 = vmatpush1.msra.mxu0 %v810
    %3270 = vmatprep.subr.mxu0 %v819
    %3271 = vmatpush1.msra.mxu0 %v818
    %3272 = vmatprep.subr.mxu0 %v827
    %3273 = vmatpush1.msra.mxu0 %v826
    %3274 = vmatprep.subr.mxu0 %v835
    %3275 = vmatpush1.msra.mxu0 %v834
    %3276 = vmatprep.subr.mxu0 %v843
    %3277 = vmatpush1.msra.mxu0 %v842
    %3278 = vmatprep.subr.mxu0 %v851
    %3279 = vmatpush1.msra.mxu0 %v850
    %3280 = vmatprep.subr.mxu0 %v859
    %3281 = vmatpush1.msra.mxu0 %v858
    %3282 = vmatprep.subr.mxu0 %v867
    %3283 = vmatpush1.msra.mxu0 %v866
    %3284 = vmatprep.subr.mxu0 %v875
    %3285 = vmatpush1.msra.mxu0 %v874
    %3286 = vmatprep.subr.mxu0 %v883
    %3287 = vmatpush1.msra.mxu0 %v882
    %3288 = vmatprep.subr.mxu0 %v891
    %3289 = vmatpush1.msra.mxu0 %v890
    %3290 = vmatprep.subr.mxu0 %v899
    %3291 = vmatpush1.msra.mxu0 %v898
    %3292 = vmatprep.subr.mxu0 %v907
    %3293 = vmatpush1.msra.mxu0 %v906
    %3294 = vmatprep.subr.mxu0 %v915
    %3295 = vmatpush1.msra.mxu0 %v914
    %3296 = vmatprep.subr.mxu0 %v923
    %3297 = vmatpush1.msra.mxu0 %v922
    %3298 = vmatprep.subr.mxu0 %v931
    %3299 = vmatpush1.msra.mxu0 %v930
    %3300 = vmatprep.subr.mxu0 %v939
    %3301 = vmatpush1.msra.mxu0 %v938
    %3302 = vmatprep.subr.mxu0 %v947
    %3303 = vmatpush1.msra.mxu0 %v946
    %3304 = vmatprep.subr.mxu0 %v955
    %3305 = vmatpush1.msra.mxu0 %v954
    %3306 = vmatprep.subr.mxu0 %v963
    %3307 = vmatpush1.msra.mxu0 %v962
    %3308 = vmatprep.subr.mxu0 %v971
    %3309 = vmatpush1.msra.mxu0 %v970
    %3310 = vmatprep.mubr.f32.mxu0 %v3054
    %3311 = vmatmul.mubr.f32.gmra.mrb[0].mxu0 %v3103
    %v3312 = vpop.f32.mrb[0].mxu0
    %v3313 = vadd.f32 0.0, %v3312
    %v3314 = vpop.f32.mrb[0].mxu0
    %v3315 = vadd.f32 0.0, %v3314
    %3316 = vdwg.mxu0
    %3317 = vmatprep.subr.mxu0 %v725
    %3318 = vmatpush1.msra.mxu0 %v724
    %3319 = vmatprep.subr.mxu0 %v733
    %3320 = vmatpush1.msra.mxu0 %v732
    %3321 = vmatprep.subr.mxu0 %v741
    %3322 = vmatpush1.msra.mxu0 %v740
    %3323 = vmatprep.subr.mxu0 %v749
    %3324 = vmatpush1.msra.mxu0 %v748
    %3325 = vmatprep.subr.mxu0 %v757
    %3326 = vmatpush1.msra.mxu0 %v756
    %3327 = vmatprep.subr.mxu0 %v765
    %3328 = vmatpush1.msra.mxu0 %v764
    %3329 = vmatprep.subr.mxu0 %v773
    %3330 = vmatpush1.msra.mxu0 %v772
    %3331 = vmatprep.subr.mxu0 %v781
    %3332 = vmatpush1.msra.mxu0 %v780
    %3333 = vmatprep.subr.mxu0 %v789
    %3334 = vmatpush1.msra.mxu0 %v788
    %3335 = vmatprep.subr.mxu0 %v797
    %3336 = vmatpush1.msra.mxu0 %v796
    %3337 = vmatprep.subr.mxu0 %v805
    %3338 = vmatpush1.msra.mxu0 %v804
    %3339 = vmatprep.subr.mxu0 %v813
    %3340 = vmatpush1.msra.mxu0 %v812
    %3341 = vmatprep.subr.mxu0 %v821
    %3342 = vmatpush1.msra.mxu0 %v820
    %3343 = vmatprep.subr.mxu0 %v829
    %3344 = vmatpush1.msra.mxu0 %v828
    %3345 = vmatprep.subr.mxu0 %v837
    %3346 = vmatpush1.msra.mxu0 %v836
    %3347 = vmatprep.subr.mxu0 %v845
    %3348 = vmatpush1.msra.mxu0 %v844
    %3349 = vmatprep.subr.mxu0 %v853
    %3350 = vmatpush1.msra.mxu0 %v852
    %3351 = vmatprep.subr.mxu0 %v861
    %3352 = vmatpush1.msra.mxu0 %v860
    %3353 = vmatprep.subr.mxu0 %v869
    %3354 = vmatpush1.msra.mxu0 %v868
    %3355 = vmatprep.subr.mxu0 %v877
    %3356 = vmatpush1.msra.mxu0 %v876
    %3357 = vmatprep.subr.mxu0 %v885
    %3358 = vmatpush1.msra.mxu0 %v884
    %3359 = vmatprep.subr.mxu0 %v893
    %3360 = vmatpush1.msra.mxu0 %v892
    %3361 = vmatprep.subr.mxu0 %v901
    %3362 = vmatpush1.msra.mxu0 %v900
    %3363 = vmatprep.subr.mxu0 %v909
    %3364 = vmatpush1.msra.mxu0 %v908
    %3365 = vmatprep.subr.mxu0 %v917
    %3366 = vmatpush1.msra.mxu0 %v916
    %3367 = vmatprep.subr.mxu0 %v925
    %3368 = vmatpush1.msra.mxu0 %v924
    %3369 = vmatprep.subr.mxu0 %v933
    %3370 = vmatpush1.msra.mxu0 %v932
    %3371 = vmatprep.subr.mxu0 %v941
    %3372 = vmatpush1.msra.mxu0 %v940
    %3373 = vmatprep.subr.mxu0 %v949
    %3374 = vmatpush1.msra.mxu0 %v948
    %3375 = vmatprep.subr.mxu0 %v957
    %3376 = vmatpush1.msra.mxu0 %v956
    %3377 = vmatprep.subr.mxu0 %v965
    %3378 = vmatpush1.msra.mxu0 %v964
    %3379 = vmatprep.subr.mxu0 %v973
    %3380 = vmatpush1.msra.mxu0 %v972
    %3381 = vmatprep.mubr.f32.mxu0 %v3054
    %3382 = vmatmul.mubr.f32.gmra.mrb[0].mxu0 %v3103
    %v3383 = vpop.f32.mrb[0].mxu0
    %v3384 = vadd.f32 0.0, %v3383
    %v3385 = vpop.f32.mrb[0].mxu0
    %v3386 = vadd.f32 0.0, %v3385
    %3387 = vdwg.mxu0
    %v3388 = vadd.f32 %v3171, %v683
    %v3389 = vadd.f32 %v3173, %v687
    %v3390 = vadd.f32 %v3242, %v691
    %v3391 = vadd.f32 %v3244, %v695
    %v3392 = vmul.f32 %v3388, 0.5
    %v3393 = vtanh.pop %v3392
    %v3394 = vmul.f32 %v3393, 0.5
    %v3395 = vadd.f32 %v3394, 0.5
    %v3396 = vmul.f32 %v3389, 0.5
    %v3397 = vtanh.pop %v3396
    %v3398 = vmul.f32 %v3397, 0.5
    %v3399 = vadd.f32 %v3398, 0.5
    %v3400 = vtanh.pop %v3390
    %v3401 = vmul.f32 %v3391, 0.5
    %v3402 = vtanh.pop %v3401
    %v3403 = vmul.f32 %v3402, 0.5
    %v3404 = vadd.f32 %v3403, 0.5
    %v3405 = vmul.f32 %v3399, %v3052
    %v3406 = vmul.f32 %v3395, %v3400
    %v3407 = vadd.f32 %v3405, %v3406
    %v3408 = vtanh.pop %v3407
    %v3409 = vmul.f32 %v3404, %v3408
    %v3410 = vld [vmem:[%s676] sm:$0xff]
    %v3415 = vcombine.low %v3313, %v3315
    %v3416 = vcombine.low %v3384, %v3386
    %v3418 = vunpack.c.l.s4 1983009808
    %v3419 = vunpack.c.0.s8 %v3418
    %v3420 = vlaneseq
    %v3421 = vshrl.u32 %v3420, 7
    %v3422 = vsub.s32 %v3419, %v3421
    %v3423 = vrot.slane %v3415, %v3422
    %v3425 = vunpack.c.l.s4 1983009808
    %v3426 = vunpack.c.0.s8 %v3425
    %v3427 = vlaneseq
    %v3428 = vshrl.u32 %v3427, 7
    %v3429 = vsub.s32 %v3426, %v3428
    %v3430 = vrot.slane %v3416, %v3429
    %v3431 = vcombine.low %v3423, %v3430
    %v3433 = vadd.f32 %v3410, %v3431
    %v3434 = vmul.f32 %v3433, 0.5
    %v3435 = vtanh.pop %v3434
    %v3436 = vmul.f32 %v3435, 0.5
    %v3437 = vadd.f32 %v3436, 0.5
    %v3439 = vrot.slane %v3433, 2
    %v3441 = vmul.f32 %v3439, 0.5
    %v3442 = vtanh.pop %v3441
    %v3443 = vmul.f32 %v3442, 0.5
    %v3444 = vadd.f32 %v3443, 0.5
    %v3445 = vrot.slane %v3433, 4
    %v3447 = vtanh.pop %v3445
    %v3448 = vrot.slane %v3433, 6
    %v3450 = vmul.f32 %v3448, 0.5
    %v3451 = vtanh.pop %v3450
    %v3452 = vmul.f32 %v3451, 0.5
    %v3453 = vadd.f32 %v3452, 0.5
    %v3454 = vmul.f32 %v3444, %v3101
    %v3455 = vmul.f32 %v3437, %v3447
    %v3456 = vadd.f32 %v3454, %v3455
    %v3457 = vtanh.pop %v3456
    %v3458 = vmul.f32 %v3453, %v3457
    %3459 = vmatprep.subr.mxu0 %v719
    %3460 = vmatpush1.msra.mxu0 %v718
    %3461 = vmatprep.subr.mxu0 %v727
    %3462 = vmatpush1.msra.mxu0 %v726
    %3463 = vmatprep.subr.mxu0 %v735
    %3464 = vmatpush1.msra.mxu0 %v734
    %3465 = vmatprep.subr.mxu0 %v743
    %3466 = vmatpush1.msra.mxu0 %v742
    %3467 = vmatprep.subr.mxu0 %v751
    %3468 = vmatpush1.msra.mxu0 %v750
    %3469 = vmatprep.subr.mxu0 %v759
    %3470 = vmatpush1.msra.mxu0 %v758
    %3471 = vmatprep.subr.mxu0 %v767
    %3472 = vmatpush1.msra.mxu0 %v766
    %3473 = vmatprep.subr.mxu0 %v775
    %3474 = vmatpush1.msra.mxu0 %v774
    %3475 = vmatprep.subr.mxu0 %v783
    %3476 = vmatpush1.msra.mxu0 %v782
    %3477 = vmatprep.subr.mxu0 %v791
    %3478 = vmatpush1.msra.mxu0 %v790
    %3479 = vmatprep.subr.mxu0 %v799
    %3480 = vmatpush1.msra.mxu0 %v798
    %3481 = vmatprep.subr.mxu0 %v807
    %3482 = vmatpush1.msra.mxu0 %v806
    %3483 = vmatprep.subr.mxu0 %v815
    %3484 = vmatpush1.msra.mxu0 %v814
    %3485 = vmatprep.subr.mxu0 %v823
    %3486 = vmatpush1.msra.mxu0 %v822
    %3487 = vmatprep.subr.mxu0 %v831
    %3488 = vmatpush1.msra.mxu0 %v830
    %3489 = vmatprep.subr.mxu0 %v839
    %3490 = vmatpush1.msra.mxu0 %v838
    %3491 = vmatprep.subr.mxu0 %v847
    %3492 = vmatpush1.msra.mxu0 %v846
    %3493 = vmatprep.subr.mxu0 %v855
    %3494 = vmatpush1.msra.mxu0 %v854
    %3495 = vmatprep.subr.mxu0 %v863
    %3496 = vmatpush1.msra.mxu0 %v862
    %3497 = vmatprep.subr.mxu0 %v871
    %3498 = vmatpush1.msra.mxu0 %v870
    %3499 = vmatprep.subr.mxu0 %v879
    %3500 = vmatpush1.msra.mxu0 %v878
    %3501 = vmatprep.subr.mxu0 %v887
    %3502 = vmatpush1.msra.mxu0 %v886
    %3503 = vmatprep.subr.mxu0 %v895
    %3504 = vmatpush1.msra.mxu0 %v894
    %3505 = vmatprep.subr.mxu0 %v903
    %3506 = vmatpush1.msra.mxu0 %v902
    %3507 = vmatprep.subr.mxu0 %v911
    %3508 = vmatpush1.msra.mxu0 %v910
    %3509 = vmatprep.subr.mxu0 %v919
    %3510 = vmatpush1.msra.mxu0 %v918
    %3511 = vmatprep.subr.mxu0 %v927
    %3512 = vmatpush1.msra.mxu0 %v926
    %3513 = vmatprep.subr.mxu0 %v935
    %3514 = vmatpush1.msra.mxu0 %v934
    %3515 = vmatprep.subr.mxu0 %v943
    %3516 = vmatpush1.msra.mxu0 %v942
    %3517 = vmatprep.subr.mxu0 %v951
    %3518 = vmatpush1.msra.mxu0 %v950
    %3519 = vmatprep.subr.mxu0 %v959
    %3520 = vmatpush1.msra.mxu0 %v958
    %3521 = vmatprep.subr.mxu0 %v967
    %3522 = vmatpush1.msra.mxu0 %v966
    %3523 = vmatprep.mubr.f32.mxu0 %v3409
    %3524 = vmatmul.mubr.f32.gmra.mrb[0].mxu0 %v3458
    %v3525 = vpop.f32.mrb[0].mxu0
    %v3526 = vadd.f32 0.0, %v3525
    %v3527 = vpop.f32.mrb[0].mxu0
    %v3528 = vadd.f32 0.0, %v3527
    %3529 = vdwg.mxu0
    %3530 = vmatprep.subr.mxu0 %v721
    %3531 = vmatpush1.msra.mxu0 %v720
    %3532 = vmatprep.subr.mxu0 %v729
    %3533 = vmatpush1.msra.mxu0 %v728
    %3534 = vmatprep.subr.mxu0 %v737
    %3535 = vmatpush1.msra.mxu0 %v736
    %3536 = vmatprep.subr.mxu0 %v745
    %3537 = vmatpush1.msra.mxu0 %v744
    %3538 = vmatprep.subr.mxu0 %v753
    %3539 = vmatpush1.msra.mxu0 %v752
    %3540 = vmatprep.subr.mxu0 %v761
    %3541 = vmatpush1.msra.mxu0 %v760
    %3542 = vmatprep.subr.mxu0 %v769
    %3543 = vmatpush1.msra.mxu0 %v768
    %3544 = vmatprep.subr.mxu0 %v777
    %3545 = vmatpush1.msra.mxu0 %v776
    %3546 = vmatprep.subr.mxu0 %v785
    %3547 = vmatpush1.msra.mxu0 %v784
    %3548 = vmatprep.subr.mxu0 %v793
    %3549 = vmatpush1.msra.mxu0 %v792
    %3550 = vmatprep.subr.mxu0 %v801
    %3551 = vmatpush1.msra.mxu0 %v800
    %3552 = vmatprep.subr.mxu0 %v809
    %3553 = vmatpush1.msra.mxu0 %v808
    %3554 = vmatprep.subr.mxu0 %v817
    %3555 = vmatpush1.msra.mxu0 %v816
    %3556 = vmatprep.subr.mxu0 %v825
    %3557 = vmatpush1.msra.mxu0 %v824
    %3558 = vmatprep.subr.mxu0 %v833
    %3559 = vmatpush1.msra.mxu0 %v832
    %3560 = vmatprep.subr.mxu0 %v841
    %3561 = vmatpush1.msra.mxu0 %v840
    %3562 = vmatprep.subr.mxu0 %v849
    %3563 = vmatpush1.msra.mxu0 %v848
    %3564 = vmatprep.subr.mxu0 %v857
    %3565 = vmatpush1.msra.mxu0 %v856
    %3566 = vmatprep.subr.mxu0 %v865
    %3567 = vmatpush1.msra.mxu0 %v864
    %3568 = vmatprep.subr.mxu0 %v873
    %3569 = vmatpush1.msra.mxu0 %v872
    %3570 = vmatprep.subr.mxu0 %v881
    %3571 = vmatpush1.msra.mxu0 %v880
    %3572 = vmatprep.subr.mxu0 %v889
    %3573 = vmatpush1.msra.mxu0 %v888
    %3574 = vmatprep.subr.mxu0 %v897
    %3575 = vmatpush1.msra.mxu0 %v896
    %3576 = vmatprep.subr.mxu0 %v905
    %3577 = vmatpush1.msra.mxu0 %v904
    %3578 = vmatprep.subr.mxu0 %v913
    %3579 = vmatpush1.msra.mxu0 %v912
    %3580 = vmatprep.subr.mxu0 %v921
    %3581 = vmatpush1.msra.mxu0 %v920
    %3582 = vmatprep.subr.mxu0 %v929
    %3583 = vmatpush1.msra.mxu0 %v928
    %3584 = vmatprep.subr.mxu0 %v937
    %3585 = vmatpush1.msra.mxu0 %v936
    %3586 = vmatprep.subr.mxu0 %v945
    %3587 = vmatpush1.msra.mxu0 %v944
    %3588 = vmatprep.subr.mxu0 %v953
    %3589 = vmatpush1.msra.mxu0 %v952
    %3590 = vmatprep.subr.mxu0 %v961
    %3591 = vmatpush1.msra.mxu0 %v960
    %3592 = vmatprep.subr.mxu0 %v969
    %3593 = vmatpush1.msra.mxu0 %v968
    %3594 = vmatprep.mubr.f32.mxu0 %v3409
    %3595 = vmatmul.mubr.f32.gmra.mrb[0].mxu0 %v3458
    %v3596 = vpop.f32.mrb[0].mxu0
    %v3597 = vadd.f32 0.0, %v3596
    %v3598 = vpop.f32.mrb[0].mxu0
    %v3599 = vadd.f32 0.0, %v3598
    %3600 = vdwg.mxu0
    %v3601 = vadd.f32 %v3526, %v683
    %v3602 = vadd.f32 %v3528, %v687
    %v3603 = vadd.f32 %v3597, %v691
    %v3604 = vadd.f32 %v3599, %v695
    %v3605 = vmul.f32 %v3601, 0.5
    %v3606 = vtanh.pop %v3605
    %v3607 = vmul.f32 %v3606, 0.5
    %v3608 = vadd.f32 %v3607, 0.5
    %v3609 = vmul.f32 %v3602, 0.5
    %v3610 = vtanh.pop %v3609
    %v3611 = vmul.f32 %v3610, 0.5
    %v3612 = vadd.f32 %v3611, 0.5
    %v3613 = vtanh.pop %v3603
    %v3614 = vmul.f32 %v3604, 0.5
    %v3615 = vtanh.pop %v3614
    %v3616 = vmul.f32 %v3615, 0.5
    %v3617 = vadd.f32 %v3616, 0.5
    %v3618 = vmul.f32 %v3612, %v3407
    %v3619 = vmul.f32 %v3608, %v3613
    %v3620 = vadd.f32 %v3618, %v3619
    %v3621 = vtanh.pop %v3620
    %v3622 = vmul.f32 %v3617, %v3621
    %v3623 = vld [vmem:[%s5] sm:$0xff]
    %v3624 = vld [vmem:[%s5 + $0x8] sm:$0xff]
    %v3625 = vld [vmem:[%s5 + $0x10] sm:$0xff]
    %v3626 = vld [vmem:[%s5 + $0x18] sm:$0xff]
    %v3627 = vld [vmem:[%s5 + $0x20] sm:$0xff]
    %v3628 = vld [vmem:[%s5 + $0x28] sm:$0xff]
    %v3629 = vld [vmem:[%s5 + $0x30] sm:$0xff]
    %v3630 = vld [vmem:[%s5 + $0x38] sm:$0xff]
    %v3631 = vld [vmem:[%s5 + $0x40] sm:$0xff]
    %v3632 = vld [vmem:[%s5 + $0x48] sm:$0xff]
    %v3633 = vld [vmem:[%s5 + $0x50] sm:$0xff]
    %v3634 = vld [vmem:[%s5 + $0x58] sm:$0xff]
    %v3635 = vld [vmem:[%s5 + $0x60] sm:$0xff]
    %v3636 = vld [vmem:[%s5 + $0x68] sm:$0xff]
    %v3637 = vld [vmem:[%s5 + $0x70] sm:$0xff]
    %v3638 = vld [vmem:[%s5 + $0x78] sm:$0xff]
    %v3639 = vld [vmem:[#allocation3] sm:$0x1]
    %v3641 = vlaneseq
    %v3642 = vshrl.u32 %v3641, 7
    %v3643 = vsub.s32 0, %v3642
    %v3644 = vrot.slane %v3639, %v3643
    %3646 = vmatprep.subr.mxu0 0.0
    %3647 = vmatpush1.msra.mxu0 %v3623
    %3648 = vmatprep.subr.mxu0 0.0
    %3649 = vmatpush1.msra.mxu0 %v3624
    %3650 = vmatprep.subr.mxu0 0.0
    %3651 = vmatpush1.msra.mxu0 %v3625
    %3652 = vmatprep.subr.mxu0 0.0
    %3653 = vmatpush1.msra.mxu0 %v3626
    %3654 = vmatprep.subr.mxu0 0.0
    %3655 = vmatpush1.msra.mxu0 %v3627
    %3656 = vmatprep.subr.mxu0 0.0
    %3657 = vmatpush1.msra.mxu0 %v3628
    %3658 = vmatprep.subr.mxu0 0.0
    %3659 = vmatpush1.msra.mxu0 %v3629
    %3660 = vmatprep.subr.mxu0 0.0
    %3661 = vmatpush1.msra.mxu0 %v3630
    %3662 = vmatprep.subr.mxu0 0.0
    %3663 = vmatpush1.msra.mxu0 %v3631
    %3664 = vmatprep.subr.mxu0 0.0
    %3665 = vmatpush1.msra.mxu0 %v3632
    %3666 = vmatprep.subr.mxu0 0.0
    %3667 = vmatpush1.msra.mxu0 %v3633
    %3668 = vmatprep.subr.mxu0 0.0
    %3669 = vmatpush1.msra.mxu0 %v3634
    %3670 = vmatprep.subr.mxu0 0.0
    %3671 = vmatpush1.msra.mxu0 %v3635
    %3672 = vmatprep.subr.mxu0 0.0
    %3673 = vmatpush1.msra.mxu0 %v3636
    %3674 = vmatprep.subr.mxu0 0.0
    %3675 = vmatpush1.msra.mxu0 %v3637
    %3676 = vmatprep.subr.mxu0 0.0
    %3677 = vmatpush1.msra.mxu0 %v3638
    %3678 = vmatprep.subr.mxu0 0.0
    %3679 = vmatpush1.msra.mxu0 0.0
    %3680 = vmatprep.subr.mxu0 0.0
    %3681 = vmatpush1.msra.mxu0 0.0
    %3682 = vmatprep.subr.mxu0 0.0
    %3683 = vmatpush1.msra.mxu0 0.0
    %3684 = vmatprep.subr.mxu0 0.0
    %3685 = vmatpush1.msra.mxu0 0.0
    %3686 = vmatprep.subr.mxu0 0.0
    %3687 = vmatpush1.msra.mxu0 0.0
    %3688 = vmatprep.subr.mxu0 0.0
    %3689 = vmatpush1.msra.mxu0 0.0
    %3690 = vmatprep.subr.mxu0 0.0
    %3691 = vmatpush1.msra.mxu0 0.0
    %3692 = vmatprep.subr.mxu0 0.0
    %3693 = vmatpush1.msra.mxu0 0.0
    %3694 = vmatprep.subr.mxu0 0.0
    %3695 = vmatpush1.msra.mxu0 0.0
    %3696 = vmatprep.subr.mxu0 0.0
    %3697 = vmatpush1.msra.mxu0 0.0
    %3698 = vmatprep.subr.mxu0 0.0
    %3699 = vmatpush1.msra.mxu0 0.0
    %3700 = vmatprep.subr.mxu0 0.0
    %3701 = vmatpush1.msra.mxu0 0.0
    %3702 = vmatprep.subr.mxu0 0.0
    %3703 = vmatpush1.msra.mxu0 0.0
    %3704 = vmatprep.subr.mxu0 0.0
    %3705 = vmatpush1.msra.mxu0 0.0
    %3706 = vmatprep.subr.mxu0 0.0
    %3707 = vmatpush1.msra.mxu0 0.0
    %3708 = vmatprep.subr.mxu0 0.0
    %3709 = vmatpush1.msra.mxu0 0.0
    %3710 = vmatprep.mubr.f32.mxu0 0.0
    %3711 = vmatmul.mubr.f32.gmra.mrb[0].mxu0 %v3622
    %v3712 = vpop.f32.mrb[0].mxu0
    %v3713 = vadd.f32 %v3644, %v3712
    %v3714 = vpop.f32.mrb[0].mxu0
    %3715 = vdwg.mxu0
    %vm3716 = vcmask 1024
    %3717 = vst.msk [vmem:[%s7] sm:$0x3] %vm3716, %v3713
    // Predicated region
    $region34: #{tpu_custom_call.1} parent=1 // pred_check
      _
    $region35: #{tpu_custom_call.1} parent=1 // pred_check_branch
      %3719 = sbr.rel (0) target = $region37
    $region36: #{tpu_custom_call.1} parent=1 // pred_region
      _
    $region37: #{tpu_custom_call.1} parent=1 // pred_fallthru
      _
    // Predicated region
    $region38: #{tpu_custom_call.1} parent=1 // pred_check
      _
    $region39: #{tpu_custom_call.1} parent=1 // pred_check_branch
      %3721 = sbr.rel (0) target = $region41
    $region40: #{tpu_custom_call.1} parent=1 // pred_region
      _
    $region41: #{tpu_custom_call.1} parent=1 // pred_fallthru
      _
    %3722 = vsyncpa [#allocation5], 1

</llo_original>
